<compile_context>
chip_gen: v7x
topology: tpu7x:2x2x1
jax: 0.10.0
libtpu: 0.0.40
codegen_flags: <defaults>
</compile_context>

<pallas_src>
import jax
import jax.numpy as jnp
from jax.experimental import pallas as pl
from jax.experimental.pallas import tpu as pltpu

BN_EPS = 1e-5
SUB = 8          # f32 sublane tile height


# ------------------------------ parameters ---------------------------------- #

def make_divisible(v, divisor=8, min_value=None):
    if min_value is None:
        min_value = divisor
    new_v = max(min_value, int(v + divisor / 2) // divisor * divisor)
    if new_v < 0.9 * v:
        new_v += divisor
    return new_v


def init_params(key, num_classes=6, input_channels=3, width_mult=0.25):
    kstate = [key]

    def nk():
        kstate[0], sub = jax.random.split(kstate[0])
        return sub

    def conv_w(cout, cin, kh, kw, groups=1):
        # kaiming_normal_(mode='fan_out')
        fan_out = cout * kh * kw // groups
        std = (2.0 / fan_out) ** 0.5
        return std * jax.random.normal(nk(), (cout, cin, kh, kw), jnp.float32)

    def bn_fold(c):
        # eval-mode BN with freshly initialized stats: scale = 1/sqrt(1+eps), bias = 0
        gamma = jnp.ones((c,), jnp.float32)
        beta = jnp.zeros((c,), jnp.float32)
        mean = jnp.zeros((c,), jnp.float32)
        var = jnp.ones((c,), jnp.float32)
        scale = gamma / jnp.sqrt(var + BN_EPS)
        bias = beta - mean * scale
        return scale, bias

    params = {}
    input_channel = make_divisible(32 * width_mult)              # 8
    w0 = conv_w(input_channel, input_channels, 3, 3)
    s0, b0 = bn_fold(input_channel)
    w0 = w0 * s0[:, None, None, None]                            # fold BN scale into weights
    # rows ordered (tap dy*3+dx, input channel), cols = output channels
    params["first_w"] = jnp.transpose(w0, (2, 3, 1, 0)).reshape(9 * input_channels, input_channel)
    params["first_b"] = b0.reshape(1, input_channel)

    blocks = []
    setting = [[1, 16, 1, 1], [6, 24, 2, 2], [6, 32, 2, 2]]
    for t, c, n, s in setting:
        output_channel = make_divisible(c * width_mult)
        for i in range(n):
            stride = s if i == 0 else 1
            inp, oup = input_channel, output_channel
            hidden = int(inp * t)
            blk = {"stride": stride, "use_res": (stride == 1 and inp == oup),
                   "expand": (t != 1), "inp": inp, "hidden": hidden, "oup": oup}
            if t != 1:
                we = conv_w(hidden, inp, 1, 1)
                se, be = bn_fold(hidden)
                blk["exp_w"] = we.reshape(hidden, inp).T * se[None, :]   # (inp, hidden)
                blk["exp_b"] = be.reshape(1, hidden)
            wd = conv_w(hidden, 1, 3, 3, groups=hidden)                  # (hidden,1,3,3)
            sd, bd = bn_fold(hidden)
            blk["dw_w"] = jnp.transpose(wd[:, 0], (1, 2, 0)).reshape(9, hidden) * sd[None, :]
            blk["dw_b"] = bd.reshape(1, hidden)
            wp_ = conv_w(oup, hidden, 1, 1)
            sp, bp = bn_fold(oup)
            blk["pw_w"] = wp_.reshape(oup, hidden).T * sp[None, :]       # (hidden, oup)
            blk["pw_b"] = bp.reshape(1, oup)
            blocks.append(blk)
            input_channel = output_channel
    params["blocks"] = blocks

    wl = 0.01 * jax.random.normal(nk(), (num_classes, input_channel), jnp.float32)
    params["fc_w"] = wl.T                                                # (C, num_classes)
    params["fc_b"] = jnp.zeros((1, num_classes), jnp.float32)
    return params


# --------------------------- weight-slab packing ----------------------------- #

def pack_weights(params):
    """Pack every (folded-BN) weight / bias into one (rows, CW) f32 slab.

    Returns (slab, meta) where meta[i] = (row_offset, rows, cols) in kernel consumption order.
    Each piece's rows are padded to a multiple of 8 so every piece starts sublane-aligned.
    """
    logical = [params["first_w"], params["first_b"]]
    for blk in params["blocks"]:
        if blk["expand"]:
            logical += [blk["exp_w"], blk["exp_b"]]
        logical += [blk["dw_w"], blk["dw_b"], blk["pw_w"], blk["pw_b"]]
    logical += [params["fc_w"], params["fc_b"]]

    cw = max(int(a.shape[1]) for a in logical)
    cw = ((cw + 127) // 128) * 128
    pieces, meta, off = [], [], 0
    for a in logical:
        r, c = int(a.shape[0]), int(a.shape[1])
        rp = ((r + SUB - 1) // SUB) * SUB
        pieces.append(jnp.pad(a.astype(jnp.float32), ((0, rp - r), (0, cw - c))))
        meta.append((off, r, c))
        off += rp
    return jnp.concatenate(pieces, axis=0), meta


# ------------------------------ fused kernel -------------------------------- #

def make_fused_kernel(cfgs, meta, bb, oh0, ow0):
    """cfgs: static per-block config dicts; meta: static (offset, rows, cols) weight layout."""

    def kernel(x_ref, w_ref, out_ref, pad_ref, buf_ref):
        pos = [0]

        def rd():
            off, r, c = meta[pos[0]]
            pos[0] += 1
            return w_ref[off:off + r, 0:c]

        # -------- first conv: one im2col matmul + folded-BN bias + ReLU6 --------
        fw, fb = rd(), rd()                                    # (9*CIN, c0), (1, c0)
        x = jnp.clip(jnp.dot(x_ref[...], fw, preferred_element_type=jnp.float32) + fb,
                     0.0, 6.0)                                 # (bb*oh0*ow0, c0)
        h, w = oh0, ow0

        # -------- inverted residual blocks --------
        for cfg in cfgs:
            s, hid = cfg["stride"], cfg["hidden"]
            t_in = x

            if cfg["expand"]:
                ew, eb = rd(), rd()
                x = jnp.clip(jnp.dot(x, ew, preferred_element_type=jnp.float32) + eb, 0.0, 6.0)

            dww, dwb = rd(), rd()                              # (9, hid), (1, hid)
            ho, wo = (h - 1) // s + 1, (w - 1) // s + 1

            # zero only the used halo region, then write the interior of the padded slab
            pad_ref[:, 0:h + 2, 0:w + 2, 0:hid] = jnp.zeros((bb, h + 2, w + 2, hid), jnp.float32)
            if w % SUB == 0:
                # sublane-aligned: layout-preserving reshape + ONE dense interior store
                pad_ref[:, 1:h + 1, 1:w + 1, 0:hid] = x.reshape(bb, h, w, hid)
            else:
                # tiny stages (4x4 / 2x2): stage through the 2-D buffer with masked row copies
                buf_ref[0:bb * h * w, 0:hid] = x
                for b in range(bb):
                    for y in range(h):
                        r0 = (b * h + y) * w
                        pad_ref[b, y + 1, 1:w + 1, 0:hid] = buf_ref[r0:r0 + w, 0:hid]

            # depthwise 3x3 (+ folded BN bias + ReLU6): each tap covers ALL output pixels
            acc = jnp.zeros((bb, ho, wo, hid), jnp.float32)
            for dy in range(3):
                for dx in range(3):
                    if s == 1:
                        tap = pad_ref[:, dy:dy + ho, dx:dx + wo, 0:hid]
                    else:
                        tap = pad_ref[:, pl.ds(dy, ho, stride=s),
                                      pl.ds(dx, wo, stride=s), 0:hid]
                    acc = acc + tap * dww[dy * 3 + dx]
            d4 = jnp.clip(acc + dwb, 0.0, 6.0)                 # (bb, ho, wo, hid)

            if wo % SUB == 0:
                d = d4.reshape(bb * ho * wo, hid)
            else:
                for b in range(bb):
                    for yo in range(ho):
                        r0 = (b * ho + yo) * wo
                        buf_ref[r0:r0 + wo, 0:hid] = d4[b, yo]
                d = buf_ref[0:bb * ho * wo, 0:hid]

            # project 1x1 (+ folded BN, no ReLU), optional residual
            pw, pb = rd(), rd()
            x = jnp.dot(d, pw, preferred_element_type=jnp.float32) + pb
            if cfg["use_res"]:
                x = x + t_in
            h, w = ho, wo

        # -------- head: global average pool + Linear (Dropout is identity at eval) --------
        fcw, fcb = rd(), rd()
        n_pix = h * w
        if bb == 1:
            pooled = jnp.mean(x, axis=0, keepdims=True)                         # (1, C)
        else:
            r_i = jax.lax.broadcasted_iota(jnp.int32, (bb, bb * n_pix), 0)
            c_i = jax.lax.broadcasted_iota(jnp.int32, (bb, bb * n_pix), 1)
            sel = jnp.logical_and(c_i >= r_i * n_pix, c_i < (r_i + 1) * n_pix)
            poolm = jnp.where(sel, 1.0 / n_pix, 0.0)
            pooled = jnp.dot(poolm, x, preferred_element_type=jnp.float32)      # (bb, C)
        out_ref[...] = jnp.dot(pooled, fcw, preferred_element_type=jnp.float32) + fcb

    return kernel


# ------------------------------ forward wrapper ------------------------------ #

def mobile_pizza_net_forward(params, x_nchw):
    x = jnp.transpose(x_nchw, (0, 2, 3, 1)).astype(jnp.float32)         # NCHW -> NHWC
    B, H, W, CIN = x.shape
    oh0, ow0 = (H - 1) // 2 + 1, (W - 1) // 2 + 1

    # images per grid step: keep >= 2 steps when B >= 2 (v7x has 2 TCs), batch the rest per step
    nsteps = 2 if B >= 2 else 1
    bb = -(-B // nsteps)
    bpad = nsteps * bb
    if bpad > B:
        x = jnp.concatenate([x, jnp.zeros((bpad - B, H, W, CIN), x.dtype)], axis=0)

    # wrapper-side im2col for the stride-2 3x3 first conv (tap-major, matching first_w rows)
    xp = jnp.pad(x, ((0, 0), (1, 1), (1, 1), (0, 0)))
    taps = [xp[:, dy:dy + 2 * oh0:2, dx:dx + 2 * ow0:2, :]
            for dy in range(3) for dx in range(3)]
    im2col = jnp.stack(taps, axis=3).reshape(bpad, oh0 * ow0, 9 * CIN)
    im2col = im2col.reshape(nsteps, bb * oh0 * ow0, 9 * CIN)

    wslab, meta = pack_weights(params)
    blocks = params["blocks"]
    cfgs = [dict(stride=blk["stride"], expand=blk["expand"],
                 use_res=blk["use_res"], hidden=blk["hidden"]) for blk in blocks]
    num_classes = params["fc_w"].shape[1]
    cmax = max([params["first_w"].shape[1]] + [blk["hidden"] for blk in blocks])

    kernel = make_fused_kernel(cfgs, meta, bb, oh0, ow0)

    out = pl.pallas_call(
        kernel,
        out_shape=jax.ShapeDtypeStruct((nsteps, bb, num_classes), jnp.float32),
        grid=(nsteps,),
        in_specs=[
            pl.BlockSpec((None, bb * oh0 * ow0, 9 * CIN), lambda i: (i, 0, 0)),
            pl.BlockSpec(wslab.shape, lambda i: (0, 0)),      # packed weights, fetched once
        ],
        out_specs=pl.BlockSpec((None, bb, num_classes), lambda i: (i, 0, 0)),
        scratch_shapes=[
            pltpu.VMEM((bb, oh0 + 2, ow0 + 2, cmax), jnp.float32),   # padded activation slab
            pltpu.VMEM((bb * oh0 * ow0, cmax), jnp.float32),         # small-stage staging buf
        ],
        compiler_params=pltpu.CompilerParams(
            dimension_semantics=("parallel",),                # shard steps over v7x's 2 TCs
            vmem_limit_bytes=32 * 1024 * 1024),
    )(im2col, wslab)
    return out.reshape(bpad, num_classes)[:B]


# --------------------------- pure-JAX reference ------------------------------ #

def reference_forward(params, x_nchw):
    x = jnp.transpose(x_nchw, (0, 2, 3, 1)).astype(jnp.float32)
    B, H, W, _ = x.shape
    oh, ow = (H - 1) // 2 + 1, (W - 1) // 2 + 1
    xp = jnp.pad(x, ((0, 0), (1, 1), (1, 1), (0, 0)))
    taps = [xp[:, dy:dy + 2 * oh:2, dx:dx + 2 * ow:2, :] for dy in range(3) for dx in range(3)]
    col = jnp.stack(taps, axis=3).reshape(B, oh, ow, -1)
    x = jnp.clip(col @ params["first_w"] + params["first_b"][0], 0.0, 6.0)
    for blk in params["blocks"]:
        s = blk["stride"]
        t_in = x
        if blk["expand"]:
            x = jnp.clip(x @ blk["exp_w"] + blk["exp_b"][0], 0.0, 6.0)
        h, w = x.shape[1], x.shape[2]
        ho, wo = (h - 1) // s + 1, (w - 1) // s + 1
        hp = jnp.pad(x, ((0, 0), (1, 1), (1, 1), (0, 0)))
        acc = jnp.zeros((B, ho, wo, x.shape[3]), jnp.float32)
        for dy in range(3):
            for dx in range(3):
                acc = acc + hp[:, dy:dy + s * ho:s, dx:dx + s * wo:s, :] * blk["dw_w"][dy * 3 + dx]
        d = jnp.clip(acc + blk["dw_b"][0], 0.0, 6.0)
        x = d @ blk["pw_w"] + blk["pw_b"][0]
        if blk["use_res"]:
            x = x + t_in
    pooled = x.mean(axis=(1, 2))
    return pooled @ params["fc_w"] + params["fc_b"][0]


if __name__ == "__main__":
    params = init_params(jax.random.PRNGKey(1))
    # module defaults: input_channels=3, num_classes=6; small 16x16 spatial size
    x = jax.random.normal(jax.random.PRNGKey(0), (2, 3, 16, 16), jnp.float32)

    fwd = jax.jit(lambda inp: mobile_pizza_net_forward(params, inp))
    out = jax.block_until_ready(fwd(x))
    assert out.shape == (2, 6) and out.dtype == jnp.float32

    with jax.default_matmul_precision("float32"):
        ref = reference_forward(params, x)
    assert jnp.allclose(out, ref, atol=5e-3, rtol=5e-3), (out, ref)
    print("KERNEL_OK")
</pallas_src>

<mosaic_0001>
module attributes {stable_mosaic.version = 11 : i64} {
  func.func @kernel(%arg0: i32, %arg1: memref<1x64x27xf32, #tpu.memory_space<vmem>>, %arg2: memref<480x128xf32, #tpu.memory_space<vmem>>, %arg3: memref<1x1x6xf32, #tpu.memory_space<vmem>>, %arg4: memref<1x10x10x48xf32, #tpu.memory_space<vmem>>, %arg5: memref<64x48xf32, #tpu.memory_space<vmem>>) attributes {dimension_semantics = [#tpu.dimension_semantics<parallel>], iteration_bounds = array<i64: 2>, scalar_prefetch = 0 : i64, scratch_operands = 2 : i64, tpu.core_type = #tpu.core_type<tc>, window_params = [{transform_indices = @transform_0, window_bounds = array<i64: 1, 64, 27>}, {pipeline_mode = #tpu.pipeline_mode<synchronous>, transform_indices = @transform_1, window_bounds = array<i64: 480, 128>}, {transform_indices = @transform_2, window_bounds = array<i64: 1, 1, 6>}]} {
    %c0 = arith.constant 0 : index
    %c0_0 = arith.constant 0 : index
    %0 = vector.load %arg2[%c0, %c0_0] : memref<480x128xf32, #tpu.memory_space<vmem>>, vector<27x8xf32>
    %c32 = arith.constant 32 : index
    %c0_1 = arith.constant 0 : index
    %1 = vector.load %arg2[%c32, %c0_1] : memref<480x128xf32, #tpu.memory_space<vmem>>, vector<1x8xf32>
    %c0_2 = arith.constant 0 : index
    %c0_3 = arith.constant 0 : index
    %c0_4 = arith.constant 0 : index
    %2 = vector.load %arg1[%c0_2, %c0_3, %c0_4] : memref<1x64x27xf32, #tpu.memory_space<vmem>>, vector<1x64x27xf32>
    %3 = vector.shape_cast %2 : vector<1x64x27xf32> to vector<64x27xf32>
    %cst = arith.constant dense<0.000000e+00> : vector<64x8xf32>
    %4 = tpu.matmul %3, %0, %cst {dimension_numbers = #tpu.dot_dimension_numbers<[1], [0], [0], [1], [0, 0, 1, 1], [], []>} : vector<64x27xf32>, vector<27x8xf32>, vector<64x8xf32> -> vector<64x8xf32>
    %5 = vector.broadcast %1 : vector<1x8xf32> to vector<64x8xf32>
    %6 = arith.addf %4, %5 : vector<64x8xf32>
    %cst_5 = arith.constant 0.000000e+00 : f32
    %cst_6 = arith.constant 6.000000e+00 : f32
    %7 = vector.broadcast %cst_5 : f32 to vector<64x8xf32>
    %8 = arith.maximumf %7, %6 : vector<64x8xf32>
    %9 = vector.broadcast %cst_6 : f32 to vector<64x8xf32>
    %10 = arith.minimumf %9, %8 : vector<64x8xf32>
    %c40 = arith.constant 40 : index
    %c0_7 = arith.constant 0 : index
    %11 = vector.load %arg2[%c40, %c0_7] : memref<480x128xf32, #tpu.memory_space<vmem>>, vector<9x8xf32>
    %c56 = arith.constant 56 : index
    %c0_8 = arith.constant 0 : index
    %12 = vector.load %arg2[%c56, %c0_8] : memref<480x128xf32, #tpu.memory_space<vmem>>, vector<1x8xf32>
    %cst_9 = arith.constant 0.000000e+00 : f32
    %13 = vector.broadcast %cst_9 : f32 to vector<1x10x10x8xf32>
    %c0_10 = arith.constant 0 : index
    %c0_11 = arith.constant 0 : index
    %c0_12 = arith.constant 0 : index
    %c0_13 = arith.constant 0 : index
    %14 = vector.load %arg4[%c0_10, %c0_11, %c0_12, %c0_13] : memref<1x10x10x48xf32, #tpu.memory_space<vmem>>, vector<1x10x10x8xf32>
    tpu.vector_store %arg4[%c0_10, %c0_11, %c0_12, %c0_13], %13 {strides = array<i32>} : memref<1x10x10x48xf32, #tpu.memory_space<vmem>>, vector<1x10x10x8xf32>,
    %15 = vector.shape_cast %10 : vector<64x8xf32> to vector<1x8x8x8xf32>
    %c0_14 = arith.constant 0 : index
    %c1 = arith.constant 1 : index
    %c1_15 = arith.constant 1 : index
    %c0_16 = arith.constant 0 : index
    %16 = vector.load %arg4[%c0_14, %c1, %c1_15, %c0_16] : memref<1x10x10x48xf32, #tpu.memory_space<vmem>>, vector<1x8x8x8xf32>
    tpu.vector_store %arg4[%c0_14, %c1, %c1_15, %c0_16], %15 {strides = array<i32>} : memref<1x10x10x48xf32, #tpu.memory_space<vmem>>, vector<1x8x8x8xf32>,
    %cst_17 = arith.constant 0.000000e+00 : f32
    %17 = vector.broadcast %cst_17 : f32 to vector<1x8x8x8xf32>
    %c0_18 = arith.constant 0 : index
    %c0_19 = arith.constant 0 : index
    %c0_20 = arith.constant 0 : index
    %c0_21 = arith.constant 0 : index
    %18 = vector.load %arg4[%c0_18, %c0_19, %c0_20, %c0_21] : memref<1x10x10x48xf32, #tpu.memory_space<vmem>>, vector<1x8x8x8xf32>
    %19 = vector.extract_strided_slice %11 {offsets = [0, 0], sizes = [1, 8], strides = [1, 1]} : vector<9x8xf32> to vector<1x8xf32>
    %20 = vector.shape_cast %19 : vector<1x8xf32> to vector<8xf32>
    %21 = vector.shape_cast %20 : vector<8xf32> to vector<1x1x1x8xf32>
    %22 = vector.broadcast %21 : vector<1x1x1x8xf32> to vector<1x8x8x8xf32>
    %23 = arith.mulf %18, %22 : vector<1x8x8x8xf32>
    %24 = arith.addf %17, %23 : vector<1x8x8x8xf32>
    %c0_22 = arith.constant 0 : index
    %c0_23 = arith.constant 0 : index
    %c1_24 = arith.constant 1 : index
    %c0_25 = arith.constant 0 : index
    %25 = vector.load %arg4[%c0_22, %c0_23, %c1_24, %c0_25] : memref<1x10x10x48xf32, #tpu.memory_space<vmem>>, vector<1x8x8x8xf32>
    %26 = vector.extract_strided_slice %11 {offsets = [1, 0], sizes = [1, 8], strides = [1, 1]} : vector<9x8xf32> to vector<1x8xf32>
    %27 = vector.shape_cast %26 : vector<1x8xf32> to vector<8xf32>
    %28 = vector.shape_cast %27 : vector<8xf32> to vector<1x1x1x8xf32>
    %29 = vector.broadcast %28 : vector<1x1x1x8xf32> to vector<1x8x8x8xf32>
    %30 = arith.mulf %25, %29 : vector<1x8x8x8xf32>
    %31 = arith.addf %24, %30 : vector<1x8x8x8xf32>
    %c0_26 = arith.constant 0 : index
    %c0_27 = arith.constant 0 : index
    %c2 = arith.constant 2 : index
    %c0_28 = arith.constant 0 : index
    %32 = vector.load %arg4[%c0_26, %c0_27, %c2, %c0_28] : memref<1x10x10x48xf32, #tpu.memory_space<vmem>>, vector<1x8x8x8xf32>
    %33 = vector.extract_strided_slice %11 {offsets = [2, 0], sizes = [1, 8], strides = [1, 1]} : vector<9x8xf32> to vector<1x8xf32>
    %34 = vector.shape_cast %33 : vector<1x8xf32> to vector<8xf32>
    %35 = vector.shape_cast %34 : vector<8xf32> to vector<1x1x1x8xf32>
    %36 = vector.broadcast %35 : vector<1x1x1x8xf32> to vector<1x8x8x8xf32>
    %37 = arith.mulf %32, %36 : vector<1x8x8x8xf32>
    %38 = arith.addf %31, %37 : vector<1x8x8x8xf32>
    %c0_29 = arith.constant 0 : index
    %c1_30 = arith.constant 1 : index
    %c0_31 = arith.constant 0 : index
    %c0_32 = arith.constant 0 : index
    %39 = vector.load %arg4[%c0_29, %c1_30, %c0_31, %c0_32] : memref<1x10x10x48xf32, #tpu.memory_space<vmem>>, vector<1x8x8x8xf32>
    %40 = vector.extract_strided_slice %11 {offsets = [3, 0], sizes = [1, 8], strides = [1, 1]} : vector<9x8xf32> to vector<1x8xf32>
    %41 = vector.shape_cast %40 : vector<1x8xf32> to vector<8xf32>
    %42 = vector.shape_cast %41 : vector<8xf32> to vector<1x1x1x8xf32>
    %43 = vector.broadcast %42 : vector<1x1x1x8xf32> to vector<1x8x8x8xf32>
    %44 = arith.mulf %39, %43 : vector<1x8x8x8xf32>
    %45 = arith.addf %38, %44 : vector<1x8x8x8xf32>
    %c0_33 = arith.constant 0 : index
    %c1_34 = arith.constant 1 : index
    %c1_35 = arith.constant 1 : index
    %c0_36 = arith.constant 0 : index
    %46 = vector.load %arg4[%c0_33, %c1_34, %c1_35, %c0_36] : memref<1x10x10x48xf32, #tpu.memory_space<vmem>>, vector<1x8x8x8xf32>
    %47 = vector.extract_strided_slice %11 {offsets = [4, 0], sizes = [1, 8], strides = [1, 1]} : vector<9x8xf32> to vector<1x8xf32>
    %48 = vector.shape_cast %47 : vector<1x8xf32> to vector<8xf32>
    %49 = vector.shape_cast %48 : vector<8xf32> to vector<1x1x1x8xf32>
    %50 = vector.broadcast %49 : vector<1x1x1x8xf32> to vector<1x8x8x8xf32>
    %51 = arith.mulf %46, %50 : vector<1x8x8x8xf32>
    %52 = arith.addf %45, %51 : vector<1x8x8x8xf32>
    %c0_37 = arith.constant 0 : index
    %c1_38 = arith.constant 1 : index
    %c2_39 = arith.constant 2 : index
    %c0_40 = arith.constant 0 : index
    %53 = vector.load %arg4[%c0_37, %c1_38, %c2_39, %c0_40] : memref<1x10x10x48xf32, #tpu.memory_space<vmem>>, vector<1x8x8x8xf32>
    %54 = vector.extract_strided_slice %11 {offsets = [5, 0], sizes = [1, 8], strides = [1, 1]} : vector<9x8xf32> to vector<1x8xf32>
    %55 = vector.shape_cast %54 : vector<1x8xf32> to vector<8xf32>
    %56 = vector.shape_cast %55 : vector<8xf32> to vector<1x1x1x8xf32>
    %57 = vector.broadcast %56 : vector<1x1x1x8xf32> to vector<1x8x8x8xf32>
    %58 = arith.mulf %53, %57 : vector<1x8x8x8xf32>
    %59 = arith.addf %52, %58 : vector<1x8x8x8xf32>
    %c0_41 = arith.constant 0 : index
    %c2_42 = arith.constant 2 : index
    %c0_43 = arith.constant 0 : index
    %c0_44 = arith.constant 0 : index
    %60 = vector.load %arg4[%c0_41, %c2_42, %c0_43, %c0_44] : memref<1x10x10x48xf32, #tpu.memory_space<vmem>>, vector<1x8x8x8xf32>
    %61 = vector.extract_strided_slice %11 {offsets = [6, 0], sizes = [1, 8], strides = [1, 1]} : vector<9x8xf32> to vector<1x8xf32>
    %62 = vector.shape_cast %61 : vector<1x8xf32> to vector<8xf32>
    %63 = vector.shape_cast %62 : vector<8xf32> to vector<1x1x1x8xf32>
    %64 = vector.broadcast %63 : vector<1x1x1x8xf32> to vector<1x8x8x8xf32>
    %65 = arith.mulf %60, %64 : vector<1x8x8x8xf32>
    %66 = arith.addf %59, %65 : vector<1x8x8x8xf32>
    %c0_45 = arith.constant 0 : index
    %c2_46 = arith.constant 2 : index
    %c1_47 = arith.constant 1 : index
    %c0_48 = arith.constant 0 : index
    %67 = vector.load %arg4[%c0_45, %c2_46, %c1_47, %c0_48] : memref<1x10x10x48xf32, #tpu.memory_space<vmem>>, vector<1x8x8x8xf32>
    %68 = vector.extract_strided_slice %11 {offsets = [7, 0], sizes = [1, 8], strides = [1, 1]} : vector<9x8xf32> to vector<1x8xf32>
    %69 = vector.shape_cast %68 : vector<1x8xf32> to vector<8xf32>
    %70 = vector.shape_cast %69 : vector<8xf32> to vector<1x1x1x8xf32>
    %71 = vector.broadcast %70 : vector<1x1x1x8xf32> to vector<1x8x8x8xf32>
    %72 = arith.mulf %67, %71 : vector<1x8x8x8xf32>
    %73 = arith.addf %66, %72 : vector<1x8x8x8xf32>
    %c0_49 = arith.constant 0 : index
    %c2_50 = arith.constant 2 : index
    %c2_51 = arith.constant 2 : index
    %c0_52 = arith.constant 0 : index
    %74 = vector.load %arg4[%c0_49, %c2_50, %c2_51, %c0_52] : memref<1x10x10x48xf32, #tpu.memory_space<vmem>>, vector<1x8x8x8xf32>
    %75 = vector.extract_strided_slice %11 {offsets = [8, 0], sizes = [1, 8], strides = [1, 1]} : vector<9x8xf32> to vector<1x8xf32>
    %76 = vector.shape_cast %75 : vector<1x8xf32> to vector<8xf32>
    %77 = vector.shape_cast %76 : vector<8xf32> to vector<1x1x1x8xf32>
    %78 = vector.broadcast %77 : vector<1x1x1x8xf32> to vector<1x8x8x8xf32>
    %79 = arith.mulf %74, %78 : vector<1x8x8x8xf32>
    %80 = arith.addf %73, %79 : vector<1x8x8x8xf32>
    %81 = vector.shape_cast %12 : vector<1x8xf32> to vector<1x1x1x8xf32>
    %82 = vector.broadcast %81 : vector<1x1x1x8xf32> to vector<1x8x8x8xf32>
    %83 = arith.addf %80, %82 : vector<1x8x8x8xf32>
    %cst_53 = arith.constant 0.000000e+00 : f32
    %cst_54 = arith.constant 6.000000e+00 : f32
    %84 = vector.broadcast %cst_53 : f32 to vector<1x8x8x8xf32>
    %85 = arith.maximumf %84, %83 : vector<1x8x8x8xf32>
    %86 = vector.broadcast %cst_54 : f32 to vector<1x8x8x8xf32>
    %87 = arith.minimumf %86, %85 : vector<1x8x8x8xf32>
    %88 = vector.shape_cast %87 : vector<1x8x8x8xf32> to vector<64x8xf32>
    %c64 = arith.constant 64 : index
    %c0_55 = arith.constant 0 : index
    %89 = vector.load %arg2[%c64, %c0_55] : memref<480x128xf32, #tpu.memory_space<vmem>>, vector<8x8xf32>
    %c72 = arith.constant 72 : index
    %c0_56 = arith.constant 0 : index
    %90 = vector.load %arg2[%c72, %c0_56] : memref<480x128xf32, #tpu.memory_space<vmem>>, vector<1x8xf32>
    %cst_57 = arith.constant dense<0.000000e+00> : vector<64x8xf32>
    %91 = tpu.matmul %88, %89, %cst_57 {dimension_numbers = #tpu.dot_dimension_numbers<[1], [0], [0], [1], [0, 0, 1, 1], [], []>} : vector<64x8xf32>, vector<8x8xf32>, vector<64x8xf32> -> vector<64x8xf32>
    %92 = vector.broadcast %90 : vector<1x8xf32> to vector<64x8xf32>
    %93 = arith.addf %91, %92 : vector<64x8xf32>
    %94 = arith.addf %93, %10 : vector<64x8xf32>
    %c80 = arith.constant 80 : index
    %c0_58 = arith.constant 0 : index
    %95 = vector.load %arg2[%c80, %c0_58] : memref<480x128xf32, #tpu.memory_space<vmem>>, vector<8x48xf32>
    %c88 = arith.constant 88 : index
    %c0_59 = arith.constant 0 : index
    %96 = vector.load %arg2[%c88, %c0_59] : memref<480x128xf32, #tpu.memory_space<vmem>>, vector<1x48xf32>
    %cst_60 = arith.constant dense<0.000000e+00> : vector<64x48xf32>
    %97 = tpu.matmul %94, %95, %cst_60 {dimension_numbers = #tpu.dot_dimension_numbers<[1], [0], [0], [1], [0, 0, 1, 1], [], []>} : vector<64x8xf32>, vector<8x48xf32>, vector<64x48xf32> -> vector<64x48xf32>
    %98 = vector.broadcast %96 : vector<1x48xf32> to vector<64x48xf32>
    %99 = arith.addf %97, %98 : vector<64x48xf32>
    %cst_61 = arith.constant 0.000000e+00 : f32
    %cst_62 = arith.constant 6.000000e+00 : f32
    %100 = vector.broadcast %cst_61 : f32 to vector<64x48xf32>
    %101 = arith.maximumf %100, %99 : vector<64x48xf32>
    %102 = vector.broadcast %cst_62 : f32 to vector<64x48xf32>
    %103 = arith.minimumf %102, %101 : vector<64x48xf32>
    %c96 = arith.constant 96 : index
    %c0_63 = arith.constant 0 : index
    %104 = vector.load %arg2[%c96, %c0_63] : memref<480x128xf32, #tpu.memory_space<vmem>>, vector<9x48xf32>
    %c112 = arith.constant 112 : index
    %c0_64 = arith.constant 0 : index
    %105 = vector.load %arg2[%c112, %c0_64] : memref<480x128xf32, #tpu.memory_space<vmem>>, vector<1x48xf32>
    %cst_65 = arith.constant 0.000000e+00 : f32
    %106 = vector.broadcast %cst_65 : f32 to vector<1x10x10x48xf32>
    %c0_66 = arith.constant 0 : index
    %c0_67 = arith.constant 0 : index
    %c0_68 = arith.constant 0 : index
    %c0_69 = arith.constant 0 : index
    %107 = vector.load %arg4[%c0_66, %c0_67, %c0_68, %c0_69] : memref<1x10x10x48xf32, #tpu.memory_space<vmem>>, vector<1x10x10x48xf32>
    tpu.vector_store %arg4[%c0_66, %c0_67, %c0_68, %c0_69], %106 {strides = array<i32>} : memref<1x10x10x48xf32, #tpu.memory_space<vmem>>, vector<1x10x10x48xf32>,
    %108 = vector.shape_cast %103 : vector<64x48xf32> to vector<1x8x8x48xf32>
    %c0_70 = arith.constant 0 : index
    %c1_71 = arith.constant 1 : index
    %c1_72 = arith.constant 1 : index
    %c0_73 = arith.constant 0 : index
    %109 = vector.load %arg4[%c0_70, %c1_71, %c1_72, %c0_73] : memref<1x10x10x48xf32, #tpu.memory_space<vmem>>, vector<1x8x8x48xf32>
    tpu.vector_store %arg4[%c0_70, %c1_71, %c1_72, %c0_73], %108 {strides = array<i32>} : memref<1x10x10x48xf32, #tpu.memory_space<vmem>>, vector<1x8x8x48xf32>,
    %cst_74 = arith.constant 0.000000e+00 : f32
    %110 = vector.broadcast %cst_74 : f32 to vector<1x4x4x48xf32>
    %c0_75 = arith.constant 0 : index
    %c0_76 = arith.constant 0 : index
    %c0_77 = arith.constant 0 : index
    %c0_78 = arith.constant 0 : index
    %111 = tpu.strided_load %arg4[%c0_75, %c0_76, %c0_77, %c0_78] {strides = array<i32: 1, 2, 2, 1>} : memref<1x10x10x48xf32, #tpu.memory_space<vmem>>, vector<1x4x4x48xf32>
    %112 = vector.extract_strided_slice %104 {offsets = [0, 0], sizes = [1, 48], strides = [1, 1]} : vector<9x48xf32> to vector<1x48xf32>
    %113 = vector.shape_cast %112 : vector<1x48xf32> to vector<48xf32>
    %114 = vector.shape_cast %113 : vector<48xf32> to vector<1x1x1x48xf32>
    %115 = vector.broadcast %114 : vector<1x1x1x48xf32> to vector<1x4x4x48xf32>
    %116 = arith.mulf %111, %115 : vector<1x4x4x48xf32>
    %117 = arith.addf %110, %116 : vector<1x4x4x48xf32>
    %c0_79 = arith.constant 0 : index
    %c0_80 = arith.constant 0 : index
    %c1_81 = arith.constant 1 : index
    %c0_82 = arith.constant 0 : index
    %118 = tpu.strided_load %arg4[%c0_79, %c0_80, %c1_81, %c0_82] {strides = array<i32: 1, 2, 2, 1>} : memref<1x10x10x48xf32, #tpu.memory_space<vmem>>, vector<1x4x4x48xf32>
    %119 = vector.extract_strided_slice %104 {offsets = [1, 0], sizes = [1, 48], strides = [1, 1]} : vector<9x48xf32> to vector<1x48xf32>
    %120 = vector.shape_cast %119 : vector<1x48xf32> to vector<48xf32>
    %121 = vector.shape_cast %120 : vector<48xf32> to vector<1x1x1x48xf32>
    %122 = vector.broadcast %121 : vector<1x1x1x48xf32> to vector<1x4x4x48xf32>
    %123 = arith.mulf %118, %122 : vector<1x4x4x48xf32>
    %124 = arith.addf %117, %123 : vector<1x4x4x48xf32>
    %c0_83 = arith.constant 0 : index
    %c0_84 = arith.constant 0 : index
    %c2_85 = arith.constant 2 : index
    %c0_86 = arith.constant 0 : index
    %125 = tpu.strided_load %arg4[%c0_83, %c0_84, %c2_85, %c0_86] {strides = array<i32: 1, 2, 2, 1>} : memref<1x10x10x48xf32, #tpu.memory_space<vmem>>, vector<1x4x4x48xf32>
    %126 = vector.extract_strided_slice %104 {offsets = [2, 0], sizes = [1, 48], strides = [1, 1]} : vector<9x48xf32> to vector<1x48xf32>
    %127 = vector.shape_cast %126 : vector<1x48xf32> to vector<48xf32>
    %128 = vector.shape_cast %127 : vector<48xf32> to vector<1x1x1x48xf32>
    %129 = vector.broadcast %128 : vector<1x1x1x48xf32> to vector<1x4x4x48xf32>
    %130 = arith.mulf %125, %129 : vector<1x4x4x48xf32>
    %131 = arith.addf %124, %130 : vector<1x4x4x48xf32>
    %c0_87 = arith.constant 0 : index
    %c1_88 = arith.constant 1 : index
    %c0_89 = arith.constant 0 : index
    %c0_90 = arith.constant 0 : index
    %132 = tpu.strided_load %arg4[%c0_87, %c1_88, %c0_89, %c0_90] {strides = array<i32: 1, 2, 2, 1>} : memref<1x10x10x48xf32, #tpu.memory_space<vmem>>, vector<1x4x4x48xf32>
    %133 = vector.extract_strided_slice %104 {offsets = [3, 0], sizes = [1, 48], strides = [1, 1]} : vector<9x48xf32> to vector<1x48xf32>
    %134 = vector.shape_cast %133 : vector<1x48xf32> to vector<48xf32>
    %135 = vector.shape_cast %134 : vector<48xf32> to vector<1x1x1x48xf32>
    %136 = vector.broadcast %135 : vector<1x1x1x48xf32> to vector<1x4x4x48xf32>
    %137 = arith.mulf %132, %136 : vector<1x4x4x48xf32>
    %138 = arith.addf %131, %137 : vector<1x4x4x48xf32>
    %c0_91 = arith.constant 0 : index
    %c1_92 = arith.constant 1 : index
    %c1_93 = arith.constant 1 : index
    %c0_94 = arith.constant 0 : index
    %139 = tpu.strided_load %arg4[%c0_91, %c1_92, %c1_93, %c0_94] {strides = array<i32: 1, 2, 2, 1>} : memref<1x10x10x48xf32, #tpu.memory_space<vmem>>, vector<1x4x4x48xf32>
    %140 = vector.extract_strided_slice %104 {offsets = [4, 0], sizes = [1, 48], strides = [1, 1]} : vector<9x48xf32> to vector<1x48xf32>
    %141 = vector.shape_cast %140 : vector<1x48xf32> to vector<48xf32>
    %142 = vector.shape_cast %141 : vector<48xf32> to vector<1x1x1x48xf32>
    %143 = vector.broadcast %142 : vector<1x1x1x48xf32> to vector<1x4x4x48xf32>
    %144 = arith.mulf %139, %143 : vector<1x4x4x48xf32>
    %145 = arith.addf %138, %144 : vector<1x4x4x48xf32>
    %c0_95 = arith.constant 0 : index
    %c1_96 = arith.constant 1 : index
    %c2_97 = arith.constant 2 : index
    %c0_98 = arith.constant 0 : index
    %146 = tpu.strided_load %arg4[%c0_95, %c1_96, %c2_97, %c0_98] {strides = array<i32: 1, 2, 2, 1>} : memref<1x10x10x48xf32, #tpu.memory_space<vmem>>, vector<1x4x4x48xf32>
    %147 = vector.extract_strided_slice %104 {offsets = [5, 0], sizes = [1, 48], strides = [1, 1]} : vector<9x48xf32> to vector<1x48xf32>
    %148 = vector.shape_cast %147 : vector<1x48xf32> to vector<48xf32>
    %149 = vector.shape_cast %148 : vector<48xf32> to vector<1x1x1x48xf32>
    %150 = vector.broadcast %149 : vector<1x1x1x48xf32> to vector<1x4x4x48xf32>
    %151 = arith.mulf %146, %150 : vector<1x4x4x48xf32>
    %152 = arith.addf %145, %151 : vector<1x4x4x48xf32>
    %c0_99 = arith.constant 0 : index
    %c2_100 = arith.constant 2 : index
    %c0_101 = arith.constant 0 : index
    %c0_102 = arith.constant 0 : index
    %153 = tpu.strided_load %arg4[%c0_99, %c2_100, %c0_101, %c0_102] {strides = array<i32: 1, 2, 2, 1>} : memref<1x10x10x48xf32, #tpu.memory_space<vmem>>, vector<1x4x4x48xf32>
    %154 = vector.extract_strided_slice %104 {offsets = [6, 0], sizes = [1, 48], strides = [1, 1]} : vector<9x48xf32> to vector<1x48xf32>
    %155 = vector.shape_cast %154 : vector<1x48xf32> to vector<48xf32>
    %156 = vector.shape_cast %155 : vector<48xf32> to vector<1x1x1x48xf32>
    %157 = vector.broadcast %156 : vector<1x1x1x48xf32> to vector<1x4x4x48xf32>
    %158 = arith.mulf %153, %157 : vector<1x4x4x48xf32>
    %159 = arith.addf %152, %158 : vector<1x4x4x48xf32>
    %c0_103 = arith.constant 0 : index
    %c2_104 = arith.constant 2 : index
    %c1_105 = arith.constant 1 : index
    %c0_106 = arith.constant 0 : index
    %160 = tpu.strided_load %arg4[%c0_103, %c2_104, %c1_105, %c0_106] {strides = array<i32: 1, 2, 2, 1>} : memref<1x10x10x48xf32, #tpu.memory_space<vmem>>, vector<1x4x4x48xf32>
    %161 = vector.extract_strided_slice %104 {offsets = [7, 0], sizes = [1, 48], strides = [1, 1]} : vector<9x48xf32> to vector<1x48xf32>
    %162 = vector.shape_cast %161 : vector<1x48xf32> to vector<48xf32>
    %163 = vector.shape_cast %162 : vector<48xf32> to vector<1x1x1x48xf32>
    %164 = vector.broadcast %163 : vector<1x1x1x48xf32> to vector<1x4x4x48xf32>
    %165 = arith.mulf %160, %164 : vector<1x4x4x48xf32>
    %166 = arith.addf %159, %165 : vector<1x4x4x48xf32>
    %c0_107 = arith.constant 0 : index
    %c2_108 = arith.constant 2 : index
    %c2_109 = arith.constant 2 : index
    %c0_110 = arith.constant 0 : index
    %167 = tpu.strided_load %arg4[%c0_107, %c2_108, %c2_109, %c0_110] {strides = array<i32: 1, 2, 2, 1>} : memref<1x10x10x48xf32, #tpu.memory_space<vmem>>, vector<1x4x4x48xf32>
    %168 = vector.extract_strided_slice %104 {offsets = [8, 0], sizes = [1, 48], strides = [1, 1]} : vector<9x48xf32> to vector<1x48xf32>
    %169 = vector.shape_cast %168 : vector<1x48xf32> to vector<48xf32>
    %170 = vector.shape_cast %169 : vector<48xf32> to vector<1x1x1x48xf32>
    %171 = vector.broadcast %170 : vector<1x1x1x48xf32> to vector<1x4x4x48xf32>
    %172 = arith.mulf %167, %171 : vector<1x4x4x48xf32>
    %173 = arith.addf %166, %172 : vector<1x4x4x48xf32>
    %174 = vector.shape_cast %105 : vector<1x48xf32> to vector<1x1x1x48xf32>
    %175 = vector.broadcast %174 : vector<1x1x1x48xf32> to vector<1x4x4x48xf32>
    %176 = arith.addf %173, %175 : vector<1x4x4x48xf32>
    %cst_111 = arith.constant 0.000000e+00 : f32
    %cst_112 = arith.constant 6.000000e+00 : f32
    %177 = vector.broadcast %cst_111 : f32 to vector<1x4x4x48xf32>
    %178 = arith.maximumf %177, %176 : vector<1x4x4x48xf32>
    %179 = vector.broadcast %cst_112 : f32 to vector<1x4x4x48xf32>
    %180 = arith.minimumf %179, %178 : vector<1x4x4x48xf32>
    %181 = vector.extract_strided_slice %180 {offsets = [0, 0, 0, 0], sizes = [1, 1, 4, 48], strides = [1, 1, 1, 1]} : vector<1x4x4x48xf32> to vector<1x1x4x48xf32>
    %182 = vector.shape_cast %181 : vector<1x1x4x48xf32> to vector<4x48xf32>
    %c0_113 = arith.constant 0 : index
    %c0_114 = arith.constant 0 : index
    %183 = vector.load %arg5[%c0_113, %c0_114] : memref<64x48xf32, #tpu.memory_space<vmem>>, vector<4x48xf32>
    tpu.vector_store %arg5[%c0_113, %c0_114], %182 {strides = array<i32>} : memref<64x48xf32, #tpu.memory_space<vmem>>, vector<4x48xf32>,
    %184 = vector.extract_strided_slice %180 {offsets = [0, 1, 0, 0], sizes = [1, 1, 4, 48], strides = [1, 1, 1, 1]} : vector<1x4x4x48xf32> to vector<1x1x4x48xf32>
    %185 = vector.shape_cast %184 : vector<1x1x4x48xf32> to vector<4x48xf32>
    %c4 = arith.constant 4 : index
    %c0_115 = arith.constant 0 : index
    %186 = vector.load %arg5[%c4, %c0_115] : memref<64x48xf32, #tpu.memory_space<vmem>>, vector<4x48xf32>
    tpu.vector_store %arg5[%c4, %c0_115], %185 {strides = array<i32>} : memref<64x48xf32, #tpu.memory_space<vmem>>, vector<4x48xf32>,
    %187 = vector.extract_strided_slice %180 {offsets = [0, 2, 0, 0], sizes = [1, 1, 4, 48], strides = [1, 1, 1, 1]} : vector<1x4x4x48xf32> to vector<1x1x4x48xf32>
    %188 = vector.shape_cast %187 : vector<1x1x4x48xf32> to vector<4x48xf32>
    %c8 = arith.constant 8 : index
    %c0_116 = arith.constant 0 : index
    %189 = vector.load %arg5[%c8, %c0_116] : memref<64x48xf32, #tpu.memory_space<vmem>>, vector<4x48xf32>
    tpu.vector_store %arg5[%c8, %c0_116], %188 {strides = array<i32>} : memref<64x48xf32, #tpu.memory_space<vmem>>, vector<4x48xf32>,
    %190 = vector.extract_strided_slice %180 {offsets = [0, 3, 0, 0], sizes = [1, 1, 4, 48], strides = [1, 1, 1, 1]} : vector<1x4x4x48xf32> to vector<1x1x4x48xf32>
    %191 = vector.shape_cast %190 : vector<1x1x4x48xf32> to vector<4x48xf32>
    %c12 = arith.constant 12 : index
    %c0_117 = arith.constant 0 : index
    %192 = vector.load %arg5[%c12, %c0_117] : memref<64x48xf32, #tpu.memory_space<vmem>>, vector<4x48xf32>
    tpu.vector_store %arg5[%c12, %c0_117], %191 {strides = array<i32>} : memref<64x48xf32, #tpu.memory_space<vmem>>, vector<4x48xf32>,
    %c0_118 = arith.constant 0 : index
    %c0_119 = arith.constant 0 : index
    %193 = vector.load %arg5[%c0_118, %c0_119] : memref<64x48xf32, #tpu.memory_space<vmem>>, vector<16x48xf32>
    %c120 = arith.constant 120 : index
    %c0_120 = arith.constant 0 : index
    %194 = vector.load %arg2[%c120, %c0_120] : memref<480x128xf32, #tpu.memory_space<vmem>>, vector<48x8xf32>
    %c168 = arith.constant 168 : index
    %c0_121 = arith.constant 0 : index
    %195 = vector.load %arg2[%c168, %c0_121] : memref<480x128xf32, #tpu.memory_space<vmem>>, vector<1x8xf32>
    %cst_122 = arith.constant dense<0.000000e+00> : vector<16x8xf32>
    %196 = tpu.matmul %193, %194, %cst_122 {dimension_numbers = #tpu.dot_dimension_numbers<[1], [0], [0], [1], [0, 0, 1, 1], [], []>} : vector<16x48xf32>, vector<48x8xf32>, vector<16x8xf32> -> vector<16x8xf32>
    %197 = vector.broadcast %195 : vector<1x8xf32> to vector<16x8xf32>
    %198 = arith.addf %196, %197 : vector<16x8xf32>
    %c176 = arith.constant 176 : index
    %c0_123 = arith.constant 0 : index
    %199 = vector.load %arg2[%c176, %c0_123] : memref<480x128xf32, #tpu.memory_space<vmem>>, vector<8x48xf32>
    %c184 = arith.constant 184 : index
    %c0_124 = arith.constant 0 : index
    %200 = vector.load %arg2[%c184, %c0_124] : memref<480x128xf32, #tpu.memory_space<vmem>>, vector<1x48xf32>
    %cst_125 = arith.constant dense<0.000000e+00> : vector<16x48xf32>
    %201 = tpu.matmul %198, %199, %cst_125 {dimension_numbers = #tpu.dot_dimension_numbers<[1], [0], [0], [1], [0, 0, 1, 1], [], []>} : vector<16x8xf32>, vector<8x48xf32>, vector<16x48xf32> -> vector<16x48xf32>
    %202 = vector.broadcast %200 : vector<1x48xf32> to vector<16x48xf32>
    %203 = arith.addf %201, %202 : vector<16x48xf32>
    %cst_126 = arith.constant 0.000000e+00 : f32
    %cst_127 = arith.constant 6.000000e+00 : f32
    %204 = vector.broadcast %cst_126 : f32 to vector<16x48xf32>
    %205 = arith.maximumf %204, %203 : vector<16x48xf32>
    %206 = vector.broadcast %cst_127 : f32 to vector<16x48xf32>
    %207 = arith.minimumf %206, %205 : vector<16x48xf32>
    %c192 = arith.constant 192 : index
    %c0_128 = arith.constant 0 : index
    %208 = vector.load %arg2[%c192, %c0_128] : memref<480x128xf32, #tpu.memory_space<vmem>>, vector<9x48xf32>
    %c208 = arith.constant 208 : index
    %c0_129 = arith.constant 0 : index
    %209 = vector.load %arg2[%c208, %c0_129] : memref<480x128xf32, #tpu.memory_space<vmem>>, vector<1x48xf32>
    %cst_130 = arith.constant 0.000000e+00 : f32
    %210 = vector.broadcast %cst_130 : f32 to vector<1x6x6x48xf32>
    %c0_131 = arith.constant 0 : index
    %c0_132 = arith.constant 0 : index
    %c0_133 = arith.constant 0 : index
    %c0_134 = arith.constant 0 : index
    %211 = vector.load %arg4[%c0_131, %c0_132, %c0_133, %c0_134] : memref<1x10x10x48xf32, #tpu.memory_space<vmem>>, vector<1x6x6x48xf32>
    tpu.vector_store %arg4[%c0_131, %c0_132, %c0_133, %c0_134], %210 {strides = array<i32>} : memref<1x10x10x48xf32, #tpu.memory_space<vmem>>, vector<1x6x6x48xf32>,
    %c0_135 = arith.constant 0 : index
    %c0_136 = arith.constant 0 : index
    %212 = vector.load %arg5[%c0_135, %c0_136] : memref<64x48xf32, #tpu.memory_space<vmem>>, vector<16x48xf32>
    tpu.vector_store %arg5[%c0_135, %c0_136], %207 {strides = array<i32>} : memref<64x48xf32, #tpu.memory_space<vmem>>, vector<16x48xf32>,
    %c0_137 = arith.constant 0 : index
    %c0_138 = arith.constant 0 : index
    %213 = vector.load %arg5[%c0_137, %c0_138] : memref<64x48xf32, #tpu.memory_space<vmem>>, vector<4x48xf32>
    %c0_139 = arith.constant 0 : index
    %c1_140 = arith.constant 1 : index
    %c1_141 = arith.constant 1 : index
    %c0_142 = arith.constant 0 : index
    %214 = vector.load %arg4[%c0_139, %c1_140, %c1_141, %c0_142] : memref<1x10x10x48xf32, #tpu.memory_space<vmem>>, vector<1x1x4x48xf32>
    %215 = vector.shape_cast %214 : vector<1x1x4x48xf32> to vector<4x48xf32>
    %216 = vector.shape_cast %213 : vector<4x48xf32> to vector<1x1x4x48xf32>
    tpu.vector_store %arg4[%c0_139, %c1_140, %c1_141, %c0_142], %216 {strides = array<i32>} : memref<1x10x10x48xf32, #tpu.memory_space<vmem>>, vector<1x1x4x48xf32>,
    %c4_143 = arith.constant 4 : index
    %c0_144 = arith.constant 0 : index
    %217 = vector.load %arg5[%c4_143, %c0_144] : memref<64x48xf32, #tpu.memory_space<vmem>>, vector<4x48xf32>
    %c0_145 = arith.constant 0 : index
    %c2_146 = arith.constant 2 : index
    %c1_147 = arith.constant 1 : index
    %c0_148 = arith.constant 0 : index
    %218 = vector.load %arg4[%c0_145, %c2_146, %c1_147, %c0_148] : memref<1x10x10x48xf32, #tpu.memory_space<vmem>>, vector<1x1x4x48xf32>
    %219 = vector.shape_cast %218 : vector<1x1x4x48xf32> to vector<4x48xf32>
    %220 = vector.shape_cast %217 : vector<4x48xf32> to vector<1x1x4x48xf32>
    tpu.vector_store %arg4[%c0_145, %c2_146, %c1_147, %c0_148], %220 {strides = array<i32>} : memref<1x10x10x48xf32, #tpu.memory_space<vmem>>, vector<1x1x4x48xf32>,
    %c8_149 = arith.constant 8 : index
    %c0_150 = arith.constant 0 : index
    %221 = vector.load %arg5[%c8_149, %c0_150] : memref<64x48xf32, #tpu.memory_space<vmem>>, vector<4x48xf32>
    %c0_151 = arith.constant 0 : index
    %c3 = arith.constant 3 : index
    %c1_152 = arith.constant 1 : index
    %c0_153 = arith.constant 0 : index
    %222 = vector.load %arg4[%c0_151, %c3, %c1_152, %c0_153] : memref<1x10x10x48xf32, #tpu.memory_space<vmem>>, vector<1x1x4x48xf32>
    %223 = vector.shape_cast %222 : vector<1x1x4x48xf32> to vector<4x48xf32>
    %224 = vector.shape_cast %221 : vector<4x48xf32> to vector<1x1x4x48xf32>
    tpu.vector_store %arg4[%c0_151, %c3, %c1_152, %c0_153], %224 {strides = array<i32>} : memref<1x10x10x48xf32, #tpu.memory_space<vmem>>, vector<1x1x4x48xf32>,
    %c12_154 = arith.constant 12 : index
    %c0_155 = arith.constant 0 : index
    %225 = vector.load %arg5[%c12_154, %c0_155] : memref<64x48xf32, #tpu.memory_space<vmem>>, vector<4x48xf32>
    %c0_156 = arith.constant 0 : index
    %c4_157 = arith.constant 4 : index
    %c1_158 = arith.constant 1 : index
    %c0_159 = arith.constant 0 : index
    %226 = vector.load %arg4[%c0_156, %c4_157, %c1_158, %c0_159] : memref<1x10x10x48xf32, #tpu.memory_space<vmem>>, vector<1x1x4x48xf32>
    %227 = vector.shape_cast %226 : vector<1x1x4x48xf32> to vector<4x48xf32>
    %228 = vector.shape_cast %225 : vector<4x48xf32> to vector<1x1x4x48xf32>
    tpu.vector_store %arg4[%c0_156, %c4_157, %c1_158, %c0_159], %228 {strides = array<i32>} : memref<1x10x10x48xf32, #tpu.memory_space<vmem>>, vector<1x1x4x48xf32>,
    %cst_160 = arith.constant 0.000000e+00 : f32
    %229 = vector.broadcast %cst_160 : f32 to vector<1x4x4x48xf32>
    %c0_161 = arith.constant 0 : index
    %c0_162 = arith.constant 0 : index
    %c0_163 = arith.constant 0 : index
    %c0_164 = arith.constant 0 : index
    %230 = vector.load %arg4[%c0_161, %c0_162, %c0_163, %c0_164] : memref<1x10x10x48xf32, #tpu.memory_space<vmem>>, vector<1x4x4x48xf32>
    %231 = vector.extract_strided_slice %208 {offsets = [0, 0], sizes = [1, 48], strides = [1, 1]} : vector<9x48xf32> to vector<1x48xf32>
    %232 = vector.shape_cast %231 : vector<1x48xf32> to vector<48xf32>
    %233 = vector.shape_cast %232 : vector<48xf32> to vector<1x1x1x48xf32>
    %234 = vector.broadcast %233 : vector<1x1x1x48xf32> to vector<1x4x4x48xf32>
    %235 = arith.mulf %230, %234 : vector<1x4x4x48xf32>
    %236 = arith.addf %229, %235 : vector<1x4x4x48xf32>
    %c0_165 = arith.constant 0 : index
    %c0_166 = arith.constant 0 : index
    %c1_167 = arith.constant 1 : index
    %c0_168 = arith.constant 0 : index
    %237 = vector.load %arg4[%c0_165, %c0_166, %c1_167, %c0_168] : memref<1x10x10x48xf32, #tpu.memory_space<vmem>>, vector<1x4x4x48xf32>
    %238 = vector.extract_strided_slice %208 {offsets = [1, 0], sizes = [1, 48], strides = [1, 1]} : vector<9x48xf32> to vector<1x48xf32>
    %239 = vector.shape_cast %238 : vector<1x48xf32> to vector<48xf32>
    %240 = vector.shape_cast %239 : vector<48xf32> to vector<1x1x1x48xf32>
    %241 = vector.broadcast %240 : vector<1x1x1x48xf32> to vector<1x4x4x48xf32>
    %242 = arith.mulf %237, %241 : vector<1x4x4x48xf32>
    %243 = arith.addf %236, %242 : vector<1x4x4x48xf32>
    %c0_169 = arith.constant 0 : index
    %c0_170 = arith.constant 0 : index
    %c2_171 = arith.constant 2 : index
    %c0_172 = arith.constant 0 : index
    %244 = vector.load %arg4[%c0_169, %c0_170, %c2_171, %c0_172] : memref<1x10x10x48xf32, #tpu.memory_space<vmem>>, vector<1x4x4x48xf32>
    %245 = vector.extract_strided_slice %208 {offsets = [2, 0], sizes = [1, 48], strides = [1, 1]} : vector<9x48xf32> to vector<1x48xf32>
    %246 = vector.shape_cast %245 : vector<1x48xf32> to vector<48xf32>
    %247 = vector.shape_cast %246 : vector<48xf32> to vector<1x1x1x48xf32>
    %248 = vector.broadcast %247 : vector<1x1x1x48xf32> to vector<1x4x4x48xf32>
    %249 = arith.mulf %244, %248 : vector<1x4x4x48xf32>
    %250 = arith.addf %243, %249 : vector<1x4x4x48xf32>
    %c0_173 = arith.constant 0 : index
    %c1_174 = arith.constant 1 : index
    %c0_175 = arith.constant 0 : index
    %c0_176 = arith.constant 0 : index
    %251 = vector.load %arg4[%c0_173, %c1_174, %c0_175, %c0_176] : memref<1x10x10x48xf32, #tpu.memory_space<vmem>>, vector<1x4x4x48xf32>
    %252 = vector.extract_strided_slice %208 {offsets = [3, 0], sizes = [1, 48], strides = [1, 1]} : vector<9x48xf32> to vector<1x48xf32>
    %253 = vector.shape_cast %252 : vector<1x48xf32> to vector<48xf32>
    %254 = vector.shape_cast %253 : vector<48xf32> to vector<1x1x1x48xf32>
    %255 = vector.broadcast %254 : vector<1x1x1x48xf32> to vector<1x4x4x48xf32>
    %256 = arith.mulf %251, %255 : vector<1x4x4x48xf32>
    %257 = arith.addf %250, %256 : vector<1x4x4x48xf32>
    %c0_177 = arith.constant 0 : index
    %c1_178 = arith.constant 1 : index
    %c1_179 = arith.constant 1 : index
    %c0_180 = arith.constant 0 : index
    %258 = vector.load %arg4[%c0_177, %c1_178, %c1_179, %c0_180] : memref<1x10x10x48xf32, #tpu.memory_space<vmem>>, vector<1x4x4x48xf32>
    %259 = vector.extract_strided_slice %208 {offsets = [4, 0], sizes = [1, 48], strides = [1, 1]} : vector<9x48xf32> to vector<1x48xf32>
    %260 = vector.shape_cast %259 : vector<1x48xf32> to vector<48xf32>
    %261 = vector.shape_cast %260 : vector<48xf32> to vector<1x1x1x48xf32>
    %262 = vector.broadcast %261 : vector<1x1x1x48xf32> to vector<1x4x4x48xf32>
    %263 = arith.mulf %258, %262 : vector<1x4x4x48xf32>
    %264 = arith.addf %257, %263 : vector<1x4x4x48xf32>
    %c0_181 = arith.constant 0 : index
    %c1_182 = arith.constant 1 : index
    %c2_183 = arith.constant 2 : index
    %c0_184 = arith.constant 0 : index
    %265 = vector.load %arg4[%c0_181, %c1_182, %c2_183, %c0_184] : memref<1x10x10x48xf32, #tpu.memory_space<vmem>>, vector<1x4x4x48xf32>
    %266 = vector.extract_strided_slice %208 {offsets = [5, 0], sizes = [1, 48], strides = [1, 1]} : vector<9x48xf32> to vector<1x48xf32>
    %267 = vector.shape_cast %266 : vector<1x48xf32> to vector<48xf32>
    %268 = vector.shape_cast %267 : vector<48xf32> to vector<1x1x1x48xf32>
    %269 = vector.broadcast %268 : vector<1x1x1x48xf32> to vector<1x4x4x48xf32>
    %270 = arith.mulf %265, %269 : vector<1x4x4x48xf32>
    %271 = arith.addf %264, %270 : vector<1x4x4x48xf32>
    %c0_185 = arith.constant 0 : index
    %c2_186 = arith.constant 2 : index
    %c0_187 = arith.constant 0 : index
    %c0_188 = arith.constant 0 : index
    %272 = vector.load %arg4[%c0_185, %c2_186, %c0_187, %c0_188] : memref<1x10x10x48xf32, #tpu.memory_space<vmem>>, vector<1x4x4x48xf32>
    %273 = vector.extract_strided_slice %208 {offsets = [6, 0], sizes = [1, 48], strides = [1, 1]} : vector<9x48xf32> to vector<1x48xf32>
    %274 = vector.shape_cast %273 : vector<1x48xf32> to vector<48xf32>
    %275 = vector.shape_cast %274 : vector<48xf32> to vector<1x1x1x48xf32>
    %276 = vector.broadcast %275 : vector<1x1x1x48xf32> to vector<1x4x4x48xf32>
    %277 = arith.mulf %272, %276 : vector<1x4x4x48xf32>
    %278 = arith.addf %271, %277 : vector<1x4x4x48xf32>
    %c0_189 = arith.constant 0 : index
    %c2_190 = arith.constant 2 : index
    %c1_191 = arith.constant 1 : index
    %c0_192 = arith.constant 0 : index
    %279 = vector.load %arg4[%c0_189, %c2_190, %c1_191, %c0_192] : memref<1x10x10x48xf32, #tpu.memory_space<vmem>>, vector<1x4x4x48xf32>
    %280 = vector.extract_strided_slice %208 {offsets = [7, 0], sizes = [1, 48], strides = [1, 1]} : vector<9x48xf32> to vector<1x48xf32>
    %281 = vector.shape_cast %280 : vector<1x48xf32> to vector<48xf32>
    %282 = vector.shape_cast %281 : vector<48xf32> to vector<1x1x1x48xf32>
    %283 = vector.broadcast %282 : vector<1x1x1x48xf32> to vector<1x4x4x48xf32>
    %284 = arith.mulf %279, %283 : vector<1x4x4x48xf32>
    %285 = arith.addf %278, %284 : vector<1x4x4x48xf32>
    %c0_193 = arith.constant 0 : index
    %c2_194 = arith.constant 2 : index
    %c2_195 = arith.constant 2 : index
    %c0_196 = arith.constant 0 : index
    %286 = vector.load %arg4[%c0_193, %c2_194, %c2_195, %c0_196] : memref<1x10x10x48xf32, #tpu.memory_space<vmem>>, vector<1x4x4x48xf32>
    %287 = vector.extract_strided_slice %208 {offsets = [8, 0], sizes = [1, 48], strides = [1, 1]} : vector<9x48xf32> to vector<1x48xf32>
    %288 = vector.shape_cast %287 : vector<1x48xf32> to vector<48xf32>
    %289 = vector.shape_cast %288 : vector<48xf32> to vector<1x1x1x48xf32>
    %290 = vector.broadcast %289 : vector<1x1x1x48xf32> to vector<1x4x4x48xf32>
    %291 = arith.mulf %286, %290 : vector<1x4x4x48xf32>
    %292 = arith.addf %285, %291 : vector<1x4x4x48xf32>
    %293 = vector.shape_cast %209 : vector<1x48xf32> to vector<1x1x1x48xf32>
    %294 = vector.broadcast %293 : vector<1x1x1x48xf32> to vector<1x4x4x48xf32>
    %295 = arith.addf %292, %294 : vector<1x4x4x48xf32>
    %cst_197 = arith.constant 0.000000e+00 : f32
    %cst_198 = arith.constant 6.000000e+00 : f32
    %296 = vector.broadcast %cst_197 : f32 to vector<1x4x4x48xf32>
    %297 = arith.maximumf %296, %295 : vector<1x4x4x48xf32>
    %298 = vector.broadcast %cst_198 : f32 to vector<1x4x4x48xf32>
    %299 = arith.minimumf %298, %297 : vector<1x4x4x48xf32>
    %300 = vector.extract_strided_slice %299 {offsets = [0, 0, 0, 0], sizes = [1, 1, 4, 48], strides = [1, 1, 1, 1]} : vector<1x4x4x48xf32> to vector<1x1x4x48xf32>
    %301 = vector.shape_cast %300 : vector<1x1x4x48xf32> to vector<4x48xf32>
    %c0_199 = arith.constant 0 : index
    %c0_200 = arith.constant 0 : index
    %302 = vector.load %arg5[%c0_199, %c0_200] : memref<64x48xf32, #tpu.memory_space<vmem>>, vector<4x48xf32>
    tpu.vector_store %arg5[%c0_199, %c0_200], %301 {strides = array<i32>} : memref<64x48xf32, #tpu.memory_space<vmem>>, vector<4x48xf32>,
    %303 = vector.extract_strided_slice %299 {offsets = [0, 1, 0, 0], sizes = [1, 1, 4, 48], strides = [1, 1, 1, 1]} : vector<1x4x4x48xf32> to vector<1x1x4x48xf32>
    %304 = vector.shape_cast %303 : vector<1x1x4x48xf32> to vector<4x48xf32>
    %c4_201 = arith.constant 4 : index
    %c0_202 = arith.constant 0 : index
    %305 = vector.load %arg5[%c4_201, %c0_202] : memref<64x48xf32, #tpu.memory_space<vmem>>, vector<4x48xf32>
    tpu.vector_store %arg5[%c4_201, %c0_202], %304 {strides = array<i32>} : memref<64x48xf32, #tpu.memory_space<vmem>>, vector<4x48xf32>,
    %306 = vector.extract_strided_slice %299 {offsets = [0, 2, 0, 0], sizes = [1, 1, 4, 48], strides = [1, 1, 1, 1]} : vector<1x4x4x48xf32> to vector<1x1x4x48xf32>
    %307 = vector.shape_cast %306 : vector<1x1x4x48xf32> to vector<4x48xf32>
    %c8_203 = arith.constant 8 : index
    %c0_204 = arith.constant 0 : index
    %308 = vector.load %arg5[%c8_203, %c0_204] : memref<64x48xf32, #tpu.memory_space<vmem>>, vector<4x48xf32>
    tpu.vector_store %arg5[%c8_203, %c0_204], %307 {strides = array<i32>} : memref<64x48xf32, #tpu.memory_space<vmem>>, vector<4x48xf32>,
    %309 = vector.extract_strided_slice %299 {offsets = [0, 3, 0, 0], sizes = [1, 1, 4, 48], strides = [1, 1, 1, 1]} : vector<1x4x4x48xf32> to vector<1x1x4x48xf32>
    %310 = vector.shape_cast %309 : vector<1x1x4x48xf32> to vector<4x48xf32>
    %c12_205 = arith.constant 12 : index
    %c0_206 = arith.constant 0 : index
    %311 = vector.load %arg5[%c12_205, %c0_206] : memref<64x48xf32, #tpu.memory_space<vmem>>, vector<4x48xf32>
    tpu.vector_store %arg5[%c12_205, %c0_206], %310 {strides = array<i32>} : memref<64x48xf32, #tpu.memory_space<vmem>>, vector<4x48xf32>,
    %c0_207 = arith.constant 0 : index
    %c0_208 = arith.constant 0 : index
    %312 = vector.load %arg5[%c0_207, %c0_208] : memref<64x48xf32, #tpu.memory_space<vmem>>, vector<16x48xf32>
    %c216 = arith.constant 216 : index
    %c0_209 = arith.constant 0 : index
    %313 = vector.load %arg2[%c216, %c0_209] : memref<480x128xf32, #tpu.memory_space<vmem>>, vector<48x8xf32>
    %c264 = arith.constant 264 : index
    %c0_210 = arith.constant 0 : index
    %314 = vector.load %arg2[%c264, %c0_210] : memref<480x128xf32, #tpu.memory_space<vmem>>, vector<1x8xf32>
    %cst_211 = arith.constant dense<0.000000e+00> : vector<16x8xf32>
    %315 = tpu.matmul %312, %313, %cst_211 {dimension_numbers = #tpu.dot_dimension_numbers<[1], [0], [0], [1], [0, 0, 1, 1], [], []>} : vector<16x48xf32>, vector<48x8xf32>, vector<16x8xf32> -> vector<16x8xf32>
    %316 = vector.broadcast %314 : vector<1x8xf32> to vector<16x8xf32>
    %317 = arith.addf %315, %316 : vector<16x8xf32>
    %318 = arith.addf %317, %198 : vector<16x8xf32>
    %c272 = arith.constant 272 : index
    %c0_212 = arith.constant 0 : index
    %319 = vector.load %arg2[%c272, %c0_212] : memref<480x128xf32, #tpu.memory_space<vmem>>, vector<8x48xf32>
    %c280 = arith.constant 280 : index
    %c0_213 = arith.constant 0 : index
    %320 = vector.load %arg2[%c280, %c0_213] : memref<480x128xf32, #tpu.memory_space<vmem>>, vector<1x48xf32>
    %cst_214 = arith.constant dense<0.000000e+00> : vector<16x48xf32>
    %321 = tpu.matmul %318, %319, %cst_214 {dimension_numbers = #tpu.dot_dimension_numbers<[1], [0], [0], [1], [0, 0, 1, 1], [], []>} : vector<16x8xf32>, vector<8x48xf32>, vector<16x48xf32> -> vector<16x48xf32>
    %322 = vector.broadcast %320 : vector<1x48xf32> to vector<16x48xf32>
    %323 = arith.addf %321, %322 : vector<16x48xf32>
    %cst_215 = arith.constant 0.000000e+00 : f32
    %cst_216 = arith.constant 6.000000e+00 : f32
    %324 = vector.broadcast %cst_215 : f32 to vector<16x48xf32>
    %325 = arith.maximumf %324, %323 : vector<16x48xf32>
    %326 = vector.broadcast %cst_216 : f32 to vector<16x48xf32>
    %327 = arith.minimumf %326, %325 : vector<16x48xf32>
    %c288 = arith.constant 288 : index
    %c0_217 = arith.constant 0 : index
    %328 = vector.load %arg2[%c288, %c0_217] : memref<480x128xf32, #tpu.memory_space<vmem>>, vector<9x48xf32>
    %c304 = arith.constant 304 : index
    %c0_218 = arith.constant 0 : index
    %329 = vector.load %arg2[%c304, %c0_218] : memref<480x128xf32, #tpu.memory_space<vmem>>, vector<1x48xf32>
    %cst_219 = arith.constant 0.000000e+00 : f32
    %330 = vector.broadcast %cst_219 : f32 to vector<1x6x6x48xf32>
    %c0_220 = arith.constant 0 : index
    %c0_221 = arith.constant 0 : index
    %c0_222 = arith.constant 0 : index
    %c0_223 = arith.constant 0 : index
    %331 = vector.load %arg4[%c0_220, %c0_221, %c0_222, %c0_223] : memref<1x10x10x48xf32, #tpu.memory_space<vmem>>, vector<1x6x6x48xf32>
    tpu.vector_store %arg4[%c0_220, %c0_221, %c0_222, %c0_223], %330 {strides = array<i32>} : memref<1x10x10x48xf32, #tpu.memory_space<vmem>>, vector<1x6x6x48xf32>,
    %c0_224 = arith.constant 0 : index
    %c0_225 = arith.constant 0 : index
    %332 = vector.load %arg5[%c0_224, %c0_225] : memref<64x48xf32, #tpu.memory_space<vmem>>, vector<16x48xf32>
    tpu.vector_store %arg5[%c0_224, %c0_225], %327 {strides = array<i32>} : memref<64x48xf32, #tpu.memory_space<vmem>>, vector<16x48xf32>,
    %c0_226 = arith.constant 0 : index
    %c0_227 = arith.constant 0 : index
    %333 = vector.load %arg5[%c0_226, %c0_227] : memref<64x48xf32, #tpu.memory_space<vmem>>, vector<4x48xf32>
    %c0_228 = arith.constant 0 : index
    %c1_229 = arith.constant 1 : index
    %c1_230 = arith.constant 1 : index
    %c0_231 = arith.constant 0 : index
    %334 = vector.load %arg4[%c0_228, %c1_229, %c1_230, %c0_231] : memref<1x10x10x48xf32, #tpu.memory_space<vmem>>, vector<1x1x4x48xf32>
    %335 = vector.shape_cast %334 : vector<1x1x4x48xf32> to vector<4x48xf32>
    %336 = vector.shape_cast %333 : vector<4x48xf32> to vector<1x1x4x48xf32>
    tpu.vector_store %arg4[%c0_228, %c1_229, %c1_230, %c0_231], %336 {strides = array<i32>} : memref<1x10x10x48xf32, #tpu.memory_space<vmem>>, vector<1x1x4x48xf32>,
    %c4_232 = arith.constant 4 : index
    %c0_233 = arith.constant 0 : index
    %337 = vector.load %arg5[%c4_232, %c0_233] : memref<64x48xf32, #tpu.memory_space<vmem>>, vector<4x48xf32>
    %c0_234 = arith.constant 0 : index
    %c2_235 = arith.constant 2 : index
    %c1_236 = arith.constant 1 : index
    %c0_237 = arith.constant 0 : index
    %338 = vector.load %arg4[%c0_234, %c2_235, %c1_236, %c0_237] : memref<1x10x10x48xf32, #tpu.memory_space<vmem>>, vector<1x1x4x48xf32>
    %339 = vector.shape_cast %338 : vector<1x1x4x48xf32> to vector<4x48xf32>
    %340 = vector.shape_cast %337 : vector<4x48xf32> to vector<1x1x4x48xf32>
    tpu.vector_store %arg4[%c0_234, %c2_235, %c1_236, %c0_237], %340 {strides = array<i32>} : memref<1x10x10x48xf32, #tpu.memory_space<vmem>>, vector<1x1x4x48xf32>,
    %c8_238 = arith.constant 8 : index
    %c0_239 = arith.constant 0 : index
    %341 = vector.load %arg5[%c8_238, %c0_239] : memref<64x48xf32, #tpu.memory_space<vmem>>, vector<4x48xf32>
    %c0_240 = arith.constant 0 : index
    %c3_241 = arith.constant 3 : index
    %c1_242 = arith.constant 1 : index
    %c0_243 = arith.constant 0 : index
    %342 = vector.load %arg4[%c0_240, %c3_241, %c1_242, %c0_243] : memref<1x10x10x48xf32, #tpu.memory_space<vmem>>, vector<1x1x4x48xf32>
    %343 = vector.shape_cast %342 : vector<1x1x4x48xf32> to vector<4x48xf32>
    %344 = vector.shape_cast %341 : vector<4x48xf32> to vector<1x1x4x48xf32>
    tpu.vector_store %arg4[%c0_240, %c3_241, %c1_242, %c0_243], %344 {strides = array<i32>} : memref<1x10x10x48xf32, #tpu.memory_space<vmem>>, vector<1x1x4x48xf32>,
    %c12_244 = arith.constant 12 : index
    %c0_245 = arith.constant 0 : index
    %345 = vector.load %arg5[%c12_244, %c0_245] : memref<64x48xf32, #tpu.memory_space<vmem>>, vector<4x48xf32>
    %c0_246 = arith.constant 0 : index
    %c4_247 = arith.constant 4 : index
    %c1_248 = arith.constant 1 : index
    %c0_249 = arith.constant 0 : index
    %346 = vector.load %arg4[%c0_246, %c4_247, %c1_248, %c0_249] : memref<1x10x10x48xf32, #tpu.memory_space<vmem>>, vector<1x1x4x48xf32>
    %347 = vector.shape_cast %346 : vector<1x1x4x48xf32> to vector<4x48xf32>
    %348 = vector.shape_cast %345 : vector<4x48xf32> to vector<1x1x4x48xf32>
    tpu.vector_store %arg4[%c0_246, %c4_247, %c1_248, %c0_249], %348 {strides = array<i32>} : memref<1x10x10x48xf32, #tpu.memory_space<vmem>>, vector<1x1x4x48xf32>,
    %cst_250 = arith.constant 0.000000e+00 : f32
    %349 = vector.broadcast %cst_250 : f32 to vector<1x2x2x48xf32>
    %c0_251 = arith.constant 0 : index
    %c0_252 = arith.constant 0 : index
    %c0_253 = arith.constant 0 : index
    %c0_254 = arith.constant 0 : index
    %350 = tpu.strided_load %arg4[%c0_251, %c0_252, %c0_253, %c0_254] {strides = array<i32: 1, 2, 2, 1>} : memref<1x10x10x48xf32, #tpu.memory_space<vmem>>, vector<1x2x2x48xf32>
    %351 = vector.extract_strided_slice %328 {offsets = [0, 0], sizes = [1, 48], strides = [1, 1]} : vector<9x48xf32> to vector<1x48xf32>
    %352 = vector.shape_cast %351 : vector<1x48xf32> to vector<48xf32>
    %353 = vector.shape_cast %352 : vector<48xf32> to vector<1x1x1x48xf32>
    %354 = vector.broadcast %353 : vector<1x1x1x48xf32> to vector<1x2x2x48xf32>
    %355 = arith.mulf %350, %354 : vector<1x2x2x48xf32>
    %356 = arith.addf %349, %355 : vector<1x2x2x48xf32>
    %c0_255 = arith.constant 0 : index
    %c0_256 = arith.constant 0 : index
    %c1_257 = arith.constant 1 : index
    %c0_258 = arith.constant 0 : index
    %357 = tpu.strided_load %arg4[%c0_255, %c0_256, %c1_257, %c0_258] {strides = array<i32: 1, 2, 2, 1>} : memref<1x10x10x48xf32, #tpu.memory_space<vmem>>, vector<1x2x2x48xf32>
    %358 = vector.extract_strided_slice %328 {offsets = [1, 0], sizes = [1, 48], strides = [1, 1]} : vector<9x48xf32> to vector<1x48xf32>
    %359 = vector.shape_cast %358 : vector<1x48xf32> to vector<48xf32>
    %360 = vector.shape_cast %359 : vector<48xf32> to vector<1x1x1x48xf32>
    %361 = vector.broadcast %360 : vector<1x1x1x48xf32> to vector<1x2x2x48xf32>
    %362 = arith.mulf %357, %361 : vector<1x2x2x48xf32>
    %363 = arith.addf %356, %362 : vector<1x2x2x48xf32>
    %c0_259 = arith.constant 0 : index
    %c0_260 = arith.constant 0 : index
    %c2_261 = arith.constant 2 : index
    %c0_262 = arith.constant 0 : index
    %364 = tpu.strided_load %arg4[%c0_259, %c0_260, %c2_261, %c0_262] {strides = array<i32: 1, 2, 2, 1>} : memref<1x10x10x48xf32, #tpu.memory_space<vmem>>, vector<1x2x2x48xf32>
    %365 = vector.extract_strided_slice %328 {offsets = [2, 0], sizes = [1, 48], strides = [1, 1]} : vector<9x48xf32> to vector<1x48xf32>
    %366 = vector.shape_cast %365 : vector<1x48xf32> to vector<48xf32>
    %367 = vector.shape_cast %366 : vector<48xf32> to vector<1x1x1x48xf32>
    %368 = vector.broadcast %367 : vector<1x1x1x48xf32> to vector<1x2x2x48xf32>
    %369 = arith.mulf %364, %368 : vector<1x2x2x48xf32>
    %370 = arith.addf %363, %369 : vector<1x2x2x48xf32>
    %c0_263 = arith.constant 0 : index
    %c1_264 = arith.constant 1 : index
    %c0_265 = arith.constant 0 : index
    %c0_266 = arith.constant 0 : index
    %371 = tpu.strided_load %arg4[%c0_263, %c1_264, %c0_265, %c0_266] {strides = array<i32: 1, 2, 2, 1>} : memref<1x10x10x48xf32, #tpu.memory_space<vmem>>, vector<1x2x2x48xf32>
    %372 = vector.extract_strided_slice %328 {offsets = [3, 0], sizes = [1, 48], strides = [1, 1]} : vector<9x48xf32> to vector<1x48xf32>
    %373 = vector.shape_cast %372 : vector<1x48xf32> to vector<48xf32>
    %374 = vector.shape_cast %373 : vector<48xf32> to vector<1x1x1x48xf32>
    %375 = vector.broadcast %374 : vector<1x1x1x48xf32> to vector<1x2x2x48xf32>
    %376 = arith.mulf %371, %375 : vector<1x2x2x48xf32>
    %377 = arith.addf %370, %376 : vector<1x2x2x48xf32>
    %c0_267 = arith.constant 0 : index
    %c1_268 = arith.constant 1 : index
    %c1_269 = arith.constant 1 : index
    %c0_270 = arith.constant 0 : index
    %378 = tpu.strided_load %arg4[%c0_267, %c1_268, %c1_269, %c0_270] {strides = array<i32: 1, 2, 2, 1>} : memref<1x10x10x48xf32, #tpu.memory_space<vmem>>, vector<1x2x2x48xf32>
    %379 = vector.extract_strided_slice %328 {offsets = [4, 0], sizes = [1, 48], strides = [1, 1]} : vector<9x48xf32> to vector<1x48xf32>
    %380 = vector.shape_cast %379 : vector<1x48xf32> to vector<48xf32>
    %381 = vector.shape_cast %380 : vector<48xf32> to vector<1x1x1x48xf32>
    %382 = vector.broadcast %381 : vector<1x1x1x48xf32> to vector<1x2x2x48xf32>
    %383 = arith.mulf %378, %382 : vector<1x2x2x48xf32>
    %384 = arith.addf %377, %383 : vector<1x2x2x48xf32>
    %c0_271 = arith.constant 0 : index
    %c1_272 = arith.constant 1 : index
    %c2_273 = arith.constant 2 : index
    %c0_274 = arith.constant 0 : index
    %385 = tpu.strided_load %arg4[%c0_271, %c1_272, %c2_273, %c0_274] {strides = array<i32: 1, 2, 2, 1>} : memref<1x10x10x48xf32, #tpu.memory_space<vmem>>, vector<1x2x2x48xf32>
    %386 = vector.extract_strided_slice %328 {offsets = [5, 0], sizes = [1, 48], strides = [1, 1]} : vector<9x48xf32> to vector<1x48xf32>
    %387 = vector.shape_cast %386 : vector<1x48xf32> to vector<48xf32>
    %388 = vector.shape_cast %387 : vector<48xf32> to vector<1x1x1x48xf32>
    %389 = vector.broadcast %388 : vector<1x1x1x48xf32> to vector<1x2x2x48xf32>
    %390 = arith.mulf %385, %389 : vector<1x2x2x48xf32>
    %391 = arith.addf %384, %390 : vector<1x2x2x48xf32>
    %c0_275 = arith.constant 0 : index
    %c2_276 = arith.constant 2 : index
    %c0_277 = arith.constant 0 : index
    %c0_278 = arith.constant 0 : index
    %392 = tpu.strided_load %arg4[%c0_275, %c2_276, %c0_277, %c0_278] {strides = array<i32: 1, 2, 2, 1>} : memref<1x10x10x48xf32, #tpu.memory_space<vmem>>, vector<1x2x2x48xf32>
    %393 = vector.extract_strided_slice %328 {offsets = [6, 0], sizes = [1, 48], strides = [1, 1]} : vector<9x48xf32> to vector<1x48xf32>
    %394 = vector.shape_cast %393 : vector<1x48xf32> to vector<48xf32>
    %395 = vector.shape_cast %394 : vector<48xf32> to vector<1x1x1x48xf32>
    %396 = vector.broadcast %395 : vector<1x1x1x48xf32> to vector<1x2x2x48xf32>
    %397 = arith.mulf %392, %396 : vector<1x2x2x48xf32>
    %398 = arith.addf %391, %397 : vector<1x2x2x48xf32>
    %c0_279 = arith.constant 0 : index
    %c2_280 = arith.constant 2 : index
    %c1_281 = arith.constant 1 : index
    %c0_282 = arith.constant 0 : index
    %399 = tpu.strided_load %arg4[%c0_279, %c2_280, %c1_281, %c0_282] {strides = array<i32: 1, 2, 2, 1>} : memref<1x10x10x48xf32, #tpu.memory_space<vmem>>, vector<1x2x2x48xf32>
    %400 = vector.extract_strided_slice %328 {offsets = [7, 0], sizes = [1, 48], strides = [1, 1]} : vector<9x48xf32> to vector<1x48xf32>
    %401 = vector.shape_cast %400 : vector<1x48xf32> to vector<48xf32>
    %402 = vector.shape_cast %401 : vector<48xf32> to vector<1x1x1x48xf32>
    %403 = vector.broadcast %402 : vector<1x1x1x48xf32> to vector<1x2x2x48xf32>
    %404 = arith.mulf %399, %403 : vector<1x2x2x48xf32>
    %405 = arith.addf %398, %404 : vector<1x2x2x48xf32>
    %c0_283 = arith.constant 0 : index
    %c2_284 = arith.constant 2 : index
    %c2_285 = arith.constant 2 : index
    %c0_286 = arith.constant 0 : index
    %406 = tpu.strided_load %arg4[%c0_283, %c2_284, %c2_285, %c0_286] {strides = array<i32: 1, 2, 2, 1>} : memref<1x10x10x48xf32, #tpu.memory_space<vmem>>, vector<1x2x2x48xf32>
    %407 = vector.extract_strided_slice %328 {offsets = [8, 0], sizes = [1, 48], strides = [1, 1]} : vector<9x48xf32> to vector<1x48xf32>
    %408 = vector.shape_cast %407 : vector<1x48xf32> to vector<48xf32>
    %409 = vector.shape_cast %408 : vector<48xf32> to vector<1x1x1x48xf32>
    %410 = vector.broadcast %409 : vector<1x1x1x48xf32> to vector<1x2x2x48xf32>
    %411 = arith.mulf %406, %410 : vector<1x2x2x48xf32>
    %412 = arith.addf %405, %411 : vector<1x2x2x48xf32>
    %413 = vector.shape_cast %329 : vector<1x48xf32> to vector<1x1x1x48xf32>
    %414 = vector.broadcast %413 : vector<1x1x1x48xf32> to vector<1x2x2x48xf32>
    %415 = arith.addf %412, %414 : vector<1x2x2x48xf32>
    %cst_287 = arith.constant 0.000000e+00 : f32
    %cst_288 = arith.constant 6.000000e+00 : f32
    %416 = vector.broadcast %cst_287 : f32 to vector<1x2x2x48xf32>
    %417 = arith.maximumf %416, %415 : vector<1x2x2x48xf32>
    %418 = vector.broadcast %cst_288 : f32 to vector<1x2x2x48xf32>
    %419 = arith.minimumf %418, %417 : vector<1x2x2x48xf32>
    %420 = vector.extract_strided_slice %419 {offsets = [0, 0, 0, 0], sizes = [1, 1, 2, 48], strides = [1, 1, 1, 1]} : vector<1x2x2x48xf32> to vector<1x1x2x48xf32>
    %421 = vector.shape_cast %420 : vector<1x1x2x48xf32> to vector<2x48xf32>
    %c0_289 = arith.constant 0 : index
    %c0_290 = arith.constant 0 : index
    %422 = vector.load %arg5[%c0_289, %c0_290] : memref<64x48xf32, #tpu.memory_space<vmem>>, vector<2x48xf32>
    tpu.vector_store %arg5[%c0_289, %c0_290], %421 {strides = array<i32>} : memref<64x48xf32, #tpu.memory_space<vmem>>, vector<2x48xf32>,
    %423 = vector.extract_strided_slice %419 {offsets = [0, 1, 0, 0], sizes = [1, 1, 2, 48], strides = [1, 1, 1, 1]} : vector<1x2x2x48xf32> to vector<1x1x2x48xf32>
    %424 = vector.shape_cast %423 : vector<1x1x2x48xf32> to vector<2x48xf32>
    %c2_291 = arith.constant 2 : index
    %c0_292 = arith.constant 0 : index
    %425 = vector.load %arg5[%c2_291, %c0_292] : memref<64x48xf32, #tpu.memory_space<vmem>>, vector<2x48xf32>
    tpu.vector_store %arg5[%c2_291, %c0_292], %424 {strides = array<i32>} : memref<64x48xf32, #tpu.memory_space<vmem>>, vector<2x48xf32>,
    %c0_293 = arith.constant 0 : index
    %c0_294 = arith.constant 0 : index
    %426 = vector.load %arg5[%c0_293, %c0_294] : memref<64x48xf32, #tpu.memory_space<vmem>>, vector<4x48xf32>
    %c312 = arith.constant 312 : index
    %c0_295 = arith.constant 0 : index
    %427 = vector.load %arg2[%c312, %c0_295] : memref<480x128xf32, #tpu.memory_space<vmem>>, vector<48x8xf32>
    %c360 = arith.constant 360 : index
    %c0_296 = arith.constant 0 : index
    %428 = vector.load %arg2[%c360, %c0_296] : memref<480x128xf32, #tpu.memory_space<vmem>>, vector<1x8xf32>
    %cst_297 = arith.constant dense<0.000000e+00> : vector<4x8xf32>
    %429 = tpu.matmul %426, %427, %cst_297 {dimension_numbers = #tpu.dot_dimension_numbers<[1], [0], [0], [1], [0, 0, 1, 1], [], []>} : vector<4x48xf32>, vector<48x8xf32>, vector<4x8xf32> -> vector<4x8xf32>
    %430 = vector.broadcast %428 : vector<1x8xf32> to vector<4x8xf32>
    %431 = arith.addf %429, %430 : vector<4x8xf32>
    %c368 = arith.constant 368 : index
    %c0_298 = arith.constant 0 : index
    %432 = vector.load %arg2[%c368, %c0_298] : memref<480x128xf32, #tpu.memory_space<vmem>>, vector<8x48xf32>
    %c376 = arith.constant 376 : index
    %c0_299 = arith.constant 0 : index
    %433 = vector.load %arg2[%c376, %c0_299] : memref<480x128xf32, #tpu.memory_space<vmem>>, vector<1x48xf32>
    %cst_300 = arith.constant dense<0.000000e+00> : vector<4x48xf32>
    %434 = tpu.matmul %431, %432, %cst_300 {dimension_numbers = #tpu.dot_dimension_numbers<[1], [0], [0], [1], [0, 0, 1, 1], [], []>} : vector<4x8xf32>, vector<8x48xf32>, vector<4x48xf32> -> vector<4x48xf32>
    %435 = vector.broadcast %433 : vector<1x48xf32> to vector<4x48xf32>
    %436 = arith.addf %434, %435 : vector<4x48xf32>
    %cst_301 = arith.constant 0.000000e+00 : f32
    %cst_302 = arith.constant 6.000000e+00 : f32
    %437 = vector.broadcast %cst_301 : f32 to vector<4x48xf32>
    %438 = arith.maximumf %437, %436 : vector<4x48xf32>
    %439 = vector.broadcast %cst_302 : f32 to vector<4x48xf32>
    %440 = arith.minimumf %439, %438 : vector<4x48xf32>
    %c384 = arith.constant 384 : index
    %c0_303 = arith.constant 0 : index
    %441 = vector.load %arg2[%c384, %c0_303] : memref<480x128xf32, #tpu.memory_space<vmem>>, vector<9x48xf32>
    %c400 = arith.constant 400 : index
    %c0_304 = arith.constant 0 : index
    %442 = vector.load %arg2[%c400, %c0_304] : memref<480x128xf32, #tpu.memory_space<vmem>>, vector<1x48xf32>
    %cst_305 = arith.constant 0.000000e+00 : f32
    %443 = vector.broadcast %cst_305 : f32 to vector<1x4x4x48xf32>
    %c0_306 = arith.constant 0 : index
    %c0_307 = arith.constant 0 : index
    %c0_308 = arith.constant 0 : index
    %c0_309 = arith.constant 0 : index
    %444 = vector.load %arg4[%c0_306, %c0_307, %c0_308, %c0_309] : memref<1x10x10x48xf32, #tpu.memory_space<vmem>>, vector<1x4x4x48xf32>
    tpu.vector_store %arg4[%c0_306, %c0_307, %c0_308, %c0_309], %443 {strides = array<i32>} : memref<1x10x10x48xf32, #tpu.memory_space<vmem>>, vector<1x4x4x48xf32>,
    %c0_310 = arith.constant 0 : index
    %c0_311 = arith.constant 0 : index
    %445 = vector.load %arg5[%c0_310, %c0_311] : memref<64x48xf32, #tpu.memory_space<vmem>>, vector<4x48xf32>
    tpu.vector_store %arg5[%c0_310, %c0_311], %440 {strides = array<i32>} : memref<64x48xf32, #tpu.memory_space<vmem>>, vector<4x48xf32>,
    %c0_312 = arith.constant 0 : index
    %c0_313 = arith.constant 0 : index
    %446 = vector.load %arg5[%c0_312, %c0_313] : memref<64x48xf32, #tpu.memory_space<vmem>>, vector<2x48xf32>
    %c0_314 = arith.constant 0 : index
    %c1_315 = arith.constant 1 : index
    %c1_316 = arith.constant 1 : index
    %c0_317 = arith.constant 0 : index
    %447 = vector.load %arg4[%c0_314, %c1_315, %c1_316, %c0_317] : memref<1x10x10x48xf32, #tpu.memory_space<vmem>>, vector<1x1x2x48xf32>
    %448 = vector.shape_cast %447 : vector<1x1x2x48xf32> to vector<2x48xf32>
    %449 = vector.shape_cast %446 : vector<2x48xf32> to vector<1x1x2x48xf32>
    tpu.vector_store %arg4[%c0_314, %c1_315, %c1_316, %c0_317], %449 {strides = array<i32>} : memref<1x10x10x48xf32, #tpu.memory_space<vmem>>, vector<1x1x2x48xf32>,
    %c2_318 = arith.constant 2 : index
    %c0_319 = arith.constant 0 : index
    %450 = vector.load %arg5[%c2_318, %c0_319] : memref<64x48xf32, #tpu.memory_space<vmem>>, vector<2x48xf32>
    %c0_320 = arith.constant 0 : index
    %c2_321 = arith.constant 2 : index
    %c1_322 = arith.constant 1 : index
    %c0_323 = arith.constant 0 : index
    %451 = vector.load %arg4[%c0_320, %c2_321, %c1_322, %c0_323] : memref<1x10x10x48xf32, #tpu.memory_space<vmem>>, vector<1x1x2x48xf32>
    %452 = vector.shape_cast %451 : vector<1x1x2x48xf32> to vector<2x48xf32>
    %453 = vector.shape_cast %450 : vector<2x48xf32> to vector<1x1x2x48xf32>
    tpu.vector_store %arg4[%c0_320, %c2_321, %c1_322, %c0_323], %453 {strides = array<i32>} : memref<1x10x10x48xf32, #tpu.memory_space<vmem>>, vector<1x1x2x48xf32>,
    %cst_324 = arith.constant 0.000000e+00 : f32
    %454 = vector.broadcast %cst_324 : f32 to vector<1x2x2x48xf32>
    %c0_325 = arith.constant 0 : index
    %c0_326 = arith.constant 0 : index
    %c0_327 = arith.constant 0 : index
    %c0_328 = arith.constant 0 : index
    %455 = vector.load %arg4[%c0_325, %c0_326, %c0_327, %c0_328] : memref<1x10x10x48xf32, #tpu.memory_space<vmem>>, vector<1x2x2x48xf32>
    %456 = vector.extract_strided_slice %441 {offsets = [0, 0], sizes = [1, 48], strides = [1, 1]} : vector<9x48xf32> to vector<1x48xf32>
    %457 = vector.shape_cast %456 : vector<1x48xf32> to vector<48xf32>
    %458 = vector.shape_cast %457 : vector<48xf32> to vector<1x1x1x48xf32>
    %459 = vector.broadcast %458 : vector<1x1x1x48xf32> to vector<1x2x2x48xf32>
    %460 = arith.mulf %455, %459 : vector<1x2x2x48xf32>
    %461 = arith.addf %454, %460 : vector<1x2x2x48xf32>
    %c0_329 = arith.constant 0 : index
    %c0_330 = arith.constant 0 : index
    %c1_331 = arith.constant 1 : index
    %c0_332 = arith.constant 0 : index
    %462 = vector.load %arg4[%c0_329, %c0_330, %c1_331, %c0_332] : memref<1x10x10x48xf32, #tpu.memory_space<vmem>>, vector<1x2x2x48xf32>
    %463 = vector.extract_strided_slice %441 {offsets = [1, 0], sizes = [1, 48], strides = [1, 1]} : vector<9x48xf32> to vector<1x48xf32>
    %464 = vector.shape_cast %463 : vector<1x48xf32> to vector<48xf32>
    %465 = vector.shape_cast %464 : vector<48xf32> to vector<1x1x1x48xf32>
    %466 = vector.broadcast %465 : vector<1x1x1x48xf32> to vector<1x2x2x48xf32>
    %467 = arith.mulf %462, %466 : vector<1x2x2x48xf32>
    %468 = arith.addf %461, %467 : vector<1x2x2x48xf32>
    %c0_333 = arith.constant 0 : index
    %c0_334 = arith.constant 0 : index
    %c2_335 = arith.constant 2 : index
    %c0_336 = arith.constant 0 : index
    %469 = vector.load %arg4[%c0_333, %c0_334, %c2_335, %c0_336] : memref<1x10x10x48xf32, #tpu.memory_space<vmem>>, vector<1x2x2x48xf32>
    %470 = vector.extract_strided_slice %441 {offsets = [2, 0], sizes = [1, 48], strides = [1, 1]} : vector<9x48xf32> to vector<1x48xf32>
    %471 = vector.shape_cast %470 : vector<1x48xf32> to vector<48xf32>
    %472 = vector.shape_cast %471 : vector<48xf32> to vector<1x1x1x48xf32>
    %473 = vector.broadcast %472 : vector<1x1x1x48xf32> to vector<1x2x2x48xf32>
    %474 = arith.mulf %469, %473 : vector<1x2x2x48xf32>
    %475 = arith.addf %468, %474 : vector<1x2x2x48xf32>
    %c0_337 = arith.constant 0 : index
    %c1_338 = arith.constant 1 : index
    %c0_339 = arith.constant 0 : index
    %c0_340 = arith.constant 0 : index
    %476 = vector.load %arg4[%c0_337, %c1_338, %c0_339, %c0_340] : memref<1x10x10x48xf32, #tpu.memory_space<vmem>>, vector<1x2x2x48xf32>
    %477 = vector.extract_strided_slice %441 {offsets = [3, 0], sizes = [1, 48], strides = [1, 1]} : vector<9x48xf32> to vector<1x48xf32>
    %478 = vector.shape_cast %477 : vector<1x48xf32> to vector<48xf32>
    %479 = vector.shape_cast %478 : vector<48xf32> to vector<1x1x1x48xf32>
    %480 = vector.broadcast %479 : vector<1x1x1x48xf32> to vector<1x2x2x48xf32>
    %481 = arith.mulf %476, %480 : vector<1x2x2x48xf32>
    %482 = arith.addf %475, %481 : vector<1x2x2x48xf32>
    %c0_341 = arith.constant 0 : index
    %c1_342 = arith.constant 1 : index
    %c1_343 = arith.constant 1 : index
    %c0_344 = arith.constant 0 : index
    %483 = vector.load %arg4[%c0_341, %c1_342, %c1_343, %c0_344] : memref<1x10x10x48xf32, #tpu.memory_space<vmem>>, vector<1x2x2x48xf32>
    %484 = vector.extract_strided_slice %441 {offsets = [4, 0], sizes = [1, 48], strides = [1, 1]} : vector<9x48xf32> to vector<1x48xf32>
    %485 = vector.shape_cast %484 : vector<1x48xf32> to vector<48xf32>
    %486 = vector.shape_cast %485 : vector<48xf32> to vector<1x1x1x48xf32>
    %487 = vector.broadcast %486 : vector<1x1x1x48xf32> to vector<1x2x2x48xf32>
    %488 = arith.mulf %483, %487 : vector<1x2x2x48xf32>
    %489 = arith.addf %482, %488 : vector<1x2x2x48xf32>
    %c0_345 = arith.constant 0 : index
    %c1_346 = arith.constant 1 : index
    %c2_347 = arith.constant 2 : index
    %c0_348 = arith.constant 0 : index
    %490 = vector.load %arg4[%c0_345, %c1_346, %c2_347, %c0_348] : memref<1x10x10x48xf32, #tpu.memory_space<vmem>>, vector<1x2x2x48xf32>
    %491 = vector.extract_strided_slice %441 {offsets = [5, 0], sizes = [1, 48], strides = [1, 1]} : vector<9x48xf32> to vector<1x48xf32>
    %492 = vector.shape_cast %491 : vector<1x48xf32> to vector<48xf32>
    %493 = vector.shape_cast %492 : vector<48xf32> to vector<1x1x1x48xf32>
    %494 = vector.broadcast %493 : vector<1x1x1x48xf32> to vector<1x2x2x48xf32>
    %495 = arith.mulf %490, %494 : vector<1x2x2x48xf32>
    %496 = arith.addf %489, %495 : vector<1x2x2x48xf32>
    %c0_349 = arith.constant 0 : index
    %c2_350 = arith.constant 2 : index
    %c0_351 = arith.constant 0 : index
    %c0_352 = arith.constant 0 : index
    %497 = vector.load %arg4[%c0_349, %c2_350, %c0_351, %c0_352] : memref<1x10x10x48xf32, #tpu.memory_space<vmem>>, vector<1x2x2x48xf32>
    %498 = vector.extract_strided_slice %441 {offsets = [6, 0], sizes = [1, 48], strides = [1, 1]} : vector<9x48xf32> to vector<1x48xf32>
    %499 = vector.shape_cast %498 : vector<1x48xf32> to vector<48xf32>
    %500 = vector.shape_cast %499 : vector<48xf32> to vector<1x1x1x48xf32>
    %501 = vector.broadcast %500 : vector<1x1x1x48xf32> to vector<1x2x2x48xf32>
    %502 = arith.mulf %497, %501 : vector<1x2x2x48xf32>
    %503 = arith.addf %496, %502 : vector<1x2x2x48xf32>
    %c0_353 = arith.constant 0 : index
    %c2_354 = arith.constant 2 : index
    %c1_355 = arith.constant 1 : index
    %c0_356 = arith.constant 0 : index
    %504 = vector.load %arg4[%c0_353, %c2_354, %c1_355, %c0_356] : memref<1x10x10x48xf32, #tpu.memory_space<vmem>>, vector<1x2x2x48xf32>
    %505 = vector.extract_strided_slice %441 {offsets = [7, 0], sizes = [1, 48], strides = [1, 1]} : vector<9x48xf32> to vector<1x48xf32>
    %506 = vector.shape_cast %505 : vector<1x48xf32> to vector<48xf32>
    %507 = vector.shape_cast %506 : vector<48xf32> to vector<1x1x1x48xf32>
    %508 = vector.broadcast %507 : vector<1x1x1x48xf32> to vector<1x2x2x48xf32>
    %509 = arith.mulf %504, %508 : vector<1x2x2x48xf32>
    %510 = arith.addf %503, %509 : vector<1x2x2x48xf32>
    %c0_357 = arith.constant 0 : index
    %c2_358 = arith.constant 2 : index
    %c2_359 = arith.constant 2 : index
    %c0_360 = arith.constant 0 : index
    %511 = vector.load %arg4[%c0_357, %c2_358, %c2_359, %c0_360] : memref<1x10x10x48xf32, #tpu.memory_space<vmem>>, vector<1x2x2x48xf32>
    %512 = vector.extract_strided_slice %441 {offsets = [8, 0], sizes = [1, 48], strides = [1, 1]} : vector<9x48xf32> to vector<1x48xf32>
    %513 = vector.shape_cast %512 : vector<1x48xf32> to vector<48xf32>
    %514 = vector.shape_cast %513 : vector<48xf32> to vector<1x1x1x48xf32>
    %515 = vector.broadcast %514 : vector<1x1x1x48xf32> to vector<1x2x2x48xf32>
    %516 = arith.mulf %511, %515 : vector<1x2x2x48xf32>
    %517 = arith.addf %510, %516 : vector<1x2x2x48xf32>
    %518 = vector.shape_cast %442 : vector<1x48xf32> to vector<1x1x1x48xf32>
    %519 = vector.broadcast %518 : vector<1x1x1x48xf32> to vector<1x2x2x48xf32>
    %520 = arith.addf %517, %519 : vector<1x2x2x48xf32>
    %cst_361 = arith.constant 0.000000e+00 : f32
    %cst_362 = arith.constant 6.000000e+00 : f32
    %521 = vector.broadcast %cst_361 : f32 to vector<1x2x2x48xf32>
    %522 = arith.maximumf %521, %520 : vector<1x2x2x48xf32>
    %523 = vector.broadcast %cst_362 : f32 to vector<1x2x2x48xf32>
    %524 = arith.minimumf %523, %522 : vector<1x2x2x48xf32>
    %525 = vector.extract_strided_slice %524 {offsets = [0, 0, 0, 0], sizes = [1, 1, 2, 48], strides = [1, 1, 1, 1]} : vector<1x2x2x48xf32> to vector<1x1x2x48xf32>
    %526 = vector.shape_cast %525 : vector<1x1x2x48xf32> to vector<2x48xf32>
    %c0_363 = arith.constant 0 : index
    %c0_364 = arith.constant 0 : index
    %527 = vector.load %arg5[%c0_363, %c0_364] : memref<64x48xf32, #tpu.memory_space<vmem>>, vector<2x48xf32>
    tpu.vector_store %arg5[%c0_363, %c0_364], %526 {strides = array<i32>} : memref<64x48xf32, #tpu.memory_space<vmem>>, vector<2x48xf32>,
    %528 = vector.extract_strided_slice %524 {offsets = [0, 1, 0, 0], sizes = [1, 1, 2, 48], strides = [1, 1, 1, 1]} : vector<1x2x2x48xf32> to vector<1x1x2x48xf32>
    %529 = vector.shape_cast %528 : vector<1x1x2x48xf32> to vector<2x48xf32>
    %c2_365 = arith.constant 2 : index
    %c0_366 = arith.constant 0 : index
    %530 = vector.load %arg5[%c2_365, %c0_366] : memref<64x48xf32, #tpu.memory_space<vmem>>, vector<2x48xf32>
    tpu.vector_store %arg5[%c2_365, %c0_366], %529 {strides = array<i32>} : memref<64x48xf32, #tpu.memory_space<vmem>>, vector<2x48xf32>,
    %c0_367 = arith.constant 0 : index
    %c0_368 = arith.constant 0 : index
    %531 = vector.load %arg5[%c0_367, %c0_368] : memref<64x48xf32, #tpu.memory_space<vmem>>, vector<4x48xf32>
    %c408 = arith.constant 408 : index
    %c0_369 = arith.constant 0 : index
    %532 = vector.load %arg2[%c408, %c0_369] : memref<480x128xf32, #tpu.memory_space<vmem>>, vector<48x8xf32>
    %c456 = arith.constant 456 : index
    %c0_370 = arith.constant 0 : index
    %533 = vector.load %arg2[%c456, %c0_370] : memref<480x128xf32, #tpu.memory_space<vmem>>, vector<1x8xf32>
    %cst_371 = arith.constant dense<0.000000e+00> : vector<4x8xf32>
    %534 = tpu.matmul %531, %532, %cst_371 {dimension_numbers = #tpu.dot_dimension_numbers<[1], [0], [0], [1], [0, 0, 1, 1], [], []>} : vector<4x48xf32>, vector<48x8xf32>, vector<4x8xf32> -> vector<4x8xf32>
    %535 = vector.broadcast %533 : vector<1x8xf32> to vector<4x8xf32>
    %536 = arith.addf %534, %535 : vector<4x8xf32>
    %537 = arith.addf %536, %431 : vector<4x8xf32>
    %c464 = arith.constant 464 : index
    %c0_372 = arith.constant 0 : index
    %538 = vector.load %arg2[%c464, %c0_372] : memref<480x128xf32, #tpu.memory_space<vmem>>, vector<8x6xf32>
    %c472 = arith.constant 472 : index
    %c0_373 = arith.constant 0 : index
    %539 = vector.load %arg2[%c472, %c0_373] : memref<480x128xf32, #tpu.memory_space<vmem>>, vector<1x6xf32>
    %cst_374 = arith.constant dense<0.000000e+00> : vector<8xf32>
    %540 = vector.multi_reduction <add>, %537, %cst_374 [0] : vector<4x8xf32> to vector<8xf32>
    %541 = vector.shape_cast %540 : vector<8xf32> to vector<1x8xf32>
    %cst_375 = arith.constant 4.000000e+00 : f32
    %542 = vector.broadcast %cst_375 : f32 to vector<1x8xf32>
    %543 = arith.divf %541, %542 : vector<1x8xf32>
    %cst_376 = arith.constant dense<0.000000e+00> : vector<1x6xf32>
    %544 = tpu.matmul %543, %538, %cst_376 {dimension_numbers = #tpu.dot_dimension_numbers<[1], [0], [0], [1], [0, 0, 1, 1], [], []>} : vector<1x8xf32>, vector<8x6xf32>, vector<1x6xf32> -> vector<1x6xf32>
    %545 = arith.addf %544, %539 : vector<1x6xf32>
    %c0_377 = arith.constant 0 : index
    %c0_378 = arith.constant 0 : index
    %c0_379 = arith.constant 0 : index
    %546 = vector.load %arg3[%c0_377, %c0_378, %c0_379] : memref<1x1x6xf32, #tpu.memory_space<vmem>>, vector<1x1x6xf32>
    %547 = vector.shape_cast %546 : vector<1x1x6xf32> to vector<1x6xf32>
    %548 = vector.shape_cast %545 : vector<1x6xf32> to vector<1x1x6xf32>
    tpu.vector_store %arg3[%c0_377, %c0_378, %c0_379], %548 {strides = array<i32>} : memref<1x1x6xf32, #tpu.memory_space<vmem>>, vector<1x1x6xf32>,
    return
  }
  func.func @transform_0(%arg0: i32) -> (i32, i32, i32) {
    %c0_i32 = arith.constant 0 : i32
    %c0_i32_0 = arith.constant 0 : i32
    %c0_i32_1 = arith.constant 0 : i32
    return %arg0, %c0_i32, %c0_i32_0 : i32, i32, i32
  }
  func.func @transform_1(%arg0: i32) -> (i32, i32) {
    %c0_i32 = arith.constant 0 : i32
    %c0_i32_0 = arith.constant 0 : i32
    %c0_i32_1 = arith.constant 0 : i32
    return %c0_i32, %c0_i32_0 : i32, i32
  }
  func.func @transform_2(%arg0: i32) -> (i32, i32, i32) {
    %c0_i32 = arith.constant 0 : i32
    %c0_i32_0 = arith.constant 0 : i32
    %c0_i32_1 = arith.constant 0 : i32
    return %arg0, %c0_i32, %c0_i32_0 : i32, i32, i32
  }
}

</mosaic_0001>

<llo_original>
// kernel: _lambda_.1
$region0: #{_lambda_.1}
  #allocation0 [shape = 'u32[]', space=smem, size = 0x4, offset = 0x4, fixed_abs, tag = 'smem constant byte address 0x4 - core index']
  #allocation1 [shape = 'u32[144,128]{1,0:T(1,128)}', space=vmem, size = 0x12000, scoped, tag = 'internal scratch']
  #allocation2 [shape = 'f32[1,10,10,48]{3,2,1,0:T(8,128)}', space=vmem, size = 0x14000, scoped, tag = 'scratch operand']
  #allocation3 [shape = 'f32[64,48]{1,0:T(8,128)}', space=vmem, size = 0x8000, scoped, tag = 'scratch operand']
  %s0 = inlined_call_operand.vmem [shape: f32[2,64,27], index: 0, kind: input, shape index: {}]
  %s1 = inlined_call_operand.vmem [shape: f32[480,128], index: 1, kind: input, shape index: {}]
  %s2 = inlined_call_operand.hbm [shape: f32[2,1,6], index: 2, kind: output, shape index: {}]
  %s3 = sld [smem:[#allocation0]]
  $region41: #{_lambda_.1} parent=0
    _
  %s5 = ssub.s32 1, %s3
  %s6 = scalar_select 0, %s5, %s3
  $region1: #{_lambda_.1} parent=0
    #allocation4 [shape = 'u8[1024]{0}', space=vmem, size = 0x400, scoped, tag = 'output window, operand 0']
    #allocation5 [shape = 's32[2]{0}', space=sflag, size = 0x8, scoped, tag = 'scoped memory for _lambda_.1']
    %7 = vsyncpa [#allocation5], 0
    %s8 = scalar_lea.sflag [#allocation5], 1
    %9 = vsyncpa %s8, 0
    loop: start=0, step=1, limit=4
    $region2: #{_lambda_.1} parent=1 // loop_pre_header
      _
    $region3: #{_lambda_.1} parent=1 // loop_header
      %s11 = sphi 0, %s15
      %p12 = scmp.ge.s32.totalorder %s11, 4
      %s21 = sphi 0, %s23
      %s24 = sphi 0, %s21
      %s25 = sphi 0, %s24
      %s41 = sphi 0, %s25
      %s45 = sphi 0, %s45
      %s47 = sphi 0, %s45
      %s48 = sphi 0, %s47
      %s62 = sphi 0, %s48
      %s68 = sphi 0, %s70
      %s71 = sphi 0, %s68
      %s72 = sphi 0, %s71
      %s88 = sphi 0, %s72
    $region4: #{_lambda_.1} parent=1 // loop_header_branch
      %14 = sbr.rel (%p12) target = $region8
    $region5: #{_lambda_.1} parent=1 // loop_body
      %s16 = ssub.s32 %s11, 1
      %s17 = ssub.s32 %s11, 2
      %s18 = sadd.s32 %s11, 1
      %s19 = ssub.s32 %s11, %s18
      %p20 = scmp.eq.s32.totalorder %s19, 0
      %s22 = sadd.s32 %s21, 1
      %s23 = scalar_select %p20, %s21, %s22
      %p26 = pneg %p20
      %p27 = scmp.eq.s32.totalorder %s11, 1
      %p28 = por %p26, %p27
      %p29 = scmp.ne.s32.totalorder %s21, %s24
      %p30 = scmp.eq.s32.totalorder %s11, 0
      %p31 = por %p29, %p30
      %p32 = scmp.ne.s32.totalorder %s21, %s24
      %p33 = scmp.eq.s32.totalorder %s16, 1
      %p34 = por %p32, %p33
      %p35 = scmp.ne.s32.totalorder %s24, %s25
      %p36 = scmp.eq.s32.totalorder %s16, 0
      %p37 = por %p35, %p36
      %p38 = scmp.ne.s32.totalorder %s24, %s25
      %p39 = scmp.eq.s32.totalorder %s17, 1
      %p40 = por %p38, %p39
      %p42 = scmp.ne.s32.totalorder %s25, %s41
      %p43 = scmp.eq.s32.totalorder %s17, 0
      %p44 = por %p42, %p43
      %s46 = sadd.s32 %s45, 1
      %p49 = scmp.eq.s32.totalorder %s11, 1
      %p50 = scmp.ne.s32.totalorder %s45, %s47
      %p51 = scmp.eq.s32.totalorder %s11, 0
      %p52 = por %p50, %p51
      %p53 = scmp.ne.s32.totalorder %s45, %s47
      %p54 = scmp.eq.s32.totalorder %s16, 1
      %p55 = por %p53, %p54
      %p56 = scmp.ne.s32.totalorder %s47, %s48
      %p57 = scmp.eq.s32.totalorder %s16, 0
      %p58 = por %p56, %p57
      %p59 = scmp.ne.s32.totalorder %s47, %s48
      %p60 = scmp.eq.s32.totalorder %s17, 1
      %p61 = por %p59, %p60
      %p63 = scmp.ne.s32.totalorder %s48, %s62
      %p64 = scmp.eq.s32.totalorder %s17, 0
      %p65 = por %p63, %p64
      %s66 = ssub.s32 %s11, %s18
      %p67 = scmp.eq.s32.totalorder %s66, 0
      %s69 = sadd.s32 %s68, 1
      %s70 = scalar_select %p67, %s68, %s69
      %p73 = pneg %p67
      %p74 = scmp.eq.s32.totalorder %s11, 1
      %p75 = por %p73, %p74
      %p76 = scmp.ne.s32.totalorder %s68, %s71
      %p77 = scmp.eq.s32.totalorder %s11, 0
      %p78 = por %p76, %p77
      %p79 = scmp.ne.s32.totalorder %s68, %s71
      %p80 = scmp.eq.s32.totalorder %s16, 1
      %p81 = por %p79, %p80
      %p82 = scmp.ne.s32.totalorder %s71, %s72
      %p83 = scmp.eq.s32.totalorder %s16, 0
      %p84 = por %p82, %p83
      %p85 = scmp.ne.s32.totalorder %s71, %s72
      %p86 = scmp.eq.s32.totalorder %s17, 1
      %p87 = por %p85, %p86
      %p89 = scmp.ne.s32.totalorder %s72, %s88
      %p90 = scmp.eq.s32.totalorder %s17, 0
      %p91 = por %p89, %p90
      %p92 = scmp.le.s32.totalorder 1, %s11
      %p93 = scmp.lt.s32.totalorder %s11, 3
      %p94 = pnand %p92, %p93
      %p95 = pneg %p94
      // Predicated region
      $region9: #{_lambda_.1} parent=5 // pred_check
        _
      $region10: #{_lambda_.1} parent=5 // pred_check_branch
        %97 = sbr.rel (%p94) target = $region12
      $region11: #{_lambda_.1} parent=5 // pred_region
        %s98 = ssub.s32 %s11, 1
        // Predicated region
        $region13: #{_lambda_.1} parent=11 // pred_check
          %p99 = pneg %p58
        $region14: #{_lambda_.1} parent=11 // pred_check_branch
          %101 = sbr.rel (%p99) target = $region16
        $region15: #{_lambda_.1} parent=11 // pred_region
          _
        $region16: #{_lambda_.1} parent=11 // pred_fallthru
          _
      $region12: #{_lambda_.1} parent=5 // pred_fallthru
        _
      %p102 = scmp.lt.s32.totalorder %s11, 2
      // Predicated region
      $region17: #{_lambda_.1} parent=5 // pred_check
        %p103 = pneg %p102
      $region18: #{_lambda_.1} parent=5 // pred_check_branch
        %105 = sbr.rel (%p103) target = $region20
      $region19: #{_lambda_.1} parent=5 // pred_region
        // Predicated region
        $region21: #{_lambda_.1} parent=19 // pred_check
          %p106 = pneg %p31
        $region22: #{_lambda_.1} parent=19 // pred_check_branch
          %108 = sbr.rel (%p106) target = $region24
        $region23: #{_lambda_.1} parent=19 // pred_region
          %p109 = scmp.lt.s32.totalorder %s11, 1
          %s110 = scalar_select %p109, %s11, 1
          %s111 = smul.addr %s110, 8
          %s112 = smul.addr %s111, 8
          %s113 = scalar_lea.vmem %s0, %s112
        $region24: #{_lambda_.1} parent=19 // pred_fallthru
          _
      $region20: #{_lambda_.1} parent=5 // pred_fallthru
        _
      %p114 = scmp.le.s32.totalorder 1, %s11
      %p115 = scmp.lt.s32.totalorder %s11, 3
      %p116 = pnand %p114, %p115
      %p117 = pneg %p116
      // Predicated region
      $region25: #{_lambda_.1} parent=5 // pred_check
        _
      $region26: #{_lambda_.1} parent=5 // pred_check_branch
        %119 = sbr.rel (%p116) target = $region28
      $region27: #{_lambda_.1} parent=5 // pred_region
        %s120 = ssub.s32 %s11, 1
        %p121 = scmp.lt.s32.totalorder %s16, 1
        %s122 = scalar_select %p121, %s16, 1
        %s123 = smul.addr %s122, 8
        %s124 = smul.addr %s123, 8
        %s125 = scalar_lea.vmem %s0, %s124
        %p126 = pneg %p37
        %p127 = pneg %p34
        %p128 = pneg %p58
        %p129 = pneg %p55
        %p130 = pneg %p84
        %p131 = pneg %p81
        %s132 = sand.u32 %s71, 1
        %s133 = scalar_lea.sflag [#allocation5], %s132
        %s134 = sand.u32 %s71, 1
        %s135 = scalar_lea.vmem [#allocation4], %s134
        %p136 = scmp.lt.s32.totalorder %s16, 1
        %s137 = scalar_select %p136, %s16, 1
        %s138 = smul.addr %s137, 8
        %s139 = smul.addr %s138, 8
        %s140 = scalar_lea.vmem %s0, %s139
        %v141 = vld [vmem:[%s1] sm:$0xff]
        %v142 = vld [vmem:[%s1 + $0x8] sm:$0xff]
        %v143 = vld [vmem:[%s1 + $0x10] sm:$0xff]
        %v144 = vld [vmem:[%s1 + $0x18] sm:$0x7]
        %v145 = vld [vmem:[%s1 + $0x20] sm:$0x1]
        %v146 = vld [vmem:[%s140] sm:$0xff]
        %v147 = vld [vmem:[%s140 + $0x8] sm:$0xff]
        %v148 = vld [vmem:[%s140 + $0x10] sm:$0xff]
        %v149 = vld [vmem:[%s140 + $0x18] sm:$0xff]
        %v150 = vld [vmem:[%s140 + $0x20] sm:$0xff]
        %v151 = vld [vmem:[%s140 + $0x28] sm:$0xff]
        %v152 = vld [vmem:[%s140 + $0x30] sm:$0xff]
        %v153 = vld [vmem:[%s140 + $0x38] sm:$0xff]
        %v154 = vlaneseq
        %v155 = vshrl.u32 %v154, 7
        %v156 = vsub.s32 0, %v155
        %v157 = vrot.slane %v145, %v156
        %vm158 = vcmask 220160
        %v160 = vsel %vm158, %v146, 0
        %v163 = vsel %vm158, %v147, 0
        %v166 = vsel %vm158, %v148, 0
        %v169 = vsel %vm158, %v149, 0
        %v172 = vsel %vm158, %v150, 0
        %v175 = vsel %vm158, %v151, 0
        %v178 = vsel %vm158, %v152, 0
        %v181 = vsel %vm158, %v153, 0
        %vm183 = vcmask 1042432
        %v185 = vsel %vm183, %v144, 0
        %187 = vmatprep.subr.mxu0 0.0
        %188 = vmatpush1.msra.mxu0 %v141
        %189 = vmatprep.subr.mxu0 0.0
        %190 = vmatpush1.msra.mxu0 %v142
        %191 = vmatprep.subr.mxu0 0.0
        %192 = vmatpush1.msra.mxu0 %v143
        %193 = vmatprep.subr.mxu0 0.0
        %194 = vmatpush1.msra.mxu0 %v185
        %195 = vmatprep.subr.mxu0 0.0
        %196 = vmatpush1.msra.mxu0 0.0
        %197 = vmatprep.subr.mxu0 0.0
        %198 = vmatpush1.msra.mxu0 0.0
        %199 = vmatprep.subr.mxu0 0.0
        %200 = vmatpush1.msra.mxu0 0.0
        %201 = vmatprep.subr.mxu0 0.0
        %202 = vmatpush1.msra.mxu0 0.0
        %203 = vmatprep.subr.mxu0 0.0
        %204 = vmatpush1.msra.mxu0 0.0
        %205 = vmatprep.subr.mxu0 0.0
        %206 = vmatpush1.msra.mxu0 0.0
        %207 = vmatprep.subr.mxu0 0.0
        %208 = vmatpush1.msra.mxu0 0.0
        %209 = vmatprep.subr.mxu0 0.0
        %210 = vmatpush1.msra.mxu0 0.0
        %211 = vmatprep.subr.mxu0 0.0
        %212 = vmatpush1.msra.mxu0 0.0
        %213 = vmatprep.subr.mxu0 0.0
        %214 = vmatpush1.msra.mxu0 0.0
        %215 = vmatprep.subr.mxu0 0.0
        %216 = vmatpush1.msra.mxu0 0.0
        %217 = vmatprep.subr.mxu0 0.0
        %218 = vmatpush1.msra.mxu0 0.0
        %219 = vmatprep.subr.mxu0 0.0
        %220 = vmatpush1.msra.mxu0 0.0
        %221 = vmatprep.subr.mxu0 0.0
        %222 = vmatpush1.msra.mxu0 0.0
        %223 = vmatprep.subr.mxu0 0.0
        %224 = vmatpush1.msra.mxu0 0.0
        %225 = vmatprep.subr.mxu0 0.0
        %226 = vmatpush1.msra.mxu0 0.0
        %227 = vmatprep.subr.mxu0 0.0
        %228 = vmatpush1.msra.mxu0 0.0
        %229 = vmatprep.subr.mxu0 0.0
        %230 = vmatpush1.msra.mxu0 0.0
        %231 = vmatprep.subr.mxu0 0.0
        %232 = vmatpush1.msra.mxu0 0.0
        %233 = vmatprep.subr.mxu0 0.0
        %234 = vmatpush1.msra.mxu0 0.0
        %235 = vmatprep.subr.mxu0 0.0
        %236 = vmatpush1.msra.mxu0 0.0
        %237 = vmatprep.subr.mxu0 0.0
        %238 = vmatpush1.msra.mxu0 0.0
        %239 = vmatprep.subr.mxu0 0.0
        %240 = vmatpush1.msra.mxu0 0.0
        %241 = vmatprep.subr.mxu0 0.0
        %242 = vmatpush1.msra.mxu0 0.0
        %243 = vmatprep.subr.mxu0 0.0
        %244 = vmatpush1.msra.mxu0 0.0
        %245 = vmatprep.subr.mxu0 0.0
        %246 = vmatpush1.msra.mxu0 0.0
        %247 = vmatprep.subr.mxu0 0.0
        %248 = vmatpush1.msra.mxu0 0.0
        %249 = vmatprep.subr.mxu0 0.0
        %250 = vmatpush1.msra.mxu0 0.0
        %251 = vmatprep.mubr.f32.mxu0 0.0
        %252 = vmatmul.mubr.f32.gmra.mrb[0].mxu0 %v160
        %v253 = vpop.f32.mrb[0].mxu0
        %v254 = vadd.f32 %v157, %v253
        %v255 = vpop.f32.mrb[0].mxu0
        %256 = vmatprep.mubr.f32.mxu0 0.0
        %257 = vmatmul.mubr.f32.gmra.mrb[0].mxu0 %v163
        %v258 = vpop.f32.mrb[0].mxu0
        %v259 = vadd.f32 %v157, %v258
        %v260 = vpop.f32.mrb[0].mxu0
        %261 = vmatprep.mubr.f32.mxu0 0.0
        %262 = vmatmul.mubr.f32.gmra.mrb[0].mxu0 %v166
        %v263 = vpop.f32.mrb[0].mxu0
        %v264 = vadd.f32 %v157, %v263
        %v265 = vpop.f32.mrb[0].mxu0
        %266 = vmatprep.mubr.f32.mxu0 0.0
        %267 = vmatmul.mubr.f32.gmra.mrb[0].mxu0 %v169
        %v268 = vpop.f32.mrb[0].mxu0
        %v269 = vadd.f32 %v157, %v268
        %v270 = vpop.f32.mrb[0].mxu0
        %271 = vmatprep.mubr.f32.mxu0 0.0
        %272 = vmatmul.mubr.f32.gmra.mrb[0].mxu0 %v172
        %v273 = vpop.f32.mrb[0].mxu0
        %v274 = vadd.f32 %v157, %v273
        %v275 = vpop.f32.mrb[0].mxu0
        %276 = vmatprep.mubr.f32.mxu0 0.0
        %277 = vmatmul.mubr.f32.gmra.mrb[0].mxu0 %v175
        %v278 = vpop.f32.mrb[0].mxu0
        %v279 = vadd.f32 %v157, %v278
        %v280 = vpop.f32.mrb[0].mxu0
        %281 = vmatprep.mubr.f32.mxu0 0.0
        %282 = vmatmul.mubr.f32.gmra.mrb[0].mxu0 %v178
        %v283 = vpop.f32.mrb[0].mxu0
        %v284 = vadd.f32 %v157, %v283
        %v285 = vpop.f32.mrb[0].mxu0
        %286 = vmatprep.mubr.f32.mxu0 0.0
        %287 = vmatmul.mubr.f32.gmra.mrb[0].mxu0 %v181
        %v288 = vpop.f32.mrb[0].mxu0
        %v289 = vadd.f32 %v157, %v288
        %v290 = vpop.f32.mrb[0].mxu0
        %291 = vdwg.mxu0
        %v292 = vmax.f32 %v254, 0.0
        %v293 = vmax.f32 %v259, 0.0
        %v294 = vmax.f32 %v264, 0.0
        %v295 = vmax.f32 %v269, 0.0
        %v296 = vmax.f32 %v274, 0.0
        %v297 = vmax.f32 %v279, 0.0
        %v298 = vmax.f32 %v284, 0.0
        %v299 = vmax.f32 %v289, 0.0
        %v300 = vmin.f32 %v292, 6.0
        %v301 = vmin.f32 %v293, 6.0
        %v302 = vmin.f32 %v294, 6.0
        %v303 = vmin.f32 %v295, 6.0
        %v304 = vmin.f32 %v296, 6.0
        %v305 = vmin.f32 %v297, 6.0
        %v306 = vmin.f32 %v298, 6.0
        %v307 = vmin.f32 %v299, 6.0
        %v308 = vld [vmem:[%s1 + $0x28] sm:$0xff]
        %v309 = vld [vmem:[%s1 + $0x30] sm:$0x1]
        %v310 = vld [vmem:[%s1 + $0x38] sm:$0x1]
        %vm311 = vcmask 64512
        %312 = vst.msk [vmem:[#allocation2] sm:$0xff] %vm311, 0.0
        %vm313 = vcmask 58368
        %314 = vst.msk [vmem:[#allocation2 + $0x8] sm:$0x3] %vm313, 0.0
        %315 = vst.msk [vmem:[#allocation2 + $0x10] sm:$0xff] %vm311, 0.0
        %316 = vst.msk [vmem:[#allocation2 + $0x18] sm:$0x3] %vm313, 0.0
        %317 = vst.msk [vmem:[#allocation2 + $0x20] sm:$0xff] %vm311, 0.0
        %318 = vst.msk [vmem:[#allocation2 + $0x28] sm:$0x3] %vm313, 0.0
        %319 = vst.msk [vmem:[#allocation2 + $0x30] sm:$0xff] %vm311, 0.0
        %320 = vst.msk [vmem:[#allocation2 + $0x38] sm:$0x3] %vm313, 0.0
        %321 = vst.msk [vmem:[#allocation2 + $0x40] sm:$0xff] %vm311, 0.0
        %322 = vst.msk [vmem:[#allocation2 + $0x48] sm:$0x3] %vm313, 0.0
        %323 = vst.msk [vmem:[#allocation2 + $0x50] sm:$0xff] %vm311, 0.0
        %324 = vst.msk [vmem:[#allocation2 + $0x58] sm:$0x3] %vm313, 0.0
        %325 = vst.msk [vmem:[#allocation2 + $0x60] sm:$0xff] %vm311, 0.0
        %326 = vst.msk [vmem:[#allocation2 + $0x68] sm:$0x3] %vm313, 0.0
        %327 = vst.msk [vmem:[#allocation2 + $0x70] sm:$0xff] %vm311, 0.0
        %328 = vst.msk [vmem:[#allocation2 + $0x78] sm:$0x3] %vm313, 0.0
        %329 = vst.msk [vmem:[#allocation2 + $0x80] sm:$0xff] %vm311, 0.0
        %330 = vst.msk [vmem:[#allocation2 + $0x88] sm:$0x3] %vm313, 0.0
        %331 = vst.msk [vmem:[#allocation2 + $0x90] sm:$0xff] %vm311, 0.0
        %332 = vst.msk [vmem:[#allocation2 + $0x98] sm:$0x3] %vm313, 0.0
        %s333 = scalar_lea.vmem [#allocation2], 16
        %334 = vst.msk [vmem:[%s333 + $0x1] sm:$0xff] %vm311, %v300
        %335 = vst.msk [vmem:[%s333 + $0x11] sm:$0xff] %vm311, %v301
        %336 = vst.msk [vmem:[%s333 + $0x21] sm:$0xff] %vm311, %v302
        %337 = vst.msk [vmem:[%s333 + $0x31] sm:$0xff] %vm311, %v303
        %338 = vst.msk [vmem:[%s333 + $0x41] sm:$0xff] %vm311, %v304
        %339 = vst.msk [vmem:[%s333 + $0x51] sm:$0xff] %vm311, %v305
        %340 = vst.msk [vmem:[%s333 + $0x61] sm:$0xff] %vm311, %v306
        %341 = vst.msk [vmem:[%s333 + $0x71] sm:$0xff] %vm311, %v307
        %v342 = vld [vmem:[#allocation2] sm:$0xff]
        %v343 = vld [vmem:[#allocation2 + $0x10] sm:$0xff]
        %v344 = vld [vmem:[#allocation2 + $0x20] sm:$0xff]
        %v345 = vld [vmem:[#allocation2 + $0x30] sm:$0xff]
        %v346 = vld [vmem:[#allocation2 + $0x40] sm:$0xff]
        %v347 = vld [vmem:[#allocation2 + $0x50] sm:$0xff]
        %v348 = vld [vmem:[#allocation2 + $0x60] sm:$0xff]
        %v349 = vld [vmem:[#allocation2 + $0x70] sm:$0xff]
        %v350 = vlaneseq
        %v351 = vshrl.u32 %v350, 7
        %v352 = vsub.s32 0, %v351
        %v353 = vrot.slane %v308, %v352
        %v354 = vmul.f32 %v342, %v353
        %v355 = vmul.f32 %v343, %v353
        %v356 = vmul.f32 %v344, %v353
        %v357 = vmul.f32 %v345, %v353
        %v358 = vmul.f32 %v346, %v353
        %v359 = vmul.f32 %v347, %v353
        %v360 = vmul.f32 %v348, %v353
        %v361 = vmul.f32 %v349, %v353
        %v362 = vadd.f32 %v354, 0.0
        %v363 = vadd.f32 %v355, 0.0
        %v364 = vadd.f32 %v356, 0.0
        %v365 = vadd.f32 %v357, 0.0
        %v366 = vadd.f32 %v358, 0.0
        %v367 = vadd.f32 %v359, 0.0
        %v368 = vadd.f32 %v360, 0.0
        %v369 = vadd.f32 %v361, 0.0
        %v370 = vld [vmem:[#allocation2 + $0x1] sm:$0xff]
        %v371 = vld [vmem:[#allocation2 + $0x11] sm:$0xff]
        %v372 = vld [vmem:[#allocation2 + $0x21] sm:$0xff]
        %v373 = vld [vmem:[#allocation2 + $0x31] sm:$0xff]
        %v374 = vld [vmem:[#allocation2 + $0x41] sm:$0xff]
        %v375 = vld [vmem:[#allocation2 + $0x51] sm:$0xff]
        %v376 = vld [vmem:[#allocation2 + $0x61] sm:$0xff]
        %v377 = vld [vmem:[#allocation2 + $0x71] sm:$0xff]
        %v378 = vlaneseq
        %v379 = vshrl.u32 %v378, 7
        %v380 = vsub.s32 1, %v379
        %v381 = vrot.slane %v308, %v380
        %v382 = vmul.f32 %v370, %v381
        %v383 = vmul.f32 %v371, %v381
        %v384 = vmul.f32 %v372, %v381
        %v385 = vmul.f32 %v373, %v381
        %v386 = vmul.f32 %v374, %v381
        %v387 = vmul.f32 %v375, %v381
        %v388 = vmul.f32 %v376, %v381
        %v389 = vmul.f32 %v377, %v381
        %v390 = vadd.f32 %v362, %v382
        %v391 = vadd.f32 %v363, %v383
        %v392 = vadd.f32 %v364, %v384
        %v393 = vadd.f32 %v365, %v385
        %v394 = vadd.f32 %v366, %v386
        %v395 = vadd.f32 %v367, %v387
        %v396 = vadd.f32 %v368, %v388
        %v397 = vadd.f32 %v369, %v389
        %v398 = vld [vmem:[#allocation2 + $0x2] sm:$0xff]
        %v399 = vld [vmem:[#allocation2 + $0x12] sm:$0xff]
        %v400 = vld [vmem:[#allocation2 + $0x22] sm:$0xff]
        %v401 = vld [vmem:[#allocation2 + $0x32] sm:$0xff]
        %v402 = vld [vmem:[#allocation2 + $0x42] sm:$0xff]
        %v403 = vld [vmem:[#allocation2 + $0x52] sm:$0xff]
        %v404 = vld [vmem:[#allocation2 + $0x62] sm:$0xff]
        %v405 = vld [vmem:[#allocation2 + $0x72] sm:$0xff]
        %v406 = vlaneseq
        %v407 = vshrl.u32 %v406, 7
        %v408 = vsub.s32 2, %v407
        %v409 = vrot.slane %v308, %v408
        %v410 = vmul.f32 %v398, %v409
        %v411 = vmul.f32 %v399, %v409
        %v412 = vmul.f32 %v400, %v409
        %v413 = vmul.f32 %v401, %v409
        %v414 = vmul.f32 %v402, %v409
        %v415 = vmul.f32 %v403, %v409
        %v416 = vmul.f32 %v404, %v409
        %v417 = vmul.f32 %v405, %v409
        %v418 = vadd.f32 %v390, %v410
        %v419 = vadd.f32 %v391, %v411
        %v420 = vadd.f32 %v392, %v412
        %v421 = vadd.f32 %v393, %v413
        %v422 = vadd.f32 %v394, %v414
        %v423 = vadd.f32 %v395, %v415
        %v424 = vadd.f32 %v396, %v416
        %v425 = vadd.f32 %v397, %v417
        %v426 = vld [vmem:[%s333] sm:$0xff]
        %v427 = vld [vmem:[%s333 + $0x10] sm:$0xff]
        %v428 = vld [vmem:[%s333 + $0x20] sm:$0xff]
        %v429 = vld [vmem:[%s333 + $0x30] sm:$0xff]
        %v430 = vld [vmem:[%s333 + $0x40] sm:$0xff]
        %v431 = vld [vmem:[%s333 + $0x50] sm:$0xff]
        %v432 = vld [vmem:[%s333 + $0x60] sm:$0xff]
        %v433 = vld [vmem:[%s333 + $0x70] sm:$0xff]
        %v434 = vlaneseq
        %v435 = vshrl.u32 %v434, 7
        %v436 = vsub.s32 3, %v435
        %v437 = vrot.slane %v308, %v436
        %v438 = vmul.f32 %v426, %v437
        %v439 = vmul.f32 %v427, %v437
        %v440 = vmul.f32 %v428, %v437
        %v441 = vmul.f32 %v429, %v437
        %v442 = vmul.f32 %v430, %v437
        %v443 = vmul.f32 %v431, %v437
        %v444 = vmul.f32 %v432, %v437
        %v445 = vmul.f32 %v433, %v437
        %v446 = vadd.f32 %v418, %v438
        %v447 = vadd.f32 %v419, %v439
        %v448 = vadd.f32 %v420, %v440
        %v449 = vadd.f32 %v421, %v441
        %v450 = vadd.f32 %v422, %v442
        %v451 = vadd.f32 %v423, %v443
        %v452 = vadd.f32 %v424, %v444
        %v453 = vadd.f32 %v425, %v445
        %v454 = vld [vmem:[%s333 + $0x1] sm:$0xff]
        %v455 = vld [vmem:[%s333 + $0x11] sm:$0xff]
        %v456 = vld [vmem:[%s333 + $0x21] sm:$0xff]
        %v457 = vld [vmem:[%s333 + $0x31] sm:$0xff]
        %v458 = vld [vmem:[%s333 + $0x41] sm:$0xff]
        %v459 = vld [vmem:[%s333 + $0x51] sm:$0xff]
        %v460 = vld [vmem:[%s333 + $0x61] sm:$0xff]
        %v461 = vld [vmem:[%s333 + $0x71] sm:$0xff]
        %v462 = vlaneseq
        %v463 = vshrl.u32 %v462, 7
        %v464 = vsub.s32 4, %v463
        %v465 = vrot.slane %v308, %v464
        %v466 = vmul.f32 %v454, %v465
        %v467 = vmul.f32 %v455, %v465
        %v468 = vmul.f32 %v456, %v465
        %v469 = vmul.f32 %v457, %v465
        %v470 = vmul.f32 %v458, %v465
        %v471 = vmul.f32 %v459, %v465
        %v472 = vmul.f32 %v460, %v465
        %v473 = vmul.f32 %v461, %v465
        %v474 = vadd.f32 %v446, %v466
        %v475 = vadd.f32 %v447, %v467
        %v476 = vadd.f32 %v448, %v468
        %v477 = vadd.f32 %v449, %v469
        %v478 = vadd.f32 %v450, %v470
        %v479 = vadd.f32 %v451, %v471
        %v480 = vadd.f32 %v452, %v472
        %v481 = vadd.f32 %v453, %v473
        %v482 = vld [vmem:[%s333 + $0x2] sm:$0xff]
        %v483 = vld [vmem:[%s333 + $0x12] sm:$0xff]
        %v484 = vld [vmem:[%s333 + $0x22] sm:$0xff]
        %v485 = vld [vmem:[%s333 + $0x32] sm:$0xff]
        %v486 = vld [vmem:[%s333 + $0x42] sm:$0xff]
        %v487 = vld [vmem:[%s333 + $0x52] sm:$0xff]
        %v488 = vld [vmem:[%s333 + $0x62] sm:$0xff]
        %v489 = vld [vmem:[%s333 + $0x72] sm:$0xff]
        %v490 = vlaneseq
        %v491 = vshrl.u32 %v490, 7
        %v492 = vsub.s32 5, %v491
        %v493 = vrot.slane %v308, %v492
        %v494 = vmul.f32 %v482, %v493
        %v495 = vmul.f32 %v483, %v493
        %v496 = vmul.f32 %v484, %v493
        %v497 = vmul.f32 %v485, %v493
        %v498 = vmul.f32 %v486, %v493
        %v499 = vmul.f32 %v487, %v493
        %v500 = vmul.f32 %v488, %v493
        %v501 = vmul.f32 %v489, %v493
        %v502 = vadd.f32 %v474, %v494
        %v503 = vadd.f32 %v475, %v495
        %v504 = vadd.f32 %v476, %v496
        %v505 = vadd.f32 %v477, %v497
        %v506 = vadd.f32 %v478, %v498
        %v507 = vadd.f32 %v479, %v499
        %v508 = vadd.f32 %v480, %v500
        %v509 = vadd.f32 %v481, %v501
        %s510 = scalar_lea.vmem [#allocation2], 32
        %v511 = vld [vmem:[%s510] sm:$0xff]
        %v512 = vld [vmem:[%s510 + $0x10] sm:$0xff]
        %v513 = vld [vmem:[%s510 + $0x20] sm:$0xff]
        %v514 = vld [vmem:[%s510 + $0x30] sm:$0xff]
        %v515 = vld [vmem:[%s510 + $0x40] sm:$0xff]
        %v516 = vld [vmem:[%s510 + $0x50] sm:$0xff]
        %v517 = vld [vmem:[%s510 + $0x60] sm:$0xff]
        %v518 = vld [vmem:[%s510 + $0x70] sm:$0xff]
        %v519 = vlaneseq
        %v520 = vshrl.u32 %v519, 7
        %v521 = vsub.s32 6, %v520
        %v522 = vrot.slane %v308, %v521
        %v523 = vmul.f32 %v511, %v522
        %v524 = vmul.f32 %v512, %v522
        %v525 = vmul.f32 %v513, %v522
        %v526 = vmul.f32 %v514, %v522
        %v527 = vmul.f32 %v515, %v522
        %v528 = vmul.f32 %v516, %v522
        %v529 = vmul.f32 %v517, %v522
        %v530 = vmul.f32 %v518, %v522
        %v531 = vadd.f32 %v502, %v523
        %v532 = vadd.f32 %v503, %v524
        %v533 = vadd.f32 %v504, %v525
        %v534 = vadd.f32 %v505, %v526
        %v535 = vadd.f32 %v506, %v527
        %v536 = vadd.f32 %v507, %v528
        %v537 = vadd.f32 %v508, %v529
        %v538 = vadd.f32 %v509, %v530
        %v539 = vld [vmem:[%s510 + $0x1] sm:$0xff]
        %v540 = vld [vmem:[%s510 + $0x11] sm:$0xff]
        %v541 = vld [vmem:[%s510 + $0x21] sm:$0xff]
        %v542 = vld [vmem:[%s510 + $0x31] sm:$0xff]
        %v543 = vld [vmem:[%s510 + $0x41] sm:$0xff]
        %v544 = vld [vmem:[%s510 + $0x51] sm:$0xff]
        %v545 = vld [vmem:[%s510 + $0x61] sm:$0xff]
        %v546 = vld [vmem:[%s510 + $0x71] sm:$0xff]
        %v547 = vlaneseq
        %v548 = vshrl.u32 %v547, 7
        %v549 = vsub.s32 7, %v548
        %v550 = vrot.slane %v308, %v549
        %v551 = vmul.f32 %v539, %v550
        %v552 = vmul.f32 %v540, %v550
        %v553 = vmul.f32 %v541, %v550
        %v554 = vmul.f32 %v542, %v550
        %v555 = vmul.f32 %v543, %v550
        %v556 = vmul.f32 %v544, %v550
        %v557 = vmul.f32 %v545, %v550
        %v558 = vmul.f32 %v546, %v550
        %v559 = vadd.f32 %v531, %v551
        %v560 = vadd.f32 %v532, %v552
        %v561 = vadd.f32 %v533, %v553
        %v562 = vadd.f32 %v534, %v554
        %v563 = vadd.f32 %v535, %v555
        %v564 = vadd.f32 %v536, %v556
        %v565 = vadd.f32 %v537, %v557
        %v566 = vadd.f32 %v538, %v558
        %v567 = vld [vmem:[%s510 + $0x2] sm:$0xff]
        %v568 = vld [vmem:[%s510 + $0x12] sm:$0xff]
        %v569 = vld [vmem:[%s510 + $0x22] sm:$0xff]
        %v570 = vld [vmem:[%s510 + $0x32] sm:$0xff]
        %v571 = vld [vmem:[%s510 + $0x42] sm:$0xff]
        %v572 = vld [vmem:[%s510 + $0x52] sm:$0xff]
        %v573 = vld [vmem:[%s510 + $0x62] sm:$0xff]
        %v574 = vld [vmem:[%s510 + $0x72] sm:$0xff]
        %v575 = vlaneseq
        %v576 = vshrl.u32 %v575, 7
        %v577 = vsub.s32 0, %v576
        %v578 = vrot.slane %v309, %v577
        %v579 = vmul.f32 %v567, %v578
        %v580 = vmul.f32 %v568, %v578
        %v581 = vmul.f32 %v569, %v578
        %v582 = vmul.f32 %v570, %v578
        %v583 = vmul.f32 %v571, %v578
        %v584 = vmul.f32 %v572, %v578
        %v585 = vmul.f32 %v573, %v578
        %v586 = vmul.f32 %v574, %v578
        %v587 = vadd.f32 %v559, %v579
        %v588 = vadd.f32 %v560, %v580
        %v589 = vadd.f32 %v561, %v581
        %v590 = vadd.f32 %v562, %v582
        %v591 = vadd.f32 %v563, %v583
        %v592 = vadd.f32 %v564, %v584
        %v593 = vadd.f32 %v565, %v585
        %v594 = vadd.f32 %v566, %v586
        %v595 = vlaneseq
        %v596 = vshrl.u32 %v595, 7
        %v597 = vsub.s32 0, %v596
        %v598 = vrot.slane %v310, %v597
        %v599 = vadd.f32 %v587, %v598
        %v600 = vadd.f32 %v588, %v598
        %v601 = vadd.f32 %v589, %v598
        %v602 = vadd.f32 %v590, %v598
        %v603 = vadd.f32 %v591, %v598
        %v604 = vadd.f32 %v592, %v598
        %v605 = vadd.f32 %v593, %v598
        %v606 = vadd.f32 %v594, %v598
        %v607 = vmax.f32 %v599, 0.0
        %v608 = vmax.f32 %v600, 0.0
        %v609 = vmax.f32 %v601, 0.0
        %v610 = vmax.f32 %v602, 0.0
        %v611 = vmax.f32 %v603, 0.0
        %v612 = vmax.f32 %v604, 0.0
        %v613 = vmax.f32 %v605, 0.0
        %v614 = vmax.f32 %v606, 0.0
        %v615 = vmin.f32 %v607, 6.0
        %v616 = vmin.f32 %v608, 6.0
        %v617 = vmin.f32 %v609, 6.0
        %v618 = vmin.f32 %v610, 6.0
        %v619 = vmin.f32 %v611, 6.0
        %v620 = vmin.f32 %v612, 6.0
        %v621 = vmin.f32 %v613, 6.0
        %v622 = vmin.f32 %v614, 6.0
        %v623 = vld [vmem:[%s1 + $0x40] sm:$0xff]
        %v624 = vld [vmem:[%s1 + $0x48] sm:$0x1]
        %v625 = vlaneseq
        %v626 = vshrl.u32 %v625, 7
        %v627 = vsub.s32 0, %v626
        %v628 = vrot.slane %v624, %v627
        %v630 = vsel %vm311, %v615, 0
        %v633 = vsel %vm311, %v616, 0
        %v636 = vsel %vm311, %v617, 0
        %v639 = vsel %vm311, %v618, 0
        %v642 = vsel %vm311, %v619, 0
        %v645 = vsel %vm311, %v620, 0
        %v648 = vsel %vm311, %v621, 0
        %v651 = vsel %vm311, %v622, 0
        %653 = vmatprep.subr.mxu0 0.0
        %654 = vmatpush1.msra.mxu0 %v623
        %655 = vmatprep.subr.mxu0 0.0
        %656 = vmatpush1.msra.mxu0 0.0
        %657 = vmatprep.subr.mxu0 0.0
        %658 = vmatpush1.msra.mxu0 0.0
        %659 = vmatprep.subr.mxu0 0.0
        %660 = vmatpush1.msra.mxu0 0.0
        %661 = vmatprep.subr.mxu0 0.0
        %662 = vmatpush1.msra.mxu0 0.0
        %663 = vmatprep.subr.mxu0 0.0
        %664 = vmatpush1.msra.mxu0 0.0
        %665 = vmatprep.subr.mxu0 0.0
        %666 = vmatpush1.msra.mxu0 0.0
        %667 = vmatprep.subr.mxu0 0.0
        %668 = vmatpush1.msra.mxu0 0.0
        %669 = vmatprep.subr.mxu0 0.0
        %670 = vmatpush1.msra.mxu0 0.0
        %671 = vmatprep.subr.mxu0 0.0
        %672 = vmatpush1.msra.mxu0 0.0
        %673 = vmatprep.subr.mxu0 0.0
        %674 = vmatpush1.msra.mxu0 0.0
        %675 = vmatprep.subr.mxu0 0.0
        %676 = vmatpush1.msra.mxu0 0.0
        %677 = vmatprep.subr.mxu0 0.0
        %678 = vmatpush1.msra.mxu0 0.0
        %679 = vmatprep.subr.mxu0 0.0
        %680 = vmatpush1.msra.mxu0 0.0
        %681 = vmatprep.subr.mxu0 0.0
        %682 = vmatpush1.msra.mxu0 0.0
        %683 = vmatprep.subr.mxu0 0.0
        %684 = vmatpush1.msra.mxu0 0.0
        %685 = vmatprep.subr.mxu0 0.0
        %686 = vmatpush1.msra.mxu0 0.0
        %687 = vmatprep.subr.mxu0 0.0
        %688 = vmatpush1.msra.mxu0 0.0
        %689 = vmatprep.subr.mxu0 0.0
        %690 = vmatpush1.msra.mxu0 0.0
        %691 = vmatprep.subr.mxu0 0.0
        %692 = vmatpush1.msra.mxu0 0.0
        %693 = vmatprep.subr.mxu0 0.0
        %694 = vmatpush1.msra.mxu0 0.0
        %695 = vmatprep.subr.mxu0 0.0
        %696 = vmatpush1.msra.mxu0 0.0
        %697 = vmatprep.subr.mxu0 0.0
        %698 = vmatpush1.msra.mxu0 0.0
        %699 = vmatprep.subr.mxu0 0.0
        %700 = vmatpush1.msra.mxu0 0.0
        %701 = vmatprep.subr.mxu0 0.0
        %702 = vmatpush1.msra.mxu0 0.0
        %703 = vmatprep.subr.mxu0 0.0
        %704 = vmatpush1.msra.mxu0 0.0
        %705 = vmatprep.subr.mxu0 0.0
        %706 = vmatpush1.msra.mxu0 0.0
        %707 = vmatprep.subr.mxu0 0.0
        %708 = vmatpush1.msra.mxu0 0.0
        %709 = vmatprep.subr.mxu0 0.0
        %710 = vmatpush1.msra.mxu0 0.0
        %711 = vmatprep.subr.mxu0 0.0
        %712 = vmatpush1.msra.mxu0 0.0
        %713 = vmatprep.subr.mxu0 0.0
        %714 = vmatpush1.msra.mxu0 0.0
        %715 = vmatprep.subr.mxu0 0.0
        %716 = vmatpush1.msra.mxu0 0.0
        %717 = vmatprep.mubr.f32.mxu0 0.0
        %718 = vmatmul.mubr.f32.gmra.mrb[0].mxu0 %v630
        %v719 = vpop.f32.mrb[0].mxu0
        %v720 = vadd.f32 %v628, %v719
        %v721 = vpop.f32.mrb[0].mxu0
        %722 = vmatprep.mubr.f32.mxu0 0.0
        %723 = vmatmul.mubr.f32.gmra.mrb[0].mxu0 %v633
        %v724 = vpop.f32.mrb[0].mxu0
        %v725 = vadd.f32 %v628, %v724
        %v726 = vpop.f32.mrb[0].mxu0
        %727 = vmatprep.mubr.f32.mxu0 0.0
        %728 = vmatmul.mubr.f32.gmra.mrb[0].mxu0 %v636
        %v729 = vpop.f32.mrb[0].mxu0
        %v730 = vadd.f32 %v628, %v729
        %v731 = vpop.f32.mrb[0].mxu0
        %732 = vmatprep.mubr.f32.mxu0 0.0
        %733 = vmatmul.mubr.f32.gmra.mrb[0].mxu0 %v639
        %v734 = vpop.f32.mrb[0].mxu0
        %v735 = vadd.f32 %v628, %v734
        %v736 = vpop.f32.mrb[0].mxu0
        %737 = vmatprep.mubr.f32.mxu0 0.0
        %738 = vmatmul.mubr.f32.gmra.mrb[0].mxu0 %v642
        %v739 = vpop.f32.mrb[0].mxu0
        %v740 = vadd.f32 %v628, %v739
        %v741 = vpop.f32.mrb[0].mxu0
        %742 = vmatprep.mubr.f32.mxu0 0.0
        %743 = vmatmul.mubr.f32.gmra.mrb[0].mxu0 %v645
        %v744 = vpop.f32.mrb[0].mxu0
        %v745 = vadd.f32 %v628, %v744
        %v746 = vpop.f32.mrb[0].mxu0
        %747 = vmatprep.mubr.f32.mxu0 0.0
        %748 = vmatmul.mubr.f32.gmra.mrb[0].mxu0 %v648
        %v749 = vpop.f32.mrb[0].mxu0
        %v750 = vadd.f32 %v628, %v749
        %v751 = vpop.f32.mrb[0].mxu0
        %752 = vmatprep.mubr.f32.mxu0 0.0
        %753 = vmatmul.mubr.f32.gmra.mrb[0].mxu0 %v651
        %v754 = vpop.f32.mrb[0].mxu0
        %v755 = vadd.f32 %v628, %v754
        %v756 = vpop.f32.mrb[0].mxu0
        %757 = vdwg.mxu0
        %v758 = vadd.f32 %v720, %v300
        %v759 = vadd.f32 %v725, %v301
        %v760 = vadd.f32 %v730, %v302
        %v761 = vadd.f32 %v735, %v303
        %v762 = vadd.f32 %v740, %v304
        %v763 = vadd.f32 %v745, %v305
        %v764 = vadd.f32 %v750, %v306
        %v765 = vadd.f32 %v755, %v307
        %v766 = vld [vmem:[%s1 + $0x50] sm:$0xff]
        %v767 = vld [vmem:[%s1 + $0x58] sm:$0x1]
        %v768 = vlaneseq
        %v769 = vshrl.u32 %v768, 7
        %v770 = vsub.s32 0, %v769
        %v771 = vrot.slane %v767, %v770
        %v773 = vsel %vm311, %v758, 0
        %v776 = vsel %vm311, %v759, 0
        %v779 = vsel %vm311, %v760, 0
        %v782 = vsel %vm311, %v761, 0
        %v785 = vsel %vm311, %v762, 0
        %v788 = vsel %vm311, %v763, 0
        %v791 = vsel %vm311, %v764, 0
        %v794 = vsel %vm311, %v765, 0
        %796 = vmatprep.subr.mxu0 0.0
        %797 = vmatpush1.msra.mxu0 %v766
        %798 = vmatprep.subr.mxu0 0.0
        %799 = vmatpush1.msra.mxu0 0.0
        %800 = vmatprep.subr.mxu0 0.0
        %801 = vmatpush1.msra.mxu0 0.0
        %802 = vmatprep.subr.mxu0 0.0
        %803 = vmatpush1.msra.mxu0 0.0
        %804 = vmatprep.subr.mxu0 0.0
        %805 = vmatpush1.msra.mxu0 0.0
        %806 = vmatprep.subr.mxu0 0.0
        %807 = vmatpush1.msra.mxu0 0.0
        %808 = vmatprep.subr.mxu0 0.0
        %809 = vmatpush1.msra.mxu0 0.0
        %810 = vmatprep.subr.mxu0 0.0
        %811 = vmatpush1.msra.mxu0 0.0
        %812 = vmatprep.subr.mxu0 0.0
        %813 = vmatpush1.msra.mxu0 0.0
        %814 = vmatprep.subr.mxu0 0.0
        %815 = vmatpush1.msra.mxu0 0.0
        %816 = vmatprep.subr.mxu0 0.0
        %817 = vmatpush1.msra.mxu0 0.0
        %818 = vmatprep.subr.mxu0 0.0
        %819 = vmatpush1.msra.mxu0 0.0
        %820 = vmatprep.subr.mxu0 0.0
        %821 = vmatpush1.msra.mxu0 0.0
        %822 = vmatprep.subr.mxu0 0.0
        %823 = vmatpush1.msra.mxu0 0.0
        %824 = vmatprep.subr.mxu0 0.0
        %825 = vmatpush1.msra.mxu0 0.0
        %826 = vmatprep.subr.mxu0 0.0
        %827 = vmatpush1.msra.mxu0 0.0
        %828 = vmatprep.subr.mxu0 0.0
        %829 = vmatpush1.msra.mxu0 0.0
        %830 = vmatprep.subr.mxu0 0.0
        %831 = vmatpush1.msra.mxu0 0.0
        %832 = vmatprep.subr.mxu0 0.0
        %833 = vmatpush1.msra.mxu0 0.0
        %834 = vmatprep.subr.mxu0 0.0
        %835 = vmatpush1.msra.mxu0 0.0
        %836 = vmatprep.subr.mxu0 0.0
        %837 = vmatpush1.msra.mxu0 0.0
        %838 = vmatprep.subr.mxu0 0.0
        %839 = vmatpush1.msra.mxu0 0.0
        %840 = vmatprep.subr.mxu0 0.0
        %841 = vmatpush1.msra.mxu0 0.0
        %842 = vmatprep.subr.mxu0 0.0
        %843 = vmatpush1.msra.mxu0 0.0
        %844 = vmatprep.subr.mxu0 0.0
        %845 = vmatpush1.msra.mxu0 0.0
        %846 = vmatprep.subr.mxu0 0.0
        %847 = vmatpush1.msra.mxu0 0.0
        %848 = vmatprep.subr.mxu0 0.0
        %849 = vmatpush1.msra.mxu0 0.0
        %850 = vmatprep.subr.mxu0 0.0
        %851 = vmatpush1.msra.mxu0 0.0
        %852 = vmatprep.subr.mxu0 0.0
        %853 = vmatpush1.msra.mxu0 0.0
        %854 = vmatprep.subr.mxu0 0.0
        %855 = vmatpush1.msra.mxu0 0.0
        %856 = vmatprep.subr.mxu0 0.0
        %857 = vmatpush1.msra.mxu0 0.0
        %858 = vmatprep.subr.mxu0 0.0
        %859 = vmatpush1.msra.mxu0 0.0
        %860 = vmatprep.mubr.f32.mxu0 0.0
        %861 = vmatmul.mubr.f32.gmra.mrb[0].mxu0 %v773
        %v862 = vpop.f32.mrb[0].mxu0
        %v863 = vadd.f32 %v771, %v862
        %v864 = vpop.f32.mrb[0].mxu0
        %865 = vmatprep.mubr.f32.mxu0 0.0
        %866 = vmatmul.mubr.f32.gmra.mrb[0].mxu0 %v776
        %v867 = vpop.f32.mrb[0].mxu0
        %v868 = vadd.f32 %v771, %v867
        %v869 = vpop.f32.mrb[0].mxu0
        %870 = vmatprep.mubr.f32.mxu0 0.0
        %871 = vmatmul.mubr.f32.gmra.mrb[0].mxu0 %v779
        %v872 = vpop.f32.mrb[0].mxu0
        %v873 = vadd.f32 %v771, %v872
        %v874 = vpop.f32.mrb[0].mxu0
        %875 = vmatprep.mubr.f32.mxu0 0.0
        %876 = vmatmul.mubr.f32.gmra.mrb[0].mxu0 %v782
        %v877 = vpop.f32.mrb[0].mxu0
        %v878 = vadd.f32 %v771, %v877
        %v879 = vpop.f32.mrb[0].mxu0
        %880 = vmatprep.mubr.f32.mxu0 0.0
        %881 = vmatmul.mubr.f32.gmra.mrb[0].mxu0 %v785
        %v882 = vpop.f32.mrb[0].mxu0
        %v883 = vadd.f32 %v771, %v882
        %v884 = vpop.f32.mrb[0].mxu0
        %885 = vmatprep.mubr.f32.mxu0 0.0
        %886 = vmatmul.mubr.f32.gmra.mrb[0].mxu0 %v788
        %v887 = vpop.f32.mrb[0].mxu0
        %v888 = vadd.f32 %v771, %v887
        %v889 = vpop.f32.mrb[0].mxu0
        %890 = vmatprep.mubr.f32.mxu0 0.0
        %891 = vmatmul.mubr.f32.gmra.mrb[0].mxu0 %v791
        %v892 = vpop.f32.mrb[0].mxu0
        %v893 = vadd.f32 %v771, %v892
        %v894 = vpop.f32.mrb[0].mxu0
        %895 = vmatprep.mubr.f32.mxu0 0.0
        %896 = vmatmul.mubr.f32.gmra.mrb[0].mxu0 %v794
        %v897 = vpop.f32.mrb[0].mxu0
        %v898 = vadd.f32 %v771, %v897
        %v899 = vpop.f32.mrb[0].mxu0
        %900 = vdwg.mxu0
        %v901 = vmax.f32 %v863, 0.0
        %v902 = vmax.f32 %v868, 0.0
        %v903 = vmax.f32 %v873, 0.0
        %v904 = vmax.f32 %v878, 0.0
        %v905 = vmax.f32 %v883, 0.0
        %v906 = vmax.f32 %v888, 0.0
        %v907 = vmax.f32 %v893, 0.0
        %v908 = vmax.f32 %v898, 0.0
        %v909 = vmin.f32 %v901, 6.0
        %v910 = vmin.f32 %v902, 6.0
        %v911 = vmin.f32 %v903, 6.0
        %v912 = vmin.f32 %v904, 6.0
        %v913 = vmin.f32 %v905, 6.0
        %v914 = vmin.f32 %v906, 6.0
        %v915 = vmin.f32 %v907, 6.0
        %v916 = vmin.f32 %v908, 6.0
        %v917 = vld [vmem:[%s1 + $0x60] sm:$0xff]
        %v918 = vld [vmem:[%s1 + $0x68] sm:$0x1]
        %v919 = vld [vmem:[%s1 + $0x70] sm:$0x1]
        %vm920 = vcmask 392192
        %921 = vst.msk [vmem:[#allocation2] sm:$0xff] %vm920, 0.0
        %vm922 = vcmask 386048
        %923 = vst.msk [vmem:[#allocation2 + $0x8] sm:$0x3] %vm922, 0.0
        %924 = vst.msk [vmem:[#allocation2 + $0x10] sm:$0xff] %vm920, 0.0
        %925 = vst.msk [vmem:[#allocation2 + $0x18] sm:$0x3] %vm922, 0.0
        %926 = vst.msk [vmem:[#allocation2 + $0x20] sm:$0xff] %vm920, 0.0
        %927 = vst.msk [vmem:[#allocation2 + $0x28] sm:$0x3] %vm922, 0.0
        %928 = vst.msk [vmem:[#allocation2 + $0x30] sm:$0xff] %vm920, 0.0
        %929 = vst.msk [vmem:[#allocation2 + $0x38] sm:$0x3] %vm922, 0.0
        %930 = vst.msk [vmem:[#allocation2 + $0x40] sm:$0xff] %vm920, 0.0
        %931 = vst.msk [vmem:[#allocation2 + $0x48] sm:$0x3] %vm922, 0.0
        %932 = vst.msk [vmem:[#allocation2 + $0x50] sm:$0xff] %vm920, 0.0
        %933 = vst.msk [vmem:[#allocation2 + $0x58] sm:$0x3] %vm922, 0.0
        %934 = vst.msk [vmem:[#allocation2 + $0x60] sm:$0xff] %vm920, 0.0
        %935 = vst.msk [vmem:[#allocation2 + $0x68] sm:$0x3] %vm922, 0.0
        %936 = vst.msk [vmem:[#allocation2 + $0x70] sm:$0xff] %vm920, 0.0
        %937 = vst.msk [vmem:[#allocation2 + $0x78] sm:$0x3] %vm922, 0.0
        %938 = vst.msk [vmem:[#allocation2 + $0x80] sm:$0xff] %vm920, 0.0
        %939 = vst.msk [vmem:[#allocation2 + $0x88] sm:$0x3] %vm922, 0.0
        %940 = vst.msk [vmem:[#allocation2 + $0x90] sm:$0xff] %vm920, 0.0
        %941 = vst.msk [vmem:[#allocation2 + $0x98] sm:$0x3] %vm922, 0.0
        %942 = vst.msk [vmem:[%s333 + $0x1] sm:$0xff] %vm920, %v909
        %943 = vst.msk [vmem:[%s333 + $0x11] sm:$0xff] %vm920, %v910
        %944 = vst.msk [vmem:[%s333 + $0x21] sm:$0xff] %vm920, %v911
        %945 = vst.msk [vmem:[%s333 + $0x31] sm:$0xff] %vm920, %v912
        %946 = vst.msk [vmem:[%s333 + $0x41] sm:$0xff] %vm920, %v913
        %947 = vst.msk [vmem:[%s333 + $0x51] sm:$0xff] %vm920, %v914
        %948 = vst.msk [vmem:[%s333 + $0x61] sm:$0xff] %vm920, %v915
        %949 = vst.msk [vmem:[%s333 + $0x71] sm:$0xff] %vm920, %v916
        %v950 = vld [vmem:[#allocation2] ss:$2 sm:$0xf]
        %s951 = scalar_lea.vmem [#allocation2], 32
        %v952 = vld [vmem:[%s951] ss:$2 sm:$0xf]
        %s953 = scalar_lea.vmem [#allocation2], 64
        %v954 = vld [vmem:[%s953] ss:$2 sm:$0xf]
        %s955 = scalar_lea.vmem [#allocation2], 96
        %v956 = vld [vmem:[%s955] ss:$2 sm:$0xf]
        %v957 = vlaneseq
        %v958 = vshrl.u32 %v957, 7
        %v959 = vsub.s32 0, %v958
        %v960 = vrot.slane %v917, %v959
        %v961 = vmul.f32 %v950, %v960
        %v962 = vmul.f32 %v952, %v960
        %v963 = vmul.f32 %v954, %v960
        %v964 = vmul.f32 %v956, %v960
        %v965 = vadd.f32 %v961, 0.0
        %v966 = vadd.f32 %v962, 0.0
        %v967 = vadd.f32 %v963, 0.0
        %v968 = vadd.f32 %v964, 0.0
        %s969 = scalar_lea.vmem [#allocation2], 1
        %v970 = vld [vmem:[%s969] ss:$2 sm:$0xf]
        %s971 = scalar_lea.vmem [#allocation2], 33
        %v972 = vld [vmem:[%s971] ss:$2 sm:$0xf]
        %s973 = scalar_lea.vmem [#allocation2], 65
        %v974 = vld [vmem:[%s973] ss:$2 sm:$0xf]
        %s975 = scalar_lea.vmem [#allocation2], 97
        %v976 = vld [vmem:[%s975] ss:$2 sm:$0xf]
        %v977 = vlaneseq
        %v978 = vshrl.u32 %v977, 7
        %v979 = vsub.s32 1, %v978
        %v980 = vrot.slane %v917, %v979
        %v981 = vmul.f32 %v970, %v980
        %v982 = vmul.f32 %v972, %v980
        %v983 = vmul.f32 %v974, %v980
        %v984 = vmul.f32 %v976, %v980
        %v985 = vadd.f32 %v965, %v981
        %v986 = vadd.f32 %v966, %v982
        %v987 = vadd.f32 %v967, %v983
        %v988 = vadd.f32 %v968, %v984
        %s989 = scalar_lea.vmem [#allocation2], 2
        %v990 = vld [vmem:[%s989] ss:$2 sm:$0xf]
        %s991 = scalar_lea.vmem [#allocation2], 34
        %v992 = vld [vmem:[%s991] ss:$2 sm:$0xf]
        %s993 = scalar_lea.vmem [#allocation2], 66
        %v994 = vld [vmem:[%s993] ss:$2 sm:$0xf]
        %s995 = scalar_lea.vmem [#allocation2], 98
        %v996 = vld [vmem:[%s995] ss:$2 sm:$0xf]
        %v997 = vlaneseq
        %v998 = vshrl.u32 %v997, 7
        %v999 = vsub.s32 2, %v998
        %v1000 = vrot.slane %v917, %v999
        %v1001 = vmul.f32 %v990, %v1000
        %v1002 = vmul.f32 %v992, %v1000
        %v1003 = vmul.f32 %v994, %v1000
        %v1004 = vmul.f32 %v996, %v1000
        %v1005 = vadd.f32 %v985, %v1001
        %v1006 = vadd.f32 %v986, %v1002
        %v1007 = vadd.f32 %v987, %v1003
        %v1008 = vadd.f32 %v988, %v1004
        %v1009 = vld [vmem:[%s333] ss:$2 sm:$0xf]
        %s1010 = scalar_lea.vmem %s333, 32 [#allocation2]
        %v1011 = vld [vmem:[%s1010] ss:$2 sm:$0xf]
        %s1012 = scalar_lea.vmem %s333, 64 [#allocation2]
        %v1013 = vld [vmem:[%s1012] ss:$2 sm:$0xf]
        %s1014 = scalar_lea.vmem %s333, 96 [#allocation2]
        %v1015 = vld [vmem:[%s1014] ss:$2 sm:$0xf]
        %v1016 = vlaneseq
        %v1017 = vshrl.u32 %v1016, 7
        %v1018 = vsub.s32 3, %v1017
        %v1019 = vrot.slane %v917, %v1018
        %v1020 = vmul.f32 %v1009, %v1019
        %v1021 = vmul.f32 %v1011, %v1019
        %v1022 = vmul.f32 %v1013, %v1019
        %v1023 = vmul.f32 %v1015, %v1019
        %v1024 = vadd.f32 %v1005, %v1020
        %v1025 = vadd.f32 %v1006, %v1021
        %v1026 = vadd.f32 %v1007, %v1022
        %v1027 = vadd.f32 %v1008, %v1023
        %s1028 = scalar_lea.vmem %s333, 1 [#allocation2]
        %v1029 = vld [vmem:[%s1028] ss:$2 sm:$0xf]
        %s1030 = scalar_lea.vmem %s333, 33 [#allocation2]
        %v1031 = vld [vmem:[%s1030] ss:$2 sm:$0xf]
        %s1032 = scalar_lea.vmem %s333, 65 [#allocation2]
        %v1033 = vld [vmem:[%s1032] ss:$2 sm:$0xf]
        %s1034 = scalar_lea.vmem %s333, 97 [#allocation2]
        %v1035 = vld [vmem:[%s1034] ss:$2 sm:$0xf]
        %v1036 = vlaneseq
        %v1037 = vshrl.u32 %v1036, 7
        %v1038 = vsub.s32 4, %v1037
        %v1039 = vrot.slane %v917, %v1038
        %v1040 = vmul.f32 %v1029, %v1039
        %v1041 = vmul.f32 %v1031, %v1039
        %v1042 = vmul.f32 %v1033, %v1039
        %v1043 = vmul.f32 %v1035, %v1039
        %v1044 = vadd.f32 %v1024, %v1040
        %v1045 = vadd.f32 %v1025, %v1041
        %v1046 = vadd.f32 %v1026, %v1042
        %v1047 = vadd.f32 %v1027, %v1043
        %s1048 = scalar_lea.vmem %s333, 2 [#allocation2]
        %v1049 = vld [vmem:[%s1048] ss:$2 sm:$0xf]
        %s1050 = scalar_lea.vmem %s333, 34 [#allocation2]
        %v1051 = vld [vmem:[%s1050] ss:$2 sm:$0xf]
        %s1052 = scalar_lea.vmem %s333, 66 [#allocation2]
        %v1053 = vld [vmem:[%s1052] ss:$2 sm:$0xf]
        %s1054 = scalar_lea.vmem %s333, 98 [#allocation2]
        %v1055 = vld [vmem:[%s1054] ss:$2 sm:$0xf]
        %v1056 = vlaneseq
        %v1057 = vshrl.u32 %v1056, 7
        %v1058 = vsub.s32 5, %v1057
        %v1059 = vrot.slane %v917, %v1058
        %v1060 = vmul.f32 %v1049, %v1059
        %v1061 = vmul.f32 %v1051, %v1059
        %v1062 = vmul.f32 %v1053, %v1059
        %v1063 = vmul.f32 %v1055, %v1059
        %v1064 = vadd.f32 %v1044, %v1060
        %v1065 = vadd.f32 %v1045, %v1061
        %v1066 = vadd.f32 %v1046, %v1062
        %v1067 = vadd.f32 %v1047, %v1063
        %v1068 = vld [vmem:[%s510] ss:$2 sm:$0xf]
        %s1069 = scalar_lea.vmem %s510, 32 [#allocation2]
        %v1070 = vld [vmem:[%s1069] ss:$2 sm:$0xf]
        %s1071 = scalar_lea.vmem %s510, 64 [#allocation2]
        %v1072 = vld [vmem:[%s1071] ss:$2 sm:$0xf]
        %s1073 = scalar_lea.vmem %s510, 96 [#allocation2]
        %v1074 = vld [vmem:[%s1073] ss:$2 sm:$0xf]
        %v1075 = vlaneseq
        %v1076 = vshrl.u32 %v1075, 7
        %v1077 = vsub.s32 6, %v1076
        %v1078 = vrot.slane %v917, %v1077
        %v1079 = vmul.f32 %v1068, %v1078
        %v1080 = vmul.f32 %v1070, %v1078
        %v1081 = vmul.f32 %v1072, %v1078
        %v1082 = vmul.f32 %v1074, %v1078
        %v1083 = vadd.f32 %v1064, %v1079
        %v1084 = vadd.f32 %v1065, %v1080
        %v1085 = vadd.f32 %v1066, %v1081
        %v1086 = vadd.f32 %v1067, %v1082
        %s1087 = scalar_lea.vmem %s510, 1 [#allocation2]
        %v1088 = vld [vmem:[%s1087] ss:$2 sm:$0xf]
        %s1089 = scalar_lea.vmem %s510, 33 [#allocation2]
        %v1090 = vld [vmem:[%s1089] ss:$2 sm:$0xf]
        %s1091 = scalar_lea.vmem %s510, 65 [#allocation2]
        %v1092 = vld [vmem:[%s1091] ss:$2 sm:$0xf]
        %s1093 = scalar_lea.vmem %s510, 97 [#allocation2]
        %v1094 = vld [vmem:[%s1093] ss:$2 sm:$0xf]
        %v1095 = vlaneseq
        %v1096 = vshrl.u32 %v1095, 7
        %v1097 = vsub.s32 7, %v1096
        %v1098 = vrot.slane %v917, %v1097
        %v1099 = vmul.f32 %v1088, %v1098
        %v1100 = vmul.f32 %v1090, %v1098
        %v1101 = vmul.f32 %v1092, %v1098
        %v1102 = vmul.f32 %v1094, %v1098
        %v1103 = vadd.f32 %v1083, %v1099
        %v1104 = vadd.f32 %v1084, %v1100
        %v1105 = vadd.f32 %v1085, %v1101
        %v1106 = vadd.f32 %v1086, %v1102
        %s1107 = scalar_lea.vmem %s510, 2 [#allocation2]
        %v1108 = vld [vmem:[%s1107] ss:$2 sm:$0xf]
        %s1109 = scalar_lea.vmem %s510, 34 [#allocation2]
        %v1110 = vld [vmem:[%s1109] ss:$2 sm:$0xf]
        %s1111 = scalar_lea.vmem %s510, 66 [#allocation2]
        %v1112 = vld [vmem:[%s1111] ss:$2 sm:$0xf]
        %s1113 = scalar_lea.vmem %s510, 98 [#allocation2]
        %v1114 = vld [vmem:[%s1113] ss:$2 sm:$0xf]
        %v1115 = vlaneseq
        %v1116 = vshrl.u32 %v1115, 7
        %v1117 = vsub.s32 0, %v1116
        %v1118 = vrot.slane %v918, %v1117
        %v1119 = vmul.f32 %v1108, %v1118
        %v1120 = vmul.f32 %v1110, %v1118
        %v1121 = vmul.f32 %v1112, %v1118
        %v1122 = vmul.f32 %v1114, %v1118
        %v1123 = vadd.f32 %v1103, %v1119
        %v1124 = vadd.f32 %v1104, %v1120
        %v1125 = vadd.f32 %v1105, %v1121
        %v1126 = vadd.f32 %v1106, %v1122
        %v1127 = vlaneseq
        %v1128 = vshrl.u32 %v1127, 7
        %v1129 = vsub.s32 0, %v1128
        %v1130 = vrot.slane %v919, %v1129
        %v1131 = vadd.f32 %v1123, %v1130
        %v1132 = vadd.f32 %v1124, %v1130
        %v1133 = vadd.f32 %v1125, %v1130
        %v1134 = vadd.f32 %v1126, %v1130
        %v1135 = vmax.f32 %v1131, 0.0
        %v1136 = vmax.f32 %v1132, 0.0
        %v1137 = vmax.f32 %v1133, 0.0
        %v1138 = vmax.f32 %v1134, 0.0
        %v1139 = vmin.f32 %v1135, 6.0
        %v1140 = vmin.f32 %v1136, 6.0
        %v1141 = vmin.f32 %v1137, 6.0
        %v1142 = vmin.f32 %v1138, 6.0
        %vm1143 = vcmask 388096
        %1144 = vst.msk [vmem:[#allocation3] sm:$0xf] %vm1143, %v1139
        %1145 = vst.msk [vmem:[#allocation3 + $0x4] sm:$0xf] %vm1143, %v1140
        %1146 = vst.msk [vmem:[#allocation3 + $0x8] sm:$0xf] %vm1143, %v1141
        %1147 = vst.msk [vmem:[#allocation3 + $0xc] sm:$0xf] %vm1143, %v1142
        %v1148 = vld [vmem:[#allocation3] sm:$0xff]
        %v1149 = vld [vmem:[#allocation3 + $0x8] sm:$0xff]
        %v1150 = vld [vmem:[%s1 + $0x78] sm:$0xff]
        %v1151 = vld [vmem:[%s1 + $0x80] sm:$0xff]
        %v1152 = vld [vmem:[%s1 + $0x88] sm:$0xff]
        %v1153 = vld [vmem:[%s1 + $0x90] sm:$0xff]
        %v1154 = vld [vmem:[%s1 + $0x98] sm:$0xff]
        %v1155 = vld [vmem:[%s1 + $0xa0] sm:$0xff]
        %v1156 = vld [vmem:[%s1 + $0xa8] sm:$0x1]
        %v1157 = vlaneseq
        %v1158 = vshrl.u32 %v1157, 7
        %v1159 = vsub.s32 0, %v1158
        %v1160 = vrot.slane %v1156, %v1159
        %v1162 = vsel %vm920, %v1148, 0
        %v1165 = vsel %vm920, %v1149, 0
        %1167 = vmatprep.subr.mxu0 0.0
        %1168 = vmatpush1.msra.mxu0 %v1150
        %1169 = vmatprep.subr.mxu0 0.0
        %1170 = vmatpush1.msra.mxu0 %v1151
        %1171 = vmatprep.subr.mxu0 0.0
        %1172 = vmatpush1.msra.mxu0 %v1152
        %1173 = vmatprep.subr.mxu0 0.0
        %1174 = vmatpush1.msra.mxu0 %v1153
        %1175 = vmatprep.subr.mxu0 0.0
        %1176 = vmatpush1.msra.mxu0 %v1154
        %1177 = vmatprep.subr.mxu0 0.0
        %1178 = vmatpush1.msra.mxu0 %v1155
        %1179 = vmatprep.subr.mxu0 0.0
        %1180 = vmatpush1.msra.mxu0 0.0
        %1181 = vmatprep.subr.mxu0 0.0
        %1182 = vmatpush1.msra.mxu0 0.0
        %1183 = vmatprep.subr.mxu0 0.0
        %1184 = vmatpush1.msra.mxu0 0.0
        %1185 = vmatprep.subr.mxu0 0.0
        %1186 = vmatpush1.msra.mxu0 0.0
        %1187 = vmatprep.subr.mxu0 0.0
        %1188 = vmatpush1.msra.mxu0 0.0
        %1189 = vmatprep.subr.mxu0 0.0
        %1190 = vmatpush1.msra.mxu0 0.0
        %1191 = vmatprep.subr.mxu0 0.0
        %1192 = vmatpush1.msra.mxu0 0.0
        %1193 = vmatprep.subr.mxu0 0.0
        %1194 = vmatpush1.msra.mxu0 0.0
        %1195 = vmatprep.subr.mxu0 0.0
        %1196 = vmatpush1.msra.mxu0 0.0
        %1197 = vmatprep.subr.mxu0 0.0
        %1198 = vmatpush1.msra.mxu0 0.0
        %1199 = vmatprep.subr.mxu0 0.0
        %1200 = vmatpush1.msra.mxu0 0.0
        %1201 = vmatprep.subr.mxu0 0.0
        %1202 = vmatpush1.msra.mxu0 0.0
        %1203 = vmatprep.subr.mxu0 0.0
        %1204 = vmatpush1.msra.mxu0 0.0
        %1205 = vmatprep.subr.mxu0 0.0
        %1206 = vmatpush1.msra.mxu0 0.0
        %1207 = vmatprep.subr.mxu0 0.0
        %1208 = vmatpush1.msra.mxu0 0.0
        %1209 = vmatprep.subr.mxu0 0.0
        %1210 = vmatpush1.msra.mxu0 0.0
        %1211 = vmatprep.subr.mxu0 0.0
        %1212 = vmatpush1.msra.mxu0 0.0
        %1213 = vmatprep.subr.mxu0 0.0
        %1214 = vmatpush1.msra.mxu0 0.0
        %1215 = vmatprep.subr.mxu0 0.0
        %1216 = vmatpush1.msra.mxu0 0.0
        %1217 = vmatprep.subr.mxu0 0.0
        %1218 = vmatpush1.msra.mxu0 0.0
        %1219 = vmatprep.subr.mxu0 0.0
        %1220 = vmatpush1.msra.mxu0 0.0
        %1221 = vmatprep.subr.mxu0 0.0
        %1222 = vmatpush1.msra.mxu0 0.0
        %1223 = vmatprep.subr.mxu0 0.0
        %1224 = vmatpush1.msra.mxu0 0.0
        %1225 = vmatprep.subr.mxu0 0.0
        %1226 = vmatpush1.msra.mxu0 0.0
        %1227 = vmatprep.subr.mxu0 0.0
        %1228 = vmatpush1.msra.mxu0 0.0
        %1229 = vmatprep.subr.mxu0 0.0
        %1230 = vmatpush1.msra.mxu0 0.0
        %1231 = vmatprep.mubr.f32.mxu0 0.0
        %1232 = vmatmul.mubr.f32.gmra.mrb[0].mxu0 %v1162
        %v1233 = vpop.f32.mrb[0].mxu0
        %v1234 = vadd.f32 %v1160, %v1233
        %v1235 = vpop.f32.mrb[0].mxu0
        %1236 = vmatprep.mubr.f32.mxu0 0.0
        %1237 = vmatmul.mubr.f32.gmra.mrb[0].mxu0 %v1165
        %v1238 = vpop.f32.mrb[0].mxu0
        %v1239 = vadd.f32 %v1160, %v1238
        %v1240 = vpop.f32.mrb[0].mxu0
        %1241 = vdwg.mxu0
        %v1242 = vld [vmem:[%s1 + $0xb0] sm:$0xff]
        %v1243 = vld [vmem:[%s1 + $0xb8] sm:$0x1]
        %v1244 = vlaneseq
        %v1245 = vshrl.u32 %v1244, 7
        %v1246 = vsub.s32 0, %v1245
        %v1247 = vrot.slane %v1243, %v1246
        %v1249 = vsel %vm311, %v1234, 0
        %v1252 = vsel %vm311, %v1239, 0
        %1254 = vmatprep.subr.mxu0 0.0
        %1255 = vmatpush1.msra.mxu0 %v1242
        %1256 = vmatprep.subr.mxu0 0.0
        %1257 = vmatpush1.msra.mxu0 0.0
        %1258 = vmatprep.subr.mxu0 0.0
        %1259 = vmatpush1.msra.mxu0 0.0
        %1260 = vmatprep.subr.mxu0 0.0
        %1261 = vmatpush1.msra.mxu0 0.0
        %1262 = vmatprep.subr.mxu0 0.0
        %1263 = vmatpush1.msra.mxu0 0.0
        %1264 = vmatprep.subr.mxu0 0.0
        %1265 = vmatpush1.msra.mxu0 0.0
        %1266 = vmatprep.subr.mxu0 0.0
        %1267 = vmatpush1.msra.mxu0 0.0
        %1268 = vmatprep.subr.mxu0 0.0
        %1269 = vmatpush1.msra.mxu0 0.0
        %1270 = vmatprep.subr.mxu0 0.0
        %1271 = vmatpush1.msra.mxu0 0.0
        %1272 = vmatprep.subr.mxu0 0.0
        %1273 = vmatpush1.msra.mxu0 0.0
        %1274 = vmatprep.subr.mxu0 0.0
        %1275 = vmatpush1.msra.mxu0 0.0
        %1276 = vmatprep.subr.mxu0 0.0
        %1277 = vmatpush1.msra.mxu0 0.0
        %1278 = vmatprep.subr.mxu0 0.0
        %1279 = vmatpush1.msra.mxu0 0.0
        %1280 = vmatprep.subr.mxu0 0.0
        %1281 = vmatpush1.msra.mxu0 0.0
        %1282 = vmatprep.subr.mxu0 0.0
        %1283 = vmatpush1.msra.mxu0 0.0
        %1284 = vmatprep.subr.mxu0 0.0
        %1285 = vmatpush1.msra.mxu0 0.0
        %1286 = vmatprep.subr.mxu0 0.0
        %1287 = vmatpush1.msra.mxu0 0.0
        %1288 = vmatprep.subr.mxu0 0.0
        %1289 = vmatpush1.msra.mxu0 0.0
        %1290 = vmatprep.subr.mxu0 0.0
        %1291 = vmatpush1.msra.mxu0 0.0
        %1292 = vmatprep.subr.mxu0 0.0
        %1293 = vmatpush1.msra.mxu0 0.0
        %1294 = vmatprep.subr.mxu0 0.0
        %1295 = vmatpush1.msra.mxu0 0.0
        %1296 = vmatprep.subr.mxu0 0.0
        %1297 = vmatpush1.msra.mxu0 0.0
        %1298 = vmatprep.subr.mxu0 0.0
        %1299 = vmatpush1.msra.mxu0 0.0
        %1300 = vmatprep.subr.mxu0 0.0
        %1301 = vmatpush1.msra.mxu0 0.0
        %1302 = vmatprep.subr.mxu0 0.0
        %1303 = vmatpush1.msra.mxu0 0.0
        %1304 = vmatprep.subr.mxu0 0.0
        %1305 = vmatpush1.msra.mxu0 0.0
        %1306 = vmatprep.subr.mxu0 0.0
        %1307 = vmatpush1.msra.mxu0 0.0
        %1308 = vmatprep.subr.mxu0 0.0
        %1309 = vmatpush1.msra.mxu0 0.0
        %1310 = vmatprep.subr.mxu0 0.0
        %1311 = vmatpush1.msra.mxu0 0.0
        %1312 = vmatprep.subr.mxu0 0.0
        %1313 = vmatpush1.msra.mxu0 0.0
        %1314 = vmatprep.subr.mxu0 0.0
        %1315 = vmatpush1.msra.mxu0 0.0
        %1316 = vmatprep.subr.mxu0 0.0
        %1317 = vmatpush1.msra.mxu0 0.0
        %1318 = vmatprep.mubr.f32.mxu0 0.0
        %1319 = vmatmul.mubr.f32.gmra.mrb[0].mxu0 %v1249
        %v1320 = vpop.f32.mrb[0].mxu0
        %v1321 = vadd.f32 %v1247, %v1320
        %v1322 = vpop.f32.mrb[0].mxu0
        %1323 = vmatprep.mubr.f32.mxu0 0.0
        %1324 = vmatmul.mubr.f32.gmra.mrb[0].mxu0 %v1252
        %v1325 = vpop.f32.mrb[0].mxu0
        %v1326 = vadd.f32 %v1247, %v1325
        %v1327 = vpop.f32.mrb[0].mxu0
        %1328 = vdwg.mxu0
        %v1329 = vmax.f32 %v1321, 0.0
        %v1330 = vmax.f32 %v1326, 0.0
        %v1331 = vmin.f32 %v1329, 6.0
        %v1332 = vmin.f32 %v1330, 6.0
        %v1333 = vld [vmem:[%s1 + $0xc0] sm:$0xff]
        %v1334 = vld [vmem:[%s1 + $0xc8] sm:$0x1]
        %v1335 = vld [vmem:[%s1 + $0xd0] sm:$0x1]
        %vm1336 = vcmask 390144
        %1337 = vst.msk [vmem:[#allocation2] sm:$0x3f] %vm1336, 0.0
        %1338 = vst.msk [vmem:[#allocation2 + $0x10] sm:$0x3f] %vm1336, 0.0
        %1339 = vst.msk [vmem:[#allocation2 + $0x20] sm:$0x3f] %vm1336, 0.0
        %1340 = vst.msk [vmem:[#allocation2 + $0x30] sm:$0x3f] %vm1336, 0.0
        %1341 = vst.msk [vmem:[#allocation2 + $0x40] sm:$0x3f] %vm1336, 0.0
        %1342 = vst.msk [vmem:[#allocation2 + $0x50] sm:$0x3f] %vm1336, 0.0
        %1343 = vst.msk [vmem:[#allocation3] sm:$0xff] %vm920, %v1331
        %1344 = vst.msk [vmem:[#allocation3 + $0x8] sm:$0xff] %vm920, %v1332
        %v1345 = vld [vmem:[#allocation3] sm:$0xf]
        %1346 = vst.msk [vmem:[%s333 + $0x1] sm:$0xf] %vm1143, %v1345
        %v1347 = vld [vmem:[#allocation3 + $0x4] sm:$0xf]
        %1348 = vst.msk [vmem:[%s510 + $0x1] sm:$0xf] %vm1143, %v1347
        %v1349 = vld [vmem:[#allocation3 + $0x8] sm:$0xf]
        %s1350 = scalar_lea.vmem [#allocation2], 48
        %1351 = vst.msk [vmem:[%s1350 + $0x1] sm:$0xf] %vm1143, %v1349
        %v1352 = vld [vmem:[#allocation3 + $0xc] sm:$0xf]
        %s1353 = scalar_lea.vmem [#allocation2], 64
        %1354 = vst.msk [vmem:[%s1353 + $0x1] sm:$0xf] %vm1143, %v1352
        %v1355 = vld [vmem:[#allocation2] sm:$0xf]
        %v1356 = vld [vmem:[#allocation2 + $0x10] sm:$0xf]
        %v1357 = vld [vmem:[#allocation2 + $0x20] sm:$0xf]
        %v1358 = vld [vmem:[#allocation2 + $0x30] sm:$0xf]
        %v1359 = vlaneseq
        %v1360 = vshrl.u32 %v1359, 7
        %v1361 = vsub.s32 0, %v1360
        %v1362 = vrot.slane %v1333, %v1361
        %v1363 = vmul.f32 %v1355, %v1362
        %v1364 = vmul.f32 %v1356, %v1362
        %v1365 = vmul.f32 %v1357, %v1362
        %v1366 = vmul.f32 %v1358, %v1362
        %v1367 = vadd.f32 %v1363, 0.0
        %v1368 = vadd.f32 %v1364, 0.0
        %v1369 = vadd.f32 %v1365, 0.0
        %v1370 = vadd.f32 %v1366, 0.0
        %v1371 = vld [vmem:[#allocation2 + $0x1] sm:$0xf]
        %v1372 = vld [vmem:[#allocation2 + $0x11] sm:$0xf]
        %v1373 = vld [vmem:[#allocation2 + $0x21] sm:$0xf]
        %v1374 = vld [vmem:[#allocation2 + $0x31] sm:$0xf]
        %v1375 = vlaneseq
        %v1376 = vshrl.u32 %v1375, 7
        %v1377 = vsub.s32 1, %v1376
        %v1378 = vrot.slane %v1333, %v1377
        %v1379 = vmul.f32 %v1371, %v1378
        %v1380 = vmul.f32 %v1372, %v1378
        %v1381 = vmul.f32 %v1373, %v1378
        %v1382 = vmul.f32 %v1374, %v1378
        %v1383 = vadd.f32 %v1367, %v1379
        %v1384 = vadd.f32 %v1368, %v1380
        %v1385 = vadd.f32 %v1369, %v1381
        %v1386 = vadd.f32 %v1370, %v1382
        %v1387 = vld [vmem:[#allocation2 + $0x2] sm:$0xf]
        %v1388 = vld [vmem:[#allocation2 + $0x12] sm:$0xf]
        %v1389 = vld [vmem:[#allocation2 + $0x22] sm:$0xf]
        %v1390 = vld [vmem:[#allocation2 + $0x32] sm:$0xf]
        %v1391 = vlaneseq
        %v1392 = vshrl.u32 %v1391, 7
        %v1393 = vsub.s32 2, %v1392
        %v1394 = vrot.slane %v1333, %v1393
        %v1395 = vmul.f32 %v1387, %v1394
        %v1396 = vmul.f32 %v1388, %v1394
        %v1397 = vmul.f32 %v1389, %v1394
        %v1398 = vmul.f32 %v1390, %v1394
        %v1399 = vadd.f32 %v1383, %v1395
        %v1400 = vadd.f32 %v1384, %v1396
        %v1401 = vadd.f32 %v1385, %v1397
        %v1402 = vadd.f32 %v1386, %v1398
        %v1403 = vld [vmem:[%s333] sm:$0xf]
        %v1404 = vld [vmem:[%s333 + $0x10] sm:$0xf]
        %v1405 = vld [vmem:[%s333 + $0x20] sm:$0xf]
        %v1406 = vld [vmem:[%s333 + $0x30] sm:$0xf]
        %v1407 = vlaneseq
        %v1408 = vshrl.u32 %v1407, 7
        %v1409 = vsub.s32 3, %v1408
        %v1410 = vrot.slane %v1333, %v1409
        %v1411 = vmul.f32 %v1403, %v1410
        %v1412 = vmul.f32 %v1404, %v1410
        %v1413 = vmul.f32 %v1405, %v1410
        %v1414 = vmul.f32 %v1406, %v1410
        %v1415 = vadd.f32 %v1399, %v1411
        %v1416 = vadd.f32 %v1400, %v1412
        %v1417 = vadd.f32 %v1401, %v1413
        %v1418 = vadd.f32 %v1402, %v1414
        %v1419 = vld [vmem:[%s333 + $0x1] sm:$0xf]
        %v1420 = vld [vmem:[%s333 + $0x11] sm:$0xf]
        %v1421 = vld [vmem:[%s333 + $0x21] sm:$0xf]
        %v1422 = vld [vmem:[%s333 + $0x31] sm:$0xf]
        %v1423 = vlaneseq
        %v1424 = vshrl.u32 %v1423, 7
        %v1425 = vsub.s32 4, %v1424
        %v1426 = vrot.slane %v1333, %v1425
        %v1427 = vmul.f32 %v1419, %v1426
        %v1428 = vmul.f32 %v1420, %v1426
        %v1429 = vmul.f32 %v1421, %v1426
        %v1430 = vmul.f32 %v1422, %v1426
        %v1431 = vadd.f32 %v1415, %v1427
        %v1432 = vadd.f32 %v1416, %v1428
        %v1433 = vadd.f32 %v1417, %v1429
        %v1434 = vadd.f32 %v1418, %v1430
        %v1435 = vld [vmem:[%s333 + $0x2] sm:$0xf]
        %v1436 = vld [vmem:[%s333 + $0x12] sm:$0xf]
        %v1437 = vld [vmem:[%s333 + $0x22] sm:$0xf]
        %v1438 = vld [vmem:[%s333 + $0x32] sm:$0xf]
        %v1439 = vlaneseq
        %v1440 = vshrl.u32 %v1439, 7
        %v1441 = vsub.s32 5, %v1440
        %v1442 = vrot.slane %v1333, %v1441
        %v1443 = vmul.f32 %v1435, %v1442
        %v1444 = vmul.f32 %v1436, %v1442
        %v1445 = vmul.f32 %v1437, %v1442
        %v1446 = vmul.f32 %v1438, %v1442
        %v1447 = vadd.f32 %v1431, %v1443
        %v1448 = vadd.f32 %v1432, %v1444
        %v1449 = vadd.f32 %v1433, %v1445
        %v1450 = vadd.f32 %v1434, %v1446
        %v1451 = vld [vmem:[%s510] sm:$0xf]
        %v1452 = vld [vmem:[%s510 + $0x10] sm:$0xf]
        %v1453 = vld [vmem:[%s510 + $0x20] sm:$0xf]
        %v1454 = vld [vmem:[%s510 + $0x30] sm:$0xf]
        %v1455 = vlaneseq
        %v1456 = vshrl.u32 %v1455, 7
        %v1457 = vsub.s32 6, %v1456
        %v1458 = vrot.slane %v1333, %v1457
        %v1459 = vmul.f32 %v1451, %v1458
        %v1460 = vmul.f32 %v1452, %v1458
        %v1461 = vmul.f32 %v1453, %v1458
        %v1462 = vmul.f32 %v1454, %v1458
        %v1463 = vadd.f32 %v1447, %v1459
        %v1464 = vadd.f32 %v1448, %v1460
        %v1465 = vadd.f32 %v1449, %v1461
        %v1466 = vadd.f32 %v1450, %v1462
        %v1467 = vld [vmem:[%s510 + $0x1] sm:$0xf]
        %v1468 = vld [vmem:[%s510 + $0x11] sm:$0xf]
        %v1469 = vld [vmem:[%s510 + $0x21] sm:$0xf]
        %v1470 = vld [vmem:[%s510 + $0x31] sm:$0xf]
        %v1471 = vlaneseq
        %v1472 = vshrl.u32 %v1471, 7
        %v1473 = vsub.s32 7, %v1472
        %v1474 = vrot.slane %v1333, %v1473
        %v1475 = vmul.f32 %v1467, %v1474
        %v1476 = vmul.f32 %v1468, %v1474
        %v1477 = vmul.f32 %v1469, %v1474
        %v1478 = vmul.f32 %v1470, %v1474
        %v1479 = vadd.f32 %v1463, %v1475
        %v1480 = vadd.f32 %v1464, %v1476
        %v1481 = vadd.f32 %v1465, %v1477
        %v1482 = vadd.f32 %v1466, %v1478
        %v1483 = vld [vmem:[%s510 + $0x2] sm:$0xf]
        %v1484 = vld [vmem:[%s510 + $0x12] sm:$0xf]
        %v1485 = vld [vmem:[%s510 + $0x22] sm:$0xf]
        %v1486 = vld [vmem:[%s510 + $0x32] sm:$0xf]
        %v1487 = vlaneseq
        %v1488 = vshrl.u32 %v1487, 7
        %v1489 = vsub.s32 0, %v1488
        %v1490 = vrot.slane %v1334, %v1489
        %v1491 = vmul.f32 %v1483, %v1490
        %v1492 = vmul.f32 %v1484, %v1490
        %v1493 = vmul.f32 %v1485, %v1490
        %v1494 = vmul.f32 %v1486, %v1490
        %v1495 = vadd.f32 %v1479, %v1491
        %v1496 = vadd.f32 %v1480, %v1492
        %v1497 = vadd.f32 %v1481, %v1493
        %v1498 = vadd.f32 %v1482, %v1494
        %v1499 = vlaneseq
        %v1500 = vshrl.u32 %v1499, 7
        %v1501 = vsub.s32 0, %v1500
        %v1502 = vrot.slane %v1335, %v1501
        %v1503 = vadd.f32 %v1495, %v1502
        %v1504 = vadd.f32 %v1496, %v1502
        %v1505 = vadd.f32 %v1497, %v1502
        %v1506 = vadd.f32 %v1498, %v1502
        %v1507 = vmax.f32 %v1503, 0.0
        %v1508 = vmax.f32 %v1504, 0.0
        %v1509 = vmax.f32 %v1505, 0.0
        %v1510 = vmax.f32 %v1506, 0.0
        %v1511 = vmin.f32 %v1507, 6.0
        %v1512 = vmin.f32 %v1508, 6.0
        %v1513 = vmin.f32 %v1509, 6.0
        %v1514 = vmin.f32 %v1510, 6.0
        %1515 = vst.msk [vmem:[#allocation3] sm:$0xf] %vm1143, %v1511
        %1516 = vst.msk [vmem:[#allocation3 + $0x4] sm:$0xf] %vm1143, %v1512
        %1517 = vst.msk [vmem:[#allocation3 + $0x8] sm:$0xf] %vm1143, %v1513
        %1518 = vst.msk [vmem:[#allocation3 + $0xc] sm:$0xf] %vm1143, %v1514
        %v1519 = vld [vmem:[#allocation3] sm:$0xff]
        %v1520 = vld [vmem:[#allocation3 + $0x8] sm:$0xff]
        %v1521 = vld [vmem:[%s1 + $0xd8] sm:$0xff]
        %v1522 = vld [vmem:[%s1 + $0xe0] sm:$0xff]
        %v1523 = vld [vmem:[%s1 + $0xe8] sm:$0xff]
        %v1524 = vld [vmem:[%s1 + $0xf0] sm:$0xff]
        %v1525 = vld [vmem:[%s1 + $0xf8] sm:$0xff]
        %v1526 = vld [vmem:[%s1 + $0x100] sm:$0xff]
        %v1527 = vld [vmem:[%s1 + $0x108] sm:$0x1]
        %v1528 = vlaneseq
        %v1529 = vshrl.u32 %v1528, 7
        %v1530 = vsub.s32 0, %v1529
        %v1531 = vrot.slane %v1527, %v1530
        %v1533 = vsel %vm920, %v1519, 0
        %v1536 = vsel %vm920, %v1520, 0
        %1538 = vmatprep.subr.mxu0 0.0
        %1539 = vmatpush1.msra.mxu0 %v1521
        %1540 = vmatprep.subr.mxu0 0.0
        %1541 = vmatpush1.msra.mxu0 %v1522
        %1542 = vmatprep.subr.mxu0 0.0
        %1543 = vmatpush1.msra.mxu0 %v1523
        %1544 = vmatprep.subr.mxu0 0.0
        %1545 = vmatpush1.msra.mxu0 %v1524
        %1546 = vmatprep.subr.mxu0 0.0
        %1547 = vmatpush1.msra.mxu0 %v1525
        %1548 = vmatprep.subr.mxu0 0.0
        %1549 = vmatpush1.msra.mxu0 %v1526
        %1550 = vmatprep.subr.mxu0 0.0
        %1551 = vmatpush1.msra.mxu0 0.0
        %1552 = vmatprep.subr.mxu0 0.0
        %1553 = vmatpush1.msra.mxu0 0.0
        %1554 = vmatprep.subr.mxu0 0.0
        %1555 = vmatpush1.msra.mxu0 0.0
        %1556 = vmatprep.subr.mxu0 0.0
        %1557 = vmatpush1.msra.mxu0 0.0
        %1558 = vmatprep.subr.mxu0 0.0
        %1559 = vmatpush1.msra.mxu0 0.0
        %1560 = vmatprep.subr.mxu0 0.0
        %1561 = vmatpush1.msra.mxu0 0.0
        %1562 = vmatprep.subr.mxu0 0.0
        %1563 = vmatpush1.msra.mxu0 0.0
        %1564 = vmatprep.subr.mxu0 0.0
        %1565 = vmatpush1.msra.mxu0 0.0
        %1566 = vmatprep.subr.mxu0 0.0
        %1567 = vmatpush1.msra.mxu0 0.0
        %1568 = vmatprep.subr.mxu0 0.0
        %1569 = vmatpush1.msra.mxu0 0.0
        %1570 = vmatprep.subr.mxu0 0.0
        %1571 = vmatpush1.msra.mxu0 0.0
        %1572 = vmatprep.subr.mxu0 0.0
        %1573 = vmatpush1.msra.mxu0 0.0
        %1574 = vmatprep.subr.mxu0 0.0
        %1575 = vmatpush1.msra.mxu0 0.0
        %1576 = vmatprep.subr.mxu0 0.0
        %1577 = vmatpush1.msra.mxu0 0.0
        %1578 = vmatprep.subr.mxu0 0.0
        %1579 = vmatpush1.msra.mxu0 0.0
        %1580 = vmatprep.subr.mxu0 0.0
        %1581 = vmatpush1.msra.mxu0 0.0
        %1582 = vmatprep.subr.mxu0 0.0
        %1583 = vmatpush1.msra.mxu0 0.0
        %1584 = vmatprep.subr.mxu0 0.0
        %1585 = vmatpush1.msra.mxu0 0.0
        %1586 = vmatprep.subr.mxu0 0.0
        %1587 = vmatpush1.msra.mxu0 0.0
        %1588 = vmatprep.subr.mxu0 0.0
        %1589 = vmatpush1.msra.mxu0 0.0
        %1590 = vmatprep.subr.mxu0 0.0
        %1591 = vmatpush1.msra.mxu0 0.0
        %1592 = vmatprep.subr.mxu0 0.0
        %1593 = vmatpush1.msra.mxu0 0.0
        %1594 = vmatprep.subr.mxu0 0.0
        %1595 = vmatpush1.msra.mxu0 0.0
        %1596 = vmatprep.subr.mxu0 0.0
        %1597 = vmatpush1.msra.mxu0 0.0
        %1598 = vmatprep.subr.mxu0 0.0
        %1599 = vmatpush1.msra.mxu0 0.0
        %1600 = vmatprep.subr.mxu0 0.0
        %1601 = vmatpush1.msra.mxu0 0.0
        %1602 = vmatprep.mubr.f32.mxu0 0.0
        %1603 = vmatmul.mubr.f32.gmra.mrb[0].mxu0 %v1533
        %v1604 = vpop.f32.mrb[0].mxu0
        %v1605 = vadd.f32 %v1531, %v1604
        %v1606 = vpop.f32.mrb[0].mxu0
        %1607 = vmatprep.mubr.f32.mxu0 0.0
        %1608 = vmatmul.mubr.f32.gmra.mrb[0].mxu0 %v1536
        %v1609 = vpop.f32.mrb[0].mxu0
        %v1610 = vadd.f32 %v1531, %v1609
        %v1611 = vpop.f32.mrb[0].mxu0
        %1612 = vdwg.mxu0
        %v1613 = vadd.f32 %v1605, %v1234
        %v1614 = vadd.f32 %v1610, %v1239
        %v1615 = vld [vmem:[%s1 + $0x110] sm:$0xff]
        %v1616 = vld [vmem:[%s1 + $0x118] sm:$0x1]
        %v1617 = vlaneseq
        %v1618 = vshrl.u32 %v1617, 7
        %v1619 = vsub.s32 0, %v1618
        %v1620 = vrot.slane %v1616, %v1619
        %v1622 = vsel %vm311, %v1613, 0
        %v1625 = vsel %vm311, %v1614, 0
        %1627 = vmatprep.subr.mxu0 0.0
        %1628 = vmatpush1.msra.mxu0 %v1615
        %1629 = vmatprep.subr.mxu0 0.0
        %1630 = vmatpush1.msra.mxu0 0.0
        %1631 = vmatprep.subr.mxu0 0.0
        %1632 = vmatpush1.msra.mxu0 0.0
        %1633 = vmatprep.subr.mxu0 0.0
        %1634 = vmatpush1.msra.mxu0 0.0
        %1635 = vmatprep.subr.mxu0 0.0
        %1636 = vmatpush1.msra.mxu0 0.0
        %1637 = vmatprep.subr.mxu0 0.0
        %1638 = vmatpush1.msra.mxu0 0.0
        %1639 = vmatprep.subr.mxu0 0.0
        %1640 = vmatpush1.msra.mxu0 0.0
        %1641 = vmatprep.subr.mxu0 0.0
        %1642 = vmatpush1.msra.mxu0 0.0
        %1643 = vmatprep.subr.mxu0 0.0
        %1644 = vmatpush1.msra.mxu0 0.0
        %1645 = vmatprep.subr.mxu0 0.0
        %1646 = vmatpush1.msra.mxu0 0.0
        %1647 = vmatprep.subr.mxu0 0.0
        %1648 = vmatpush1.msra.mxu0 0.0
        %1649 = vmatprep.subr.mxu0 0.0
        %1650 = vmatpush1.msra.mxu0 0.0
        %1651 = vmatprep.subr.mxu0 0.0
        %1652 = vmatpush1.msra.mxu0 0.0
        %1653 = vmatprep.subr.mxu0 0.0
        %1654 = vmatpush1.msra.mxu0 0.0
        %1655 = vmatprep.subr.mxu0 0.0
        %1656 = vmatpush1.msra.mxu0 0.0
        %1657 = vmatprep.subr.mxu0 0.0
        %1658 = vmatpush1.msra.mxu0 0.0
        %1659 = vmatprep.subr.mxu0 0.0
        %1660 = vmatpush1.msra.mxu0 0.0
        %1661 = vmatprep.subr.mxu0 0.0
        %1662 = vmatpush1.msra.mxu0 0.0
        %1663 = vmatprep.subr.mxu0 0.0
        %1664 = vmatpush1.msra.mxu0 0.0
        %1665 = vmatprep.subr.mxu0 0.0
        %1666 = vmatpush1.msra.mxu0 0.0
        %1667 = vmatprep.subr.mxu0 0.0
        %1668 = vmatpush1.msra.mxu0 0.0
        %1669 = vmatprep.subr.mxu0 0.0
        %1670 = vmatpush1.msra.mxu0 0.0
        %1671 = vmatprep.subr.mxu0 0.0
        %1672 = vmatpush1.msra.mxu0 0.0
        %1673 = vmatprep.subr.mxu0 0.0
        %1674 = vmatpush1.msra.mxu0 0.0
        %1675 = vmatprep.subr.mxu0 0.0
        %1676 = vmatpush1.msra.mxu0 0.0
        %1677 = vmatprep.subr.mxu0 0.0
        %1678 = vmatpush1.msra.mxu0 0.0
        %1679 = vmatprep.subr.mxu0 0.0
        %1680 = vmatpush1.msra.mxu0 0.0
        %1681 = vmatprep.subr.mxu0 0.0
        %1682 = vmatpush1.msra.mxu0 0.0
        %1683 = vmatprep.subr.mxu0 0.0
        %1684 = vmatpush1.msra.mxu0 0.0
        %1685 = vmatprep.subr.mxu0 0.0
        %1686 = vmatpush1.msra.mxu0 0.0
        %1687 = vmatprep.subr.mxu0 0.0
        %1688 = vmatpush1.msra.mxu0 0.0
        %1689 = vmatprep.subr.mxu0 0.0
        %1690 = vmatpush1.msra.mxu0 0.0
        %1691 = vmatprep.mubr.f32.mxu0 0.0
        %1692 = vmatmul.mubr.f32.gmra.mrb[0].mxu0 %v1622
        %v1693 = vpop.f32.mrb[0].mxu0
        %v1694 = vadd.f32 %v1620, %v1693
        %v1695 = vpop.f32.mrb[0].mxu0
        %1696 = vmatprep.mubr.f32.mxu0 0.0
        %1697 = vmatmul.mubr.f32.gmra.mrb[0].mxu0 %v1625
        %v1698 = vpop.f32.mrb[0].mxu0
        %v1699 = vadd.f32 %v1620, %v1698
        %v1700 = vpop.f32.mrb[0].mxu0
        %1701 = vdwg.mxu0
        %v1702 = vmax.f32 %v1694, 0.0
        %v1703 = vmax.f32 %v1699, 0.0
        %v1704 = vmin.f32 %v1702, 6.0
        %v1705 = vmin.f32 %v1703, 6.0
        %v1706 = vld [vmem:[%s1 + $0x120] sm:$0xff]
        %v1707 = vld [vmem:[%s1 + $0x128] sm:$0x1]
        %v1708 = vld [vmem:[%s1 + $0x130] sm:$0x1]
        %1709 = vst.msk [vmem:[#allocation2] sm:$0x3f] %vm1336, 0.0
        %1710 = vst.msk [vmem:[#allocation2 + $0x10] sm:$0x3f] %vm1336, 0.0
        %1711 = vst.msk [vmem:[#allocation2 + $0x20] sm:$0x3f] %vm1336, 0.0
        %1712 = vst.msk [vmem:[#allocation2 + $0x30] sm:$0x3f] %vm1336, 0.0
        %1713 = vst.msk [vmem:[#allocation2 + $0x40] sm:$0x3f] %vm1336, 0.0
        %1714 = vst.msk [vmem:[#allocation2 + $0x50] sm:$0x3f] %vm1336, 0.0
        %1715 = vst.msk [vmem:[#allocation3] sm:$0xff] %vm920, %v1704
        %1716 = vst.msk [vmem:[#allocation3 + $0x8] sm:$0xff] %vm920, %v1705
        %v1717 = vld [vmem:[#allocation3] sm:$0xf]
        %1718 = vst.msk [vmem:[%s333 + $0x1] sm:$0xf] %vm1143, %v1717
        %v1719 = vld [vmem:[#allocation3 + $0x4] sm:$0xf]
        %1720 = vst.msk [vmem:[%s510 + $0x1] sm:$0xf] %vm1143, %v1719
        %v1721 = vld [vmem:[#allocation3 + $0x8] sm:$0xf]
        %1722 = vst.msk [vmem:[%s1350 + $0x1] sm:$0xf] %vm1143, %v1721
        %v1723 = vld [vmem:[#allocation3 + $0xc] sm:$0xf]
        %1724 = vst.msk [vmem:[%s1353 + $0x1] sm:$0xf] %vm1143, %v1723
        %v1725 = vld [vmem:[#allocation2] ss:$2 sm:$0x3]
        %v1726 = vld [vmem:[%s951] ss:$2 sm:$0x3]
        %v1727 = vlaneseq
        %v1728 = vshrl.u32 %v1727, 7
        %v1729 = vsub.s32 0, %v1728
        %v1730 = vrot.slane %v1706, %v1729
        %v1731 = vmul.f32 %v1725, %v1730
        %v1732 = vmul.f32 %v1726, %v1730
        %v1733 = vadd.f32 %v1731, 0.0
        %v1734 = vadd.f32 %v1732, 0.0
        %v1735 = vld [vmem:[%s969] ss:$2 sm:$0x3]
        %v1736 = vld [vmem:[%s971] ss:$2 sm:$0x3]
        %v1737 = vlaneseq
        %v1738 = vshrl.u32 %v1737, 7
        %v1739 = vsub.s32 1, %v1738
        %v1740 = vrot.slane %v1706, %v1739
        %v1741 = vmul.f32 %v1735, %v1740
        %v1742 = vmul.f32 %v1736, %v1740
        %v1743 = vadd.f32 %v1733, %v1741
        %v1744 = vadd.f32 %v1734, %v1742
        %v1745 = vld [vmem:[%s989] ss:$2 sm:$0x3]
        %v1746 = vld [vmem:[%s991] ss:$2 sm:$0x3]
        %v1747 = vlaneseq
        %v1748 = vshrl.u32 %v1747, 7
        %v1749 = vsub.s32 2, %v1748
        %v1750 = vrot.slane %v1706, %v1749
        %v1751 = vmul.f32 %v1745, %v1750
        %v1752 = vmul.f32 %v1746, %v1750
        %v1753 = vadd.f32 %v1743, %v1751
        %v1754 = vadd.f32 %v1744, %v1752
        %v1755 = vld [vmem:[%s333] ss:$2 sm:$0x3]
        %v1756 = vld [vmem:[%s1010] ss:$2 sm:$0x3]
        %v1757 = vlaneseq
        %v1758 = vshrl.u32 %v1757, 7
        %v1759 = vsub.s32 3, %v1758
        %v1760 = vrot.slane %v1706, %v1759
        %v1761 = vmul.f32 %v1755, %v1760
        %v1762 = vmul.f32 %v1756, %v1760
        %v1763 = vadd.f32 %v1753, %v1761
        %v1764 = vadd.f32 %v1754, %v1762
        %v1765 = vld [vmem:[%s1028] ss:$2 sm:$0x3]
        %v1766 = vld [vmem:[%s1030] ss:$2 sm:$0x3]
        %v1767 = vlaneseq
        %v1768 = vshrl.u32 %v1767, 7
        %v1769 = vsub.s32 4, %v1768
        %v1770 = vrot.slane %v1706, %v1769
        %v1771 = vmul.f32 %v1765, %v1770
        %v1772 = vmul.f32 %v1766, %v1770
        %v1773 = vadd.f32 %v1763, %v1771
        %v1774 = vadd.f32 %v1764, %v1772
        %v1775 = vld [vmem:[%s1048] ss:$2 sm:$0x3]
        %v1776 = vld [vmem:[%s1050] ss:$2 sm:$0x3]
        %v1777 = vlaneseq
        %v1778 = vshrl.u32 %v1777, 7
        %v1779 = vsub.s32 5, %v1778
        %v1780 = vrot.slane %v1706, %v1779
        %v1781 = vmul.f32 %v1775, %v1780
        %v1782 = vmul.f32 %v1776, %v1780
        %v1783 = vadd.f32 %v1773, %v1781
        %v1784 = vadd.f32 %v1774, %v1782
        %v1785 = vld [vmem:[%s510] ss:$2 sm:$0x3]
        %v1786 = vld [vmem:[%s1069] ss:$2 sm:$0x3]
        %v1787 = vlaneseq
        %v1788 = vshrl.u32 %v1787, 7
        %v1789 = vsub.s32 6, %v1788
        %v1790 = vrot.slane %v1706, %v1789
        %v1791 = vmul.f32 %v1785, %v1790
        %v1792 = vmul.f32 %v1786, %v1790
        %v1793 = vadd.f32 %v1783, %v1791
        %v1794 = vadd.f32 %v1784, %v1792
        %v1795 = vld [vmem:[%s1087] ss:$2 sm:$0x3]
        %v1796 = vld [vmem:[%s1089] ss:$2 sm:$0x3]
        %v1797 = vlaneseq
        %v1798 = vshrl.u32 %v1797, 7
        %v1799 = vsub.s32 7, %v1798
        %v1800 = vrot.slane %v1706, %v1799
        %v1801 = vmul.f32 %v1795, %v1800
        %v1802 = vmul.f32 %v1796, %v1800
        %v1803 = vadd.f32 %v1793, %v1801
        %v1804 = vadd.f32 %v1794, %v1802
        %v1805 = vld [vmem:[%s1107] ss:$2 sm:$0x3]
        %v1806 = vld [vmem:[%s1109] ss:$2 sm:$0x3]
        %v1807 = vlaneseq
        %v1808 = vshrl.u32 %v1807, 7
        %v1809 = vsub.s32 0, %v1808
        %v1810 = vrot.slane %v1707, %v1809
        %v1811 = vmul.f32 %v1805, %v1810
        %v1812 = vmul.f32 %v1806, %v1810
        %v1813 = vadd.f32 %v1803, %v1811
        %v1814 = vadd.f32 %v1804, %v1812
        %v1815 = vlaneseq
        %v1816 = vshrl.u32 %v1815, 7
        %v1817 = vsub.s32 0, %v1816
        %v1818 = vrot.slane %v1708, %v1817
        %v1819 = vadd.f32 %v1813, %v1818
        %v1820 = vadd.f32 %v1814, %v1818
        %v1821 = vmax.f32 %v1819, 0.0
        %v1822 = vmax.f32 %v1820, 0.0
        %v1823 = vmin.f32 %v1821, 6.0
        %v1824 = vmin.f32 %v1822, 6.0
        %1825 = vst.msk [vmem:[#allocation3] sm:$0x3] %vm922, %v1823
        %1826 = vst.msk [vmem:[#allocation3 + $0x2] sm:$0x3] %vm922, %v1824
        %v1827 = vld [vmem:[#allocation3] sm:$0xf]
        %v1828 = vld [vmem:[%s1 + $0x138] sm:$0xff]
        %v1829 = vld [vmem:[%s1 + $0x140] sm:$0xff]
        %v1830 = vld [vmem:[%s1 + $0x148] sm:$0xff]
        %v1831 = vld [vmem:[%s1 + $0x150] sm:$0xff]
        %v1832 = vld [vmem:[%s1 + $0x158] sm:$0xff]
        %v1833 = vld [vmem:[%s1 + $0x160] sm:$0xff]
        %v1834 = vld [vmem:[%s1 + $0x168] sm:$0x1]
        %v1835 = vlaneseq
        %v1836 = vshrl.u32 %v1835, 7
        %v1837 = vsub.s32 0, %v1836
        %v1838 = vrot.slane %v1834, %v1837
        %v1840 = vsel %vm920, %v1827, 0
        %1842 = vmatprep.subr.mxu0 0.0
        %1843 = vmatpush1.msra.mxu0 %v1828
        %1844 = vmatprep.subr.mxu0 0.0
        %1845 = vmatpush1.msra.mxu0 %v1829
        %1846 = vmatprep.subr.mxu0 0.0
        %1847 = vmatpush1.msra.mxu0 %v1830
        %1848 = vmatprep.subr.mxu0 0.0
        %1849 = vmatpush1.msra.mxu0 %v1831
        %1850 = vmatprep.subr.mxu0 0.0
        %1851 = vmatpush1.msra.mxu0 %v1832
        %1852 = vmatprep.subr.mxu0 0.0
        %1853 = vmatpush1.msra.mxu0 %v1833
        %1854 = vmatprep.subr.mxu0 0.0
        %1855 = vmatpush1.msra.mxu0 0.0
        %1856 = vmatprep.subr.mxu0 0.0
        %1857 = vmatpush1.msra.mxu0 0.0
        %1858 = vmatprep.subr.mxu0 0.0
        %1859 = vmatpush1.msra.mxu0 0.0
        %1860 = vmatprep.subr.mxu0 0.0
        %1861 = vmatpush1.msra.mxu0 0.0
        %1862 = vmatprep.subr.mxu0 0.0
        %1863 = vmatpush1.msra.mxu0 0.0
        %1864 = vmatprep.subr.mxu0 0.0
        %1865 = vmatpush1.msra.mxu0 0.0
        %1866 = vmatprep.subr.mxu0 0.0
        %1867 = vmatpush1.msra.mxu0 0.0
        %1868 = vmatprep.subr.mxu0 0.0
        %1869 = vmatpush1.msra.mxu0 0.0
        %1870 = vmatprep.subr.mxu0 0.0
        %1871 = vmatpush1.msra.mxu0 0.0
        %1872 = vmatprep.subr.mxu0 0.0
        %1873 = vmatpush1.msra.mxu0 0.0
        %1874 = vmatprep.subr.mxu0 0.0
        %1875 = vmatpush1.msra.mxu0 0.0
        %1876 = vmatprep.subr.mxu0 0.0
        %1877 = vmatpush1.msra.mxu0 0.0
        %1878 = vmatprep.subr.mxu0 0.0
        %1879 = vmatpush1.msra.mxu0 0.0
        %1880 = vmatprep.subr.mxu0 0.0
        %1881 = vmatpush1.msra.mxu0 0.0
        %1882 = vmatprep.subr.mxu0 0.0
        %1883 = vmatpush1.msra.mxu0 0.0
        %1884 = vmatprep.subr.mxu0 0.0
        %1885 = vmatpush1.msra.mxu0 0.0
        %1886 = vmatprep.subr.mxu0 0.0
        %1887 = vmatpush1.msra.mxu0 0.0
        %1888 = vmatprep.subr.mxu0 0.0
        %1889 = vmatpush1.msra.mxu0 0.0
        %1890 = vmatprep.subr.mxu0 0.0
        %1891 = vmatpush1.msra.mxu0 0.0
        %1892 = vmatprep.subr.mxu0 0.0
        %1893 = vmatpush1.msra.mxu0 0.0
        %1894 = vmatprep.subr.mxu0 0.0
        %1895 = vmatpush1.msra.mxu0 0.0
        %1896 = vmatprep.subr.mxu0 0.0
        %1897 = vmatpush1.msra.mxu0 0.0
        %1898 = vmatprep.subr.mxu0 0.0
        %1899 = vmatpush1.msra.mxu0 0.0
        %1900 = vmatprep.subr.mxu0 0.0
        %1901 = vmatpush1.msra.mxu0 0.0
        %1902 = vmatprep.subr.mxu0 0.0
        %1903 = vmatpush1.msra.mxu0 0.0
        %1904 = vmatprep.subr.mxu0 0.0
        %1905 = vmatpush1.msra.mxu0 0.0
        %1906 = vmatprep.mubr.f32.mxu0 0.0
        %1907 = vmatmul.mubr.f32.gmra.mrb[0].mxu0 %v1840
        %v1908 = vpop.f32.mrb[0].mxu0
        %v1909 = vadd.f32 %v1838, %v1908
        %v1910 = vpop.f32.mrb[0].mxu0
        %1911 = vdwg.mxu0
        %v1912 = vld [vmem:[%s1 + $0x170] sm:$0xff]
        %v1913 = vld [vmem:[%s1 + $0x178] sm:$0x1]
        %v1914 = vlaneseq
        %v1915 = vshrl.u32 %v1914, 7
        %v1916 = vsub.s32 0, %v1915
        %v1917 = vrot.slane %v1913, %v1916
        %v1919 = vsel %vm311, %v1909, 0
        %1921 = vmatprep.subr.mxu0 0.0
        %1922 = vmatpush1.msra.mxu0 %v1912
        %1923 = vmatprep.subr.mxu0 0.0
        %1924 = vmatpush1.msra.mxu0 0.0
        %1925 = vmatprep.subr.mxu0 0.0
        %1926 = vmatpush1.msra.mxu0 0.0
        %1927 = vmatprep.subr.mxu0 0.0
        %1928 = vmatpush1.msra.mxu0 0.0
        %1929 = vmatprep.subr.mxu0 0.0
        %1930 = vmatpush1.msra.mxu0 0.0
        %1931 = vmatprep.subr.mxu0 0.0
        %1932 = vmatpush1.msra.mxu0 0.0
        %1933 = vmatprep.subr.mxu0 0.0
        %1934 = vmatpush1.msra.mxu0 0.0
        %1935 = vmatprep.subr.mxu0 0.0
        %1936 = vmatpush1.msra.mxu0 0.0
        %1937 = vmatprep.subr.mxu0 0.0
        %1938 = vmatpush1.msra.mxu0 0.0
        %1939 = vmatprep.subr.mxu0 0.0
        %1940 = vmatpush1.msra.mxu0 0.0
        %1941 = vmatprep.subr.mxu0 0.0
        %1942 = vmatpush1.msra.mxu0 0.0
        %1943 = vmatprep.subr.mxu0 0.0
        %1944 = vmatpush1.msra.mxu0 0.0
        %1945 = vmatprep.subr.mxu0 0.0
        %1946 = vmatpush1.msra.mxu0 0.0
        %1947 = vmatprep.subr.mxu0 0.0
        %1948 = vmatpush1.msra.mxu0 0.0
        %1949 = vmatprep.subr.mxu0 0.0
        %1950 = vmatpush1.msra.mxu0 0.0
        %1951 = vmatprep.subr.mxu0 0.0
        %1952 = vmatpush1.msra.mxu0 0.0
        %1953 = vmatprep.subr.mxu0 0.0
        %1954 = vmatpush1.msra.mxu0 0.0
        %1955 = vmatprep.subr.mxu0 0.0
        %1956 = vmatpush1.msra.mxu0 0.0
        %1957 = vmatprep.subr.mxu0 0.0
        %1958 = vmatpush1.msra.mxu0 0.0
        %1959 = vmatprep.subr.mxu0 0.0
        %1960 = vmatpush1.msra.mxu0 0.0
        %1961 = vmatprep.subr.mxu0 0.0
        %1962 = vmatpush1.msra.mxu0 0.0
        %1963 = vmatprep.subr.mxu0 0.0
        %1964 = vmatpush1.msra.mxu0 0.0
        %1965 = vmatprep.subr.mxu0 0.0
        %1966 = vmatpush1.msra.mxu0 0.0
        %1967 = vmatprep.subr.mxu0 0.0
        %1968 = vmatpush1.msra.mxu0 0.0
        %1969 = vmatprep.subr.mxu0 0.0
        %1970 = vmatpush1.msra.mxu0 0.0
        %1971 = vmatprep.subr.mxu0 0.0
        %1972 = vmatpush1.msra.mxu0 0.0
        %1973 = vmatprep.subr.mxu0 0.0
        %1974 = vmatpush1.msra.mxu0 0.0
        %1975 = vmatprep.subr.mxu0 0.0
        %1976 = vmatpush1.msra.mxu0 0.0
        %1977 = vmatprep.subr.mxu0 0.0
        %1978 = vmatpush1.msra.mxu0 0.0
        %1979 = vmatprep.subr.mxu0 0.0
        %1980 = vmatpush1.msra.mxu0 0.0
        %1981 = vmatprep.subr.mxu0 0.0
        %1982 = vmatpush1.msra.mxu0 0.0
        %1983 = vmatprep.subr.mxu0 0.0
        %1984 = vmatpush1.msra.mxu0 0.0
        %1985 = vmatprep.mubr.f32.mxu0 0.0
        %1986 = vmatmul.mubr.f32.gmra.mrb[0].mxu0 %v1919
        %v1987 = vpop.f32.mrb[0].mxu0
        %v1988 = vadd.f32 %v1917, %v1987
        %v1989 = vpop.f32.mrb[0].mxu0
        %1990 = vdwg.mxu0
        %v1991 = vmax.f32 %v1988, 0.0
        %v1992 = vmin.f32 %v1991, 6.0
        %v1993 = vld [vmem:[%s1 + $0x180] sm:$0xff]
        %v1994 = vld [vmem:[%s1 + $0x188] sm:$0x1]
        %v1995 = vld [vmem:[%s1 + $0x190] sm:$0x1]
        %1996 = vst.msk [vmem:[#allocation2] sm:$0xf] %vm1143, 0.0
        %1997 = vst.msk [vmem:[#allocation2 + $0x10] sm:$0xf] %vm1143, 0.0
        %1998 = vst.msk [vmem:[#allocation2 + $0x20] sm:$0xf] %vm1143, 0.0
        %1999 = vst.msk [vmem:[#allocation2 + $0x30] sm:$0xf] %vm1143, 0.0
        %2000 = vst.msk [vmem:[#allocation3] sm:$0xf] %vm1143, %v1992
        %v2001 = vld [vmem:[#allocation3] sm:$0x3]
        %2002 = vst.msk [vmem:[%s333 + $0x1] sm:$0x3] %vm922, %v2001
        %v2003 = vld [vmem:[#allocation3 + $0x2] sm:$0x3]
        %2004 = vst.msk [vmem:[%s510 + $0x1] sm:$0x3] %vm922, %v2003
        %v2005 = vld [vmem:[#allocation2] sm:$0x3]
        %v2006 = vld [vmem:[#allocation2 + $0x10] sm:$0x3]
        %v2007 = vlaneseq
        %v2008 = vshrl.u32 %v2007, 7
        %v2009 = vsub.s32 0, %v2008
        %v2010 = vrot.slane %v1993, %v2009
        %v2011 = vmul.f32 %v2005, %v2010
        %v2012 = vmul.f32 %v2006, %v2010
        %v2013 = vadd.f32 %v2011, 0.0
        %v2014 = vadd.f32 %v2012, 0.0
        %v2015 = vld [vmem:[#allocation2 + $0x1] sm:$0x3]
        %v2016 = vld [vmem:[#allocation2 + $0x11] sm:$0x3]
        %v2017 = vlaneseq
        %v2018 = vshrl.u32 %v2017, 7
        %v2019 = vsub.s32 1, %v2018
        %v2020 = vrot.slane %v1993, %v2019
        %v2021 = vmul.f32 %v2015, %v2020
        %v2022 = vmul.f32 %v2016, %v2020
        %v2023 = vadd.f32 %v2013, %v2021
        %v2024 = vadd.f32 %v2014, %v2022
        %v2025 = vld [vmem:[#allocation2 + $0x2] sm:$0x3]
        %v2026 = vld [vmem:[#allocation2 + $0x12] sm:$0x3]
        %v2027 = vlaneseq
        %v2028 = vshrl.u32 %v2027, 7
        %v2029 = vsub.s32 2, %v2028
        %v2030 = vrot.slane %v1993, %v2029
        %v2031 = vmul.f32 %v2025, %v2030
        %v2032 = vmul.f32 %v2026, %v2030
        %v2033 = vadd.f32 %v2023, %v2031
        %v2034 = vadd.f32 %v2024, %v2032
        %v2035 = vld [vmem:[%s333] sm:$0x3]
        %v2036 = vld [vmem:[%s333 + $0x10] sm:$0x3]
        %v2037 = vlaneseq
        %v2038 = vshrl.u32 %v2037, 7
        %v2039 = vsub.s32 3, %v2038
        %v2040 = vrot.slane %v1993, %v2039
        %v2041 = vmul.f32 %v2035, %v2040
        %v2042 = vmul.f32 %v2036, %v2040
        %v2043 = vadd.f32 %v2033, %v2041
        %v2044 = vadd.f32 %v2034, %v2042
        %v2045 = vld [vmem:[%s333 + $0x1] sm:$0x3]
        %v2046 = vld [vmem:[%s333 + $0x11] sm:$0x3]
        %v2047 = vlaneseq
        %v2048 = vshrl.u32 %v2047, 7
        %v2049 = vsub.s32 4, %v2048
        %v2050 = vrot.slane %v1993, %v2049
        %v2051 = vmul.f32 %v2045, %v2050
        %v2052 = vmul.f32 %v2046, %v2050
        %v2053 = vadd.f32 %v2043, %v2051
        %v2054 = vadd.f32 %v2044, %v2052
        %v2055 = vld [vmem:[%s333 + $0x2] sm:$0x3]
        %v2056 = vld [vmem:[%s333 + $0x12] sm:$0x3]
        %v2057 = vlaneseq
        %v2058 = vshrl.u32 %v2057, 7
        %v2059 = vsub.s32 5, %v2058
        %v2060 = vrot.slane %v1993, %v2059
        %v2061 = vmul.f32 %v2055, %v2060
        %v2062 = vmul.f32 %v2056, %v2060
        %v2063 = vadd.f32 %v2053, %v2061
        %v2064 = vadd.f32 %v2054, %v2062
        %v2065 = vld [vmem:[%s510] sm:$0x3]
        %v2066 = vld [vmem:[%s510 + $0x10] sm:$0x3]
        %v2067 = vlaneseq
        %v2068 = vshrl.u32 %v2067, 7
        %v2069 = vsub.s32 6, %v2068
        %v2070 = vrot.slane %v1993, %v2069
        %v2071 = vmul.f32 %v2065, %v2070
        %v2072 = vmul.f32 %v2066, %v2070
        %v2073 = vadd.f32 %v2063, %v2071
        %v2074 = vadd.f32 %v2064, %v2072
        %v2075 = vld [vmem:[%s510 + $0x1] sm:$0x3]
        %v2076 = vld [vmem:[%s510 + $0x11] sm:$0x3]
        %v2077 = vlaneseq
        %v2078 = vshrl.u32 %v2077, 7
        %v2079 = vsub.s32 7, %v2078
        %v2080 = vrot.slane %v1993, %v2079
        %v2081 = vmul.f32 %v2075, %v2080
        %v2082 = vmul.f32 %v2076, %v2080
        %v2083 = vadd.f32 %v2073, %v2081
        %v2084 = vadd.f32 %v2074, %v2082
        %v2085 = vld [vmem:[%s510 + $0x2] sm:$0x3]
        %v2086 = vld [vmem:[%s510 + $0x12] sm:$0x3]
        %v2087 = vlaneseq
        %v2088 = vshrl.u32 %v2087, 7
        %v2089 = vsub.s32 0, %v2088
        %v2090 = vrot.slane %v1994, %v2089
        %v2091 = vmul.f32 %v2085, %v2090
        %v2092 = vmul.f32 %v2086, %v2090
        %v2093 = vadd.f32 %v2083, %v2091
        %v2094 = vadd.f32 %v2084, %v2092
        %v2095 = vlaneseq
        %v2096 = vshrl.u32 %v2095, 7
        %v2097 = vsub.s32 0, %v2096
        %v2098 = vrot.slane %v1995, %v2097
        %v2099 = vadd.f32 %v2093, %v2098
        %v2100 = vadd.f32 %v2094, %v2098
        %v2101 = vmax.f32 %v2099, 0.0
        %v2102 = vmax.f32 %v2100, 0.0
        %v2103 = vmin.f32 %v2101, 6.0
        %v2104 = vmin.f32 %v2102, 6.0
        %2105 = vst.msk [vmem:[#allocation3] sm:$0x3] %vm922, %v2103
        %2106 = vst.msk [vmem:[#allocation3 + $0x2] sm:$0x3] %vm922, %v2104
        %v2107 = vld [vmem:[#allocation3] sm:$0xf]
        %v2108 = vld [vmem:[%s1 + $0x198] sm:$0xff]
        %v2109 = vld [vmem:[%s1 + $0x1a0] sm:$0xff]
        %v2110 = vld [vmem:[%s1 + $0x1a8] sm:$0xff]
        %v2111 = vld [vmem:[%s1 + $0x1b0] sm:$0xff]
        %v2112 = vld [vmem:[%s1 + $0x1b8] sm:$0xff]
        %v2113 = vld [vmem:[%s1 + $0x1c0] sm:$0xff]
        %v2114 = vld [vmem:[%s1 + $0x1c8] sm:$0x1]
        %v2115 = vlaneseq
        %v2116 = vshrl.u32 %v2115, 7
        %v2117 = vsub.s32 0, %v2116
        %v2118 = vrot.slane %v2114, %v2117
        %v2120 = vsel %vm920, %v2107, 0
        %2122 = vmatprep.subr.mxu0 0.0
        %2123 = vmatpush1.msra.mxu0 %v2108
        %2124 = vmatprep.subr.mxu0 0.0
        %2125 = vmatpush1.msra.mxu0 %v2109
        %2126 = vmatprep.subr.mxu0 0.0
        %2127 = vmatpush1.msra.mxu0 %v2110
        %2128 = vmatprep.subr.mxu0 0.0
        %2129 = vmatpush1.msra.mxu0 %v2111
        %2130 = vmatprep.subr.mxu0 0.0
        %2131 = vmatpush1.msra.mxu0 %v2112
        %2132 = vmatprep.subr.mxu0 0.0
        %2133 = vmatpush1.msra.mxu0 %v2113
        %2134 = vmatprep.subr.mxu0 0.0
        %2135 = vmatpush1.msra.mxu0 0.0
        %2136 = vmatprep.subr.mxu0 0.0
        %2137 = vmatpush1.msra.mxu0 0.0
        %2138 = vmatprep.subr.mxu0 0.0
        %2139 = vmatpush1.msra.mxu0 0.0
        %2140 = vmatprep.subr.mxu0 0.0
        %2141 = vmatpush1.msra.mxu0 0.0
        %2142 = vmatprep.subr.mxu0 0.0
        %2143 = vmatpush1.msra.mxu0 0.0
        %2144 = vmatprep.subr.mxu0 0.0
        %2145 = vmatpush1.msra.mxu0 0.0
        %2146 = vmatprep.subr.mxu0 0.0
        %2147 = vmatpush1.msra.mxu0 0.0
        %2148 = vmatprep.subr.mxu0 0.0
        %2149 = vmatpush1.msra.mxu0 0.0
        %2150 = vmatprep.subr.mxu0 0.0
        %2151 = vmatpush1.msra.mxu0 0.0
        %2152 = vmatprep.subr.mxu0 0.0
        %2153 = vmatpush1.msra.mxu0 0.0
        %2154 = vmatprep.subr.mxu0 0.0
        %2155 = vmatpush1.msra.mxu0 0.0
        %2156 = vmatprep.subr.mxu0 0.0
        %2157 = vmatpush1.msra.mxu0 0.0
        %2158 = vmatprep.subr.mxu0 0.0
        %2159 = vmatpush1.msra.mxu0 0.0
        %2160 = vmatprep.subr.mxu0 0.0
        %2161 = vmatpush1.msra.mxu0 0.0
        %2162 = vmatprep.subr.mxu0 0.0
        %2163 = vmatpush1.msra.mxu0 0.0
        %2164 = vmatprep.subr.mxu0 0.0
        %2165 = vmatpush1.msra.mxu0 0.0
        %2166 = vmatprep.subr.mxu0 0.0
        %2167 = vmatpush1.msra.mxu0 0.0
        %2168 = vmatprep.subr.mxu0 0.0
        %2169 = vmatpush1.msra.mxu0 0.0
        %2170 = vmatprep.subr.mxu0 0.0
        %2171 = vmatpush1.msra.mxu0 0.0
        %2172 = vmatprep.subr.mxu0 0.0
        %2173 = vmatpush1.msra.mxu0 0.0
        %2174 = vmatprep.subr.mxu0 0.0
        %2175 = vmatpush1.msra.mxu0 0.0
        %2176 = vmatprep.subr.mxu0 0.0
        %2177 = vmatpush1.msra.mxu0 0.0
        %2178 = vmatprep.subr.mxu0 0.0
        %2179 = vmatpush1.msra.mxu0 0.0
        %2180 = vmatprep.subr.mxu0 0.0
        %2181 = vmatpush1.msra.mxu0 0.0
        %2182 = vmatprep.subr.mxu0 0.0
        %2183 = vmatpush1.msra.mxu0 0.0
        %2184 = vmatprep.subr.mxu0 0.0
        %2185 = vmatpush1.msra.mxu0 0.0
        %2186 = vmatprep.mubr.f32.mxu0 0.0
        %2187 = vmatmul.mubr.f32.gmra.mrb[0].mxu0 %v2120
        %v2188 = vpop.f32.mrb[0].mxu0
        %v2189 = vadd.f32 %v2118, %v2188
        %v2190 = vpop.f32.mrb[0].mxu0
        %2191 = vdwg.mxu0
        %v2192 = vadd.f32 %v2189, %v1909
        %v2193 = vld [vmem:[%s1 + $0x1d0] sm:$0xff]
        %v2194 = vld [vmem:[%s1 + $0x1d8] sm:$0x1]
        %vm2195 = vcmask 60416
        %v2196 = vsel %vm2195, %v2192, 0.0
        %v2197 = vrot.slane %v2196, 4
        %v2198 = vadd.f32 %v2196, %v2197
        %v2199 = vrot.slane %v2198, 2
        %v2200 = vadd.f32 %v2198, %v2199
        %v2201 = vrot.slane %v2200, 1
        %v2202 = vadd.f32 %v2200, %v2201
        %v2203 = vrcp.pop 4.0
        %v2204 = vmul.f32 %v2202, %v2203
        %v2206 = vsel %vm311, %v2204, 0
        %2208 = vmatprep.subr.mxu0 0.0
        %2209 = vmatpush1.msra.mxu0 %v2193
        %2210 = vmatprep.subr.mxu0 0.0
        %2211 = vmatpush1.msra.mxu0 0.0
        %2212 = vmatprep.subr.mxu0 0.0
        %2213 = vmatpush1.msra.mxu0 0.0
        %2214 = vmatprep.subr.mxu0 0.0
        %2215 = vmatpush1.msra.mxu0 0.0
        %2216 = vmatprep.subr.mxu0 0.0
        %2217 = vmatpush1.msra.mxu0 0.0
        %2218 = vmatprep.subr.mxu0 0.0
        %2219 = vmatpush1.msra.mxu0 0.0
        %2220 = vmatprep.subr.mxu0 0.0
        %2221 = vmatpush1.msra.mxu0 0.0
        %2222 = vmatprep.subr.mxu0 0.0
        %2223 = vmatpush1.msra.mxu0 0.0
        %2224 = vmatprep.subr.mxu0 0.0
        %2225 = vmatpush1.msra.mxu0 0.0
        %2226 = vmatprep.subr.mxu0 0.0
        %2227 = vmatpush1.msra.mxu0 0.0
        %2228 = vmatprep.subr.mxu0 0.0
        %2229 = vmatpush1.msra.mxu0 0.0
        %2230 = vmatprep.subr.mxu0 0.0
        %2231 = vmatpush1.msra.mxu0 0.0
        %2232 = vmatprep.subr.mxu0 0.0
        %2233 = vmatpush1.msra.mxu0 0.0
        %2234 = vmatprep.subr.mxu0 0.0
        %2235 = vmatpush1.msra.mxu0 0.0
        %2236 = vmatprep.subr.mxu0 0.0
        %2237 = vmatpush1.msra.mxu0 0.0
        %2238 = vmatprep.subr.mxu0 0.0
        %2239 = vmatpush1.msra.mxu0 0.0
        %2240 = vmatprep.subr.mxu0 0.0
        %2241 = vmatpush1.msra.mxu0 0.0
        %2242 = vmatprep.subr.mxu0 0.0
        %2243 = vmatpush1.msra.mxu0 0.0
        %2244 = vmatprep.subr.mxu0 0.0
        %2245 = vmatpush1.msra.mxu0 0.0
        %2246 = vmatprep.subr.mxu0 0.0
        %2247 = vmatpush1.msra.mxu0 0.0
        %2248 = vmatprep.subr.mxu0 0.0
        %2249 = vmatpush1.msra.mxu0 0.0
        %2250 = vmatprep.subr.mxu0 0.0
        %2251 = vmatpush1.msra.mxu0 0.0
        %2252 = vmatprep.subr.mxu0 0.0
        %2253 = vmatpush1.msra.mxu0 0.0
        %2254 = vmatprep.subr.mxu0 0.0
        %2255 = vmatpush1.msra.mxu0 0.0
        %2256 = vmatprep.subr.mxu0 0.0
        %2257 = vmatpush1.msra.mxu0 0.0
        %2258 = vmatprep.subr.mxu0 0.0
        %2259 = vmatpush1.msra.mxu0 0.0
        %2260 = vmatprep.subr.mxu0 0.0
        %2261 = vmatpush1.msra.mxu0 0.0
        %2262 = vmatprep.subr.mxu0 0.0
        %2263 = vmatpush1.msra.mxu0 0.0
        %2264 = vmatprep.subr.mxu0 0.0
        %2265 = vmatpush1.msra.mxu0 0.0
        %2266 = vmatprep.subr.mxu0 0.0
        %2267 = vmatpush1.msra.mxu0 0.0
        %2268 = vmatprep.subr.mxu0 0.0
        %2269 = vmatpush1.msra.mxu0 0.0
        %2270 = vmatprep.subr.mxu0 0.0
        %2271 = vmatpush1.msra.mxu0 0.0
        %2272 = vmatprep.mubr.f32.mxu0 0.0
        %2273 = vmatmul.mubr.f32.gmra.mrb[0].mxu0 %v2206
        %v2274 = vpop.f32.mrb[0].mxu0
        %v2275 = vadd.f32 %v2194, %v2274
        %v2276 = vpop.f32.mrb[0].mxu0
        %2277 = vdwg.mxu0
        %vm2278 = vcmask 40960
        %2279 = vst.msk [vmem:[%s135] sm:$0x1] %vm2278, %v2275
        %s2280 = sand.u32 %s71, 1
        %s2281 = scalar_lea.sflag [#allocation5], %s2280
        %s2282 = sand.u32 %s71, 1
        %s2283 = scalar_lea.vmem [#allocation4], %s2282
        // Predicated region
        $region29: #{_lambda_.1} parent=27 // pred_check
          %p2284 = pneg %p81
        $region30: #{_lambda_.1} parent=27 // pred_check_branch
          %2286 = sbr.rel (%p2284) target = $region32
        $region31: #{_lambda_.1} parent=27 // pred_region
          %s2288 = ssub.s32 16, 16
          %2289 = vsyncadd %s2281, %s2288
          %s2290 = smul.addr %s16, 16
          %s2291 = scalar_lea.hbm %s2, %s2290
          %s2293 = sshll.u32 %s2283, 4
          %s2294 = int_to_ptr.vmem [resolvable:$true] %s2293
          %2296 = dma.vmem_to_hbm [thread:$0]  %s2294, 16, %s2291, %s2281
        $region32: #{_lambda_.1} parent=27 // pred_fallthru
          _
      $region28: #{_lambda_.1} parent=5 // pred_fallthru
        _
      %p2297 = scmp.le.s32.totalorder 2, %s11
      // Predicated region
      $region33: #{_lambda_.1} parent=5 // pred_check
        %p2298 = pneg %p2297
      $region34: #{_lambda_.1} parent=5 // pred_check_branch
        %2300 = sbr.rel (%p2298) target = $region36
      $region35: #{_lambda_.1} parent=5 // pred_region
        %s2301 = ssub.s32 %s11, 2
        // Predicated region
        $region37: #{_lambda_.1} parent=35 // pred_check
          %p2302 = pneg %p87
        $region38: #{_lambda_.1} parent=35 // pred_check_branch
          %2304 = sbr.rel (%p2302) target = $region40
        $region39: #{_lambda_.1} parent=35 // pred_region
          %s2305 = sand.u32 %s72, 1
          %s2306 = scalar_lea.sflag [#allocation5], %s2305
          %s2307 = sand.u32 %s72, 1
          %s2308 = scalar_lea.vmem [#allocation4], %s2307
          %2309 = dma.done %s2306, 16
        $region40: #{_lambda_.1} parent=35 // pred_fallthru
          _
      $region36: #{_lambda_.1} parent=5 // pred_fallthru
        _
    $region6: #{_lambda_.1} parent=1 // loop_footer
      %s15 = sadd.s32 1, %s11
    $region7: #{_lambda_.1} parent=1 // loop_footer_branch
      %10 = sbr.rel target = $region3
    $region8: #{_lambda_.1} parent=1 // loop_exit
      _
    %2310 = vsyncpa [#allocation5], 1
    %s2311 = scalar_lea.sflag [#allocation5], 1
    %2312 = vsyncpa %s2311, 1

</llo_original>
